<compile_context>
chip_gen: v7x
topology: tpu7x:2x2x1
jax: 0.10.0
libtpu: 0.0.40
codegen_flags: <defaults>
</compile_context>

<pallas_src>
import functools

import numpy as np

import jax
import jax.numpy as jnp
from jax import lax
from jax.experimental import pallas as pl
from jax.experimental.pallas import tpu as pltpu


def _convlstm_cell_kernel(x_ref, h_ref, c_ref, row_ref, col_ref,
                          wx_ref, wh_ref, b_ref, h_out_ref, c_out_ref,
                          *, H, W, K):
    """One batch-block per grid step.

    x_ref   : (block_b, Cxp, S)   input images,  S = pad128(H*W) on lanes
    h_ref   : (block_b, hid, S)   current hidden state
    c_ref   : (block_b, hid, S)   current cell state
    row_ref : (1, S) int32        image row of each lane
    col_ref : (1, S) int32        image col of each lane
    wx_ref  : (K*K, 4*hid, Cxp)   per-tap input->gates weights
    wh_ref  : (K*K, 4*hid, hid)   per-tap hidden->gates weights
    b_ref   : (4*hid, 1)          conv bias
    outputs : (block_b, hid, S)   h_next (x.dtype), c_next (f32)
    """
    block_b, _, S = x_ref.shape
    hid = h_ref.shape[1]
    p = K // 2
    f32 = jnp.float32

    yy = row_ref[...]          # (1, S)
    xx = col_ref[...]          # (1, S)

    # Static (lane shift, halo mask) per conv tap:
    #   out[q] = in[q + dy*W + dx] where (y+dy, x+dx) is in-bounds, else 0.
    # Every lane that would wrap around in the roll is masked, so the rotation
    # wrap never leaks data (this also isolates padded lanes / batch blocks).
    taps = []
    for kh in range(K):
        for kw in range(K):
            dy, dx = kh - p, kw - p
            shift = (-(dy * W + dx)) % S
            conds = []
            if dy > 0:
                conds.append(yy < (H - dy))
            if dy < 0:
                conds.append(yy >= (-dy))
            if dx > 0:
                conds.append(xx < (W - dx))
            if dx < 0:
                conds.append(xx >= (-dx))
            mask = None
            for cond in conds:
                mask = cond if mask is None else jnp.logical_and(mask, cond)
            taps.append((shift, mask))

    def halo_view(v, shift, mask):
        vs = pltpu.roll(v, shift, 1) if shift else v      # XLU lane rotation
        return vs if mask is None else jnp.where(mask, vs, 0.0)

    # Tiny resident weights: load once per invocation (constant index_map).
    wxs = [wx_ref[t].astype(f32) for t in range(K * K)]   # (4*hid, Cxp)
    whs = [wh_ref[t].astype(f32) for t in range(K * K)]   # (4*hid, hid)
    bias = b_ref[...].astype(f32)                         # (4*hid, 1)

    for b in range(block_b):
        xv = x_ref[b].astype(f32)                          # (Cxp, S)
        hv = h_ref[b].astype(f32)                          # (hid, S)

        # Conv as K*K accumulating MXU matmuls over in-VMEM shifted views.
        # (For large hid, split into per-gate (hid, C) matmuls to shrink the
        #  live f32 accumulator and overlap MXU with EUP -- not needed at hid=8.)
        acc = jnp.zeros((4 * hid, S), f32)
        for t, (shift, mask) in enumerate(taps):
            acc += jnp.dot(wxs[t], halo_view(xv, shift, mask),
                           preferred_element_type=f32)
            acc += jnp.dot(whs[t], halo_view(hv, shift, mask),
                           preferred_element_type=f32)
        acc += bias                                        # broadcast over lanes

        # Gate slices are aligned sublane slices (hid multiple of 8 here).
        i = jax.nn.sigmoid(acc[0 * hid:1 * hid])
        f = jax.nn.sigmoid(acc[1 * hid:2 * hid])
        o = jax.nn.sigmoid(acc[2 * hid:3 * hid])
        g = jnp.tanh(acc[3 * hid:4 * hid])

        c_next = f * c_ref[b].astype(f32) + i * g
        h_next = o * jnp.tanh(c_next)

        h_out_ref[b] = h_next.astype(h_out_ref.dtype)
        c_out_ref[b] = c_next.astype(c_out_ref.dtype)      # stays f32


def conv_lstm_cell(x, h_cur, c_cur, weight, bias, kernel_size, *, block_b=None):
    """ConvLSTMCell.forward.

    x      : (B, input_dim, H, W)                        NCHW (PyTorch)
    h_cur  : (B, hidden_dim, H, W)
    c_cur  : (B, hidden_dim, H, W)
    weight : (4*hidden_dim, input_dim+hidden_dim, K, K)  OIHW (PyTorch)
    bias   : (4*hidden_dim,)
    returns (h_next, c_next) in NCHW; h_next has x.dtype, c_next is float32.
    """
    B, Cx, H, W = x.shape
    hid = h_cur.shape[1]
    K = int(kernel_size)
    assert K % 2 == 1, "odd kernel_size assumed (PyTorch padding=K//2 semantics)"
    C4 = 4 * hid
    HW = H * W
    S = -(-HW // 128) * 128          # lane-pad flattened spatial axis to 128
    Cxp = -(-Cx // 8) * 8            # sublane-pad input channels to 8

    # ---- batch blocking (generation friendly) ------------------------------
    # One grid step = block_b images, targeting ~2K lanes of work per step and
    # capped by a per-step VMEM budget (safe with double-buffering under v7x's
    # 64 MiB / 32 MiB scoped default).  No forced >=2 steps on 1-TC chips;
    # large B naturally produces many "parallel" steps for v7x's 2 TCs.
    if block_b is None:
        itemsize = jnp.dtype(x.dtype).itemsize
        per_img = (Cxp + hid) * S * itemsize + hid * S * (8 + itemsize)
        vmem_budget = 4 * 1024 * 1024
        block_b = max(1, min(B, max(1, 2048 // S),
                             max(1, vmem_budget // per_img)))
    nb = -(-B // block_b)
    Bp = nb * block_b
    # TODO(synk): for very large H*W, additionally tile the lane axis (a second
    # grid dimension over S) instead of always taking a full image per step.

    def prep(a):
        bc, c = a.shape[0], a.shape[1]
        a = a.reshape(bc, c, HW)
        if S != HW:
            a = jnp.pad(a, ((0, 0), (0, 0), (0, S - HW)))
        if Bp != B:
            a = jnp.pad(a, ((0, Bp - B), (0, 0), (0, 0)))
        return a

    x3 = prep(x)
    if Cxp != Cx:
        x3 = jnp.pad(x3, ((0, 0), (0, Cxp - Cx), (0, 0)))
    h3 = prep(h_cur)
    c3 = prep(c_cur)

    # (row, col) coordinate of every lane: tiny baked-in constants so the
    # kernel builds halo masks with simple compares (no integer div/mod).
    row_np = np.zeros((1, S), np.int32)
    col_np = np.zeros((1, S), np.int32)
    row_np[0, :HW] = np.repeat(np.arange(H, dtype=np.int32), W)
    col_np[0, :HW] = np.tile(np.arange(W, dtype=np.int32), H)
    row = jnp.asarray(row_np)
    col = jnp.asarray(col_np)

    # Per-tap weight slices; tap index t = kh*K + kw (matches the kernel loop).
    wx = jnp.transpose(weight[:, :Cx], (2, 3, 0, 1)).reshape(K * K, C4, Cx)
    wh = jnp.transpose(weight[:, Cx:], (2, 3, 0, 1)).reshape(K * K, C4, hid)
    if Cxp != Cx:
        wx = jnp.pad(wx, ((0, 0), (0, 0), (0, Cxp - Cx)))
    b2 = bias.reshape(C4, 1).astype(jnp.float32)

    kernel = functools.partial(_convlstm_cell_kernel, H=H, W=W, K=K)

    h_b, c_b = pl.pallas_call(
        kernel,
        out_shape=(jax.ShapeDtypeStruct((Bp, hid, S), x.dtype),
                   jax.ShapeDtypeStruct((Bp, hid, S), jnp.float32)),
        grid_spec=pltpu.PrefetchScalarGridSpec(
            num_scalar_prefetch=0,
            grid=(nb,),
            in_specs=[
                pl.BlockSpec((block_b, Cxp, S), lambda b: (b, 0, 0)),
                pl.BlockSpec((block_b, hid, S), lambda b: (b, 0, 0)),
                pl.BlockSpec((block_b, hid, S), lambda b: (b, 0, 0)),
                pl.BlockSpec((1, S), lambda b: (0, 0)),
                pl.BlockSpec((1, S), lambda b: (0, 0)),
                pl.BlockSpec((K * K, C4, Cxp), lambda b: (0, 0, 0)),
                pl.BlockSpec((K * K, C4, hid), lambda b: (0, 0, 0)),
                pl.BlockSpec((C4, 1), lambda b: (0, 0)),
            ],
            out_specs=[
                pl.BlockSpec((block_b, hid, S), lambda b: (b, 0, 0)),
                pl.BlockSpec((block_b, hid, S), lambda b: (b, 0, 0)),
            ],
        ),
        compiler_params=pltpu.CompilerParams(
            dimension_semantics=("parallel",),
            vmem_limit_bytes=32 * 1024 * 1024),
    )(x3, h3, c3, row, col, wx, wh, b2)

    def unprep(a):
        if Bp != B or S != HW:
            a = a[:B, :, :HW]
        return a.reshape(B, hid, H, W)

    return unprep(h_b), unprep(c_b)


def _reference_conv_lstm_cell(x, h_cur, c_cur, weight, bias):
    """Pure-JAX f32 reference (mirrors the PyTorch forward)."""
    comb = jnp.concatenate([x, h_cur], axis=1)                 # NCHW
    out = lax.conv_general_dilated(
        comb, weight, window_strides=(1, 1), padding="SAME",
        dimension_numbers=("NCHW", "OIHW", "NCHW"),
        precision=lax.Precision.HIGHEST)
    out = out + bias[None, :, None, None]
    cc_i, cc_f, cc_o, cc_g = jnp.split(out, 4, axis=1)
    i = jax.nn.sigmoid(cc_i)
    f = jax.nn.sigmoid(cc_f)
    o = jax.nn.sigmoid(cc_o)
    g = jnp.tanh(cc_g)
    c_next = f * c_cur + i * g
    h_next = o * jnp.tanh(c_next)
    return h_next, c_next


if __name__ == "__main__":
    # Module config: ConvLSTMCell(input_dim=4, hidden_dim=8, kernel_size=3)
    B, input_dim, hidden_dim, K = 2, 4, 8, 3
    H = W = 16
    Cin = input_dim + hidden_dim
    C4 = 4 * hidden_dim

    key = jax.random.PRNGKey(0)
    kx, khh, kc, kwt, kb = jax.random.split(key, 5)

    x = jax.random.normal(kx, (B, input_dim, H, W), dtype=jnp.float32)
    h_cur = jax.random.normal(khh, (B, hidden_dim, H, W), dtype=jnp.float32)
    c_cur = jax.random.normal(kc, (B, hidden_dim, H, W), dtype=jnp.float32)
    weight = 0.1 * jax.random.normal(kwt, (C4, Cin, K, K), dtype=jnp.float32)
    bias = 0.1 * jax.random.normal(kb, (C4,), dtype=jnp.float32)

    fwd = jax.jit(functools.partial(conv_lstm_cell, kernel_size=K))
    h_next, c_next = fwd(x, h_cur, c_cur, weight, bias)
    jax.block_until_ready((h_next, c_next))

    h_ref, c_ref = _reference_conv_lstm_cell(x, h_cur, c_cur, weight, bias)
    assert h_next.shape == (B, hidden_dim, H, W)
    assert c_next.shape == (B, hidden_dim, H, W)
    assert jnp.allclose(h_next, h_ref, atol=5e-3, rtol=5e-3)
    assert jnp.allclose(c_next, c_ref, atol=5e-3, rtol=5e-3)

    print("KERNEL_OK")
</pallas_src>

<mosaic_0001>
module attributes {stable_mosaic.version = 11 : i64} {
  func.func @_convlstm_cell_kernel(%arg0: i32, %arg1: memref<2x8x256xf32, #tpu.memory_space<vmem>>, %arg2: memref<2x8x256xf32, #tpu.memory_space<vmem>>, %arg3: memref<2x8x256xf32, #tpu.memory_space<vmem>>, %arg4: memref<1x256xi32, #tpu.memory_space<vmem>>, %arg5: memref<1x256xi32, #tpu.memory_space<vmem>>, %arg6: memref<9x32x8xf32, #tpu.memory_space<vmem>>, %arg7: memref<9x32x8xf32, #tpu.memory_space<vmem>>, %arg8: memref<32x1xf32, #tpu.memory_space<vmem>>, %arg9: memref<2x8x256xf32, #tpu.memory_space<vmem>>, %arg10: memref<2x8x256xf32, #tpu.memory_space<vmem>>) attributes {dimension_semantics = [#tpu.dimension_semantics<parallel>], iteration_bounds = array<i64: 1>, scalar_prefetch = 0 : i64, scratch_operands = 0 : i64, tpu.core_type = #tpu.core_type<tc>, window_params = [{transform_indices = @transform_0, window_bounds = array<i64: 2, 8, 256>}, {transform_indices = @transform_1, window_bounds = array<i64: 2, 8, 256>}, {transform_indices = @transform_2, window_bounds = array<i64: 2, 8, 256>}, {pipeline_mode = #tpu.pipeline_mode<synchronous>, transform_indices = @transform_3, window_bounds = array<i64: 1, 256>}, {pipeline_mode = #tpu.pipeline_mode<synchronous>, transform_indices = @transform_4, window_bounds = array<i64: 1, 256>}, {pipeline_mode = #tpu.pipeline_mode<synchronous>, transform_indices = @transform_5, window_bounds = array<i64: 9, 32, 8>}, {pipeline_mode = #tpu.pipeline_mode<synchronous>, transform_indices = @transform_6, window_bounds = array<i64: 9, 32, 8>}, {pipeline_mode = #tpu.pipeline_mode<synchronous>, transform_indices = @transform_7, window_bounds = array<i64: 32, 1>}, {transform_indices = @transform_8, window_bounds = array<i64: 2, 8, 256>}, {transform_indices = @transform_9, window_bounds = array<i64: 2, 8, 256>}]} {
    %c0 = arith.constant 0 : index
    %c0_0 = arith.constant 0 : index
    %0 = vector.load %arg4[%c0, %c0_0] : memref<1x256xi32, #tpu.memory_space<vmem>>, vector<1x256xi32>
    %c0_1 = arith.constant 0 : index
    %c0_2 = arith.constant 0 : index
    %1 = vector.load %arg5[%c0_1, %c0_2] : memref<1x256xi32, #tpu.memory_space<vmem>>, vector<1x256xi32>
    %c1_i32 = arith.constant 1 : i32
    %2 = vector.broadcast %c1_i32 : i32 to vector<1x256xi32>
    %3 = arith.cmpi sge, %0, %2 : vector<1x256xi32>
    %c1_i32_3 = arith.constant 1 : i32
    %4 = vector.broadcast %c1_i32_3 : i32 to vector<1x256xi32>
    %5 = arith.cmpi sge, %1, %4 : vector<1x256xi32>
    %6 = arith.andi %3, %5 : vector<1x256xi1>
    %c1_i32_4 = arith.constant 1 : i32
    %7 = vector.broadcast %c1_i32_4 : i32 to vector<1x256xi32>
    %8 = arith.cmpi sge, %0, %7 : vector<1x256xi32>
    %c1_i32_5 = arith.constant 1 : i32
    %9 = vector.broadcast %c1_i32_5 : i32 to vector<1x256xi32>
    %10 = arith.cmpi sge, %0, %9 : vector<1x256xi32>
    %c15_i32 = arith.constant 15 : i32
    %11 = vector.broadcast %c15_i32 : i32 to vector<1x256xi32>
    %12 = arith.cmpi slt, %1, %11 : vector<1x256xi32>
    %13 = arith.andi %10, %12 : vector<1x256xi1>
    %c1_i32_6 = arith.constant 1 : i32
    %14 = vector.broadcast %c1_i32_6 : i32 to vector<1x256xi32>
    %15 = arith.cmpi sge, %1, %14 : vector<1x256xi32>
    %c15_i32_7 = arith.constant 15 : i32
    %16 = vector.broadcast %c15_i32_7 : i32 to vector<1x256xi32>
    %17 = arith.cmpi slt, %1, %16 : vector<1x256xi32>
    %c15_i32_8 = arith.constant 15 : i32
    %18 = vector.broadcast %c15_i32_8 : i32 to vector<1x256xi32>
    %19 = arith.cmpi slt, %0, %18 : vector<1x256xi32>
    %c1_i32_9 = arith.constant 1 : i32
    %20 = vector.broadcast %c1_i32_9 : i32 to vector<1x256xi32>
    %21 = arith.cmpi sge, %1, %20 : vector<1x256xi32>
    %22 = arith.andi %19, %21 : vector<1x256xi1>
    %c15_i32_10 = arith.constant 15 : i32
    %23 = vector.broadcast %c15_i32_10 : i32 to vector<1x256xi32>
    %24 = arith.cmpi slt, %0, %23 : vector<1x256xi32>
    %c15_i32_11 = arith.constant 15 : i32
    %25 = vector.broadcast %c15_i32_11 : i32 to vector<1x256xi32>
    %26 = arith.cmpi slt, %0, %25 : vector<1x256xi32>
    %c15_i32_12 = arith.constant 15 : i32
    %27 = vector.broadcast %c15_i32_12 : i32 to vector<1x256xi32>
    %28 = arith.cmpi slt, %1, %27 : vector<1x256xi32>
    %29 = arith.andi %26, %28 : vector<1x256xi1>
    %c0_13 = arith.constant 0 : index
    %c0_14 = arith.constant 0 : index
    %c0_15 = arith.constant 0 : index
    %30 = vector.load %arg6[%c0_13, %c0_14, %c0_15] : memref<9x32x8xf32, #tpu.memory_space<vmem>>, vector<1x32x8xf32>
    %31 = vector.shape_cast %30 : vector<1x32x8xf32> to vector<32x8xf32>
    %c1 = arith.constant 1 : index
    %c0_16 = arith.constant 0 : index
    %c0_17 = arith.constant 0 : index
    %32 = vector.load %arg6[%c1, %c0_16, %c0_17] : memref<9x32x8xf32, #tpu.memory_space<vmem>>, vector<1x32x8xf32>
    %33 = vector.shape_cast %32 : vector<1x32x8xf32> to vector<32x8xf32>
    %c2 = arith.constant 2 : index
    %c0_18 = arith.constant 0 : index
    %c0_19 = arith.constant 0 : index
    %34 = vector.load %arg6[%c2, %c0_18, %c0_19] : memref<9x32x8xf32, #tpu.memory_space<vmem>>, vector<1x32x8xf32>
    %35 = vector.shape_cast %34 : vector<1x32x8xf32> to vector<32x8xf32>
    %c3 = arith.constant 3 : index
    %c0_20 = arith.constant 0 : index
    %c0_21 = arith.constant 0 : index
    %36 = vector.load %arg6[%c3, %c0_20, %c0_21] : memref<9x32x8xf32, #tpu.memory_space<vmem>>, vector<1x32x8xf32>
    %37 = vector.shape_cast %36 : vector<1x32x8xf32> to vector<32x8xf32>
    %c4 = arith.constant 4 : index
    %c0_22 = arith.constant 0 : index
    %c0_23 = arith.constant 0 : index
    %38 = vector.load %arg6[%c4, %c0_22, %c0_23] : memref<9x32x8xf32, #tpu.memory_space<vmem>>, vector<1x32x8xf32>
    %39 = vector.shape_cast %38 : vector<1x32x8xf32> to vector<32x8xf32>
    %c5 = arith.constant 5 : index
    %c0_24 = arith.constant 0 : index
    %c0_25 = arith.constant 0 : index
    %40 = vector.load %arg6[%c5, %c0_24, %c0_25] : memref<9x32x8xf32, #tpu.memory_space<vmem>>, vector<1x32x8xf32>
    %41 = vector.shape_cast %40 : vector<1x32x8xf32> to vector<32x8xf32>
    %c6 = arith.constant 6 : index
    %c0_26 = arith.constant 0 : index
    %c0_27 = arith.constant 0 : index
    %42 = vector.load %arg6[%c6, %c0_26, %c0_27] : memref<9x32x8xf32, #tpu.memory_space<vmem>>, vector<1x32x8xf32>
    %43 = vector.shape_cast %42 : vector<1x32x8xf32> to vector<32x8xf32>
    %c7 = arith.constant 7 : index
    %c0_28 = arith.constant 0 : index
    %c0_29 = arith.constant 0 : index
    %44 = vector.load %arg6[%c7, %c0_28, %c0_29] : memref<9x32x8xf32, #tpu.memory_space<vmem>>, vector<1x32x8xf32>
    %45 = vector.shape_cast %44 : vector<1x32x8xf32> to vector<32x8xf32>
    %c8 = arith.constant 8 : index
    %c0_30 = arith.constant 0 : index
    %c0_31 = arith.constant 0 : index
    %46 = vector.load %arg6[%c8, %c0_30, %c0_31] : memref<9x32x8xf32, #tpu.memory_space<vmem>>, vector<1x32x8xf32>
    %47 = vector.shape_cast %46 : vector<1x32x8xf32> to vector<32x8xf32>
    %c0_32 = arith.constant 0 : index
    %c0_33 = arith.constant 0 : index
    %c0_34 = arith.constant 0 : index
    %48 = vector.load %arg7[%c0_32, %c0_33, %c0_34] : memref<9x32x8xf32, #tpu.memory_space<vmem>>, vector<1x32x8xf32>
    %49 = vector.shape_cast %48 : vector<1x32x8xf32> to vector<32x8xf32>
    %c1_35 = arith.constant 1 : index
    %c0_36 = arith.constant 0 : index
    %c0_37 = arith.constant 0 : index
    %50 = vector.load %arg7[%c1_35, %c0_36, %c0_37] : memref<9x32x8xf32, #tpu.memory_space<vmem>>, vector<1x32x8xf32>
    %51 = vector.shape_cast %50 : vector<1x32x8xf32> to vector<32x8xf32>
    %c2_38 = arith.constant 2 : index
    %c0_39 = arith.constant 0 : index
    %c0_40 = arith.constant 0 : index
    %52 = vector.load %arg7[%c2_38, %c0_39, %c0_40] : memref<9x32x8xf32, #tpu.memory_space<vmem>>, vector<1x32x8xf32>
    %53 = vector.shape_cast %52 : vector<1x32x8xf32> to vector<32x8xf32>
    %c3_41 = arith.constant 3 : index
    %c0_42 = arith.constant 0 : index
    %c0_43 = arith.constant 0 : index
    %54 = vector.load %arg7[%c3_41, %c0_42, %c0_43] : memref<9x32x8xf32, #tpu.memory_space<vmem>>, vector<1x32x8xf32>
    %55 = vector.shape_cast %54 : vector<1x32x8xf32> to vector<32x8xf32>
    %c4_44 = arith.constant 4 : index
    %c0_45 = arith.constant 0 : index
    %c0_46 = arith.constant 0 : index
    %56 = vector.load %arg7[%c4_44, %c0_45, %c0_46] : memref<9x32x8xf32, #tpu.memory_space<vmem>>, vector<1x32x8xf32>
    %57 = vector.shape_cast %56 : vector<1x32x8xf32> to vector<32x8xf32>
    %c5_47 = arith.constant 5 : index
    %c0_48 = arith.constant 0 : index
    %c0_49 = arith.constant 0 : index
    %58 = vector.load %arg7[%c5_47, %c0_48, %c0_49] : memref<9x32x8xf32, #tpu.memory_space<vmem>>, vector<1x32x8xf32>
    %59 = vector.shape_cast %58 : vector<1x32x8xf32> to vector<32x8xf32>
    %c6_50 = arith.constant 6 : index
    %c0_51 = arith.constant 0 : index
    %c0_52 = arith.constant 0 : index
    %60 = vector.load %arg7[%c6_50, %c0_51, %c0_52] : memref<9x32x8xf32, #tpu.memory_space<vmem>>, vector<1x32x8xf32>
    %61 = vector.shape_cast %60 : vector<1x32x8xf32> to vector<32x8xf32>
    %c7_53 = arith.constant 7 : index
    %c0_54 = arith.constant 0 : index
    %c0_55 = arith.constant 0 : index
    %62 = vector.load %arg7[%c7_53, %c0_54, %c0_55] : memref<9x32x8xf32, #tpu.memory_space<vmem>>, vector<1x32x8xf32>
    %63 = vector.shape_cast %62 : vector<1x32x8xf32> to vector<32x8xf32>
    %c8_56 = arith.constant 8 : index
    %c0_57 = arith.constant 0 : index
    %c0_58 = arith.constant 0 : index
    %64 = vector.load %arg7[%c8_56, %c0_57, %c0_58] : memref<9x32x8xf32, #tpu.memory_space<vmem>>, vector<1x32x8xf32>
    %65 = vector.shape_cast %64 : vector<1x32x8xf32> to vector<32x8xf32>
    %c0_59 = arith.constant 0 : index
    %c0_60 = arith.constant 0 : index
    %66 = vector.load %arg8[%c0_59, %c0_60] : memref<32x1xf32, #tpu.memory_space<vmem>>, vector<32x1xf32>
    %c0_61 = arith.constant 0 : index
    %c0_62 = arith.constant 0 : index
    %c0_63 = arith.constant 0 : index
    %67 = vector.load %arg1[%c0_61, %c0_62, %c0_63] : memref<2x8x256xf32, #tpu.memory_space<vmem>>, vector<1x8x256xf32>
    %68 = vector.shape_cast %67 : vector<1x8x256xf32> to vector<8x256xf32>
    %c0_64 = arith.constant 0 : index
    %c0_65 = arith.constant 0 : index
    %c0_66 = arith.constant 0 : index
    %69 = vector.load %arg2[%c0_64, %c0_65, %c0_66] : memref<2x8x256xf32, #tpu.memory_space<vmem>>, vector<1x8x256xf32>
    %70 = vector.shape_cast %69 : vector<1x8x256xf32> to vector<8x256xf32>
    %cst = arith.constant 0.000000e+00 : f32
    %71 = vector.broadcast %cst : f32 to vector<32x256xf32>
    %c17_i32 = arith.constant 17 : i32
    %72 = tpu.dynamic_rotate %68 by %c17_i32 dim 1 : vector<8x256xf32>, i32 -> vector<8x256xf32>
    %cst_67 = arith.constant 0.000000e+00 : f32
    %73 = vector.shape_cast %6 : vector<1x256xi1> to vector<1x256xi1>
    %74 = vector.broadcast %73 : vector<1x256xi1> to vector<8x256xi1>
    %75 = vector.broadcast %cst_67 : f32 to vector<8x256xf32>
    %76 = arith.select %74, %72, %75 : vector<8x256xi1>, vector<8x256xf32>
    %cst_68 = arith.constant dense<0.000000e+00> : vector<32x256xf32>
    %77 = tpu.matmul %31, %76, %cst_68 {dimension_numbers = #tpu.dot_dimension_numbers<[1], [0], [0], [1], [0, 0, 1, 1], [], []>} : vector<32x8xf32>, vector<8x256xf32>, vector<32x256xf32> -> vector<32x256xf32>
    %78 = arith.addf %71, %77 : vector<32x256xf32>
    %c17_i32_69 = arith.constant 17 : i32
    %79 = tpu.dynamic_rotate %70 by %c17_i32_69 dim 1 : vector<8x256xf32>, i32 -> vector<8x256xf32>
    %cst_70 = arith.constant 0.000000e+00 : f32
    %80 = vector.shape_cast %6 : vector<1x256xi1> to vector<1x256xi1>
    %81 = vector.broadcast %80 : vector<1x256xi1> to vector<8x256xi1>
    %82 = vector.broadcast %cst_70 : f32 to vector<8x256xf32>
    %83 = arith.select %81, %79, %82 : vector<8x256xi1>, vector<8x256xf32>
    %cst_71 = arith.constant dense<0.000000e+00> : vector<32x256xf32>
    %84 = tpu.matmul %49, %83, %cst_71 {dimension_numbers = #tpu.dot_dimension_numbers<[1], [0], [0], [1], [0, 0, 1, 1], [], []>} : vector<32x8xf32>, vector<8x256xf32>, vector<32x256xf32> -> vector<32x256xf32>
    %85 = arith.addf %78, %84 : vector<32x256xf32>
    %c16_i32 = arith.constant 16 : i32
    %86 = tpu.dynamic_rotate %68 by %c16_i32 dim 1 : vector<8x256xf32>, i32 -> vector<8x256xf32>
    %cst_72 = arith.constant 0.000000e+00 : f32
    %87 = vector.shape_cast %8 : vector<1x256xi1> to vector<1x256xi1>
    %88 = vector.broadcast %87 : vector<1x256xi1> to vector<8x256xi1>
    %89 = vector.broadcast %cst_72 : f32 to vector<8x256xf32>
    %90 = arith.select %88, %86, %89 : vector<8x256xi1>, vector<8x256xf32>
    %cst_73 = arith.constant dense<0.000000e+00> : vector<32x256xf32>
    %91 = tpu.matmul %33, %90, %cst_73 {dimension_numbers = #tpu.dot_dimension_numbers<[1], [0], [0], [1], [0, 0, 1, 1], [], []>} : vector<32x8xf32>, vector<8x256xf32>, vector<32x256xf32> -> vector<32x256xf32>
    %92 = arith.addf %85, %91 : vector<32x256xf32>
    %c16_i32_74 = arith.constant 16 : i32
    %93 = tpu.dynamic_rotate %70 by %c16_i32_74 dim 1 : vector<8x256xf32>, i32 -> vector<8x256xf32>
    %cst_75 = arith.constant 0.000000e+00 : f32
    %94 = vector.shape_cast %8 : vector<1x256xi1> to vector<1x256xi1>
    %95 = vector.broadcast %94 : vector<1x256xi1> to vector<8x256xi1>
    %96 = vector.broadcast %cst_75 : f32 to vector<8x256xf32>
    %97 = arith.select %95, %93, %96 : vector<8x256xi1>, vector<8x256xf32>
    %cst_76 = arith.constant dense<0.000000e+00> : vector<32x256xf32>
    %98 = tpu.matmul %51, %97, %cst_76 {dimension_numbers = #tpu.dot_dimension_numbers<[1], [0], [0], [1], [0, 0, 1, 1], [], []>} : vector<32x8xf32>, vector<8x256xf32>, vector<32x256xf32> -> vector<32x256xf32>
    %99 = arith.addf %92, %98 : vector<32x256xf32>
    %c15_i32_77 = arith.constant 15 : i32
    %100 = tpu.dynamic_rotate %68 by %c15_i32_77 dim 1 : vector<8x256xf32>, i32 -> vector<8x256xf32>
    %cst_78 = arith.constant 0.000000e+00 : f32
    %101 = vector.shape_cast %13 : vector<1x256xi1> to vector<1x256xi1>
    %102 = vector.broadcast %101 : vector<1x256xi1> to vector<8x256xi1>
    %103 = vector.broadcast %cst_78 : f32 to vector<8x256xf32>
    %104 = arith.select %102, %100, %103 : vector<8x256xi1>, vector<8x256xf32>
    %cst_79 = arith.constant dense<0.000000e+00> : vector<32x256xf32>
    %105 = tpu.matmul %35, %104, %cst_79 {dimension_numbers = #tpu.dot_dimension_numbers<[1], [0], [0], [1], [0, 0, 1, 1], [], []>} : vector<32x8xf32>, vector<8x256xf32>, vector<32x256xf32> -> vector<32x256xf32>
    %106 = arith.addf %99, %105 : vector<32x256xf32>
    %c15_i32_80 = arith.constant 15 : i32
    %107 = tpu.dynamic_rotate %70 by %c15_i32_80 dim 1 : vector<8x256xf32>, i32 -> vector<8x256xf32>
    %cst_81 = arith.constant 0.000000e+00 : f32
    %108 = vector.shape_cast %13 : vector<1x256xi1> to vector<1x256xi1>
    %109 = vector.broadcast %108 : vector<1x256xi1> to vector<8x256xi1>
    %110 = vector.broadcast %cst_81 : f32 to vector<8x256xf32>
    %111 = arith.select %109, %107, %110 : vector<8x256xi1>, vector<8x256xf32>
    %cst_82 = arith.constant dense<0.000000e+00> : vector<32x256xf32>
    %112 = tpu.matmul %53, %111, %cst_82 {dimension_numbers = #tpu.dot_dimension_numbers<[1], [0], [0], [1], [0, 0, 1, 1], [], []>} : vector<32x8xf32>, vector<8x256xf32>, vector<32x256xf32> -> vector<32x256xf32>
    %113 = arith.addf %106, %112 : vector<32x256xf32>
    %c1_i32_83 = arith.constant 1 : i32
    %114 = tpu.dynamic_rotate %68 by %c1_i32_83 dim 1 : vector<8x256xf32>, i32 -> vector<8x256xf32>
    %cst_84 = arith.constant 0.000000e+00 : f32
    %115 = vector.shape_cast %15 : vector<1x256xi1> to vector<1x256xi1>
    %116 = vector.broadcast %115 : vector<1x256xi1> to vector<8x256xi1>
    %117 = vector.broadcast %cst_84 : f32 to vector<8x256xf32>
    %118 = arith.select %116, %114, %117 : vector<8x256xi1>, vector<8x256xf32>
    %cst_85 = arith.constant dense<0.000000e+00> : vector<32x256xf32>
    %119 = tpu.matmul %37, %118, %cst_85 {dimension_numbers = #tpu.dot_dimension_numbers<[1], [0], [0], [1], [0, 0, 1, 1], [], []>} : vector<32x8xf32>, vector<8x256xf32>, vector<32x256xf32> -> vector<32x256xf32>
    %120 = arith.addf %113, %119 : vector<32x256xf32>
    %c1_i32_86 = arith.constant 1 : i32
    %121 = tpu.dynamic_rotate %70 by %c1_i32_86 dim 1 : vector<8x256xf32>, i32 -> vector<8x256xf32>
    %cst_87 = arith.constant 0.000000e+00 : f32
    %122 = vector.shape_cast %15 : vector<1x256xi1> to vector<1x256xi1>
    %123 = vector.broadcast %122 : vector<1x256xi1> to vector<8x256xi1>
    %124 = vector.broadcast %cst_87 : f32 to vector<8x256xf32>
    %125 = arith.select %123, %121, %124 : vector<8x256xi1>, vector<8x256xf32>
    %cst_88 = arith.constant dense<0.000000e+00> : vector<32x256xf32>
    %126 = tpu.matmul %55, %125, %cst_88 {dimension_numbers = #tpu.dot_dimension_numbers<[1], [0], [0], [1], [0, 0, 1, 1], [], []>} : vector<32x8xf32>, vector<8x256xf32>, vector<32x256xf32> -> vector<32x256xf32>
    %127 = arith.addf %120, %126 : vector<32x256xf32>
    %cst_89 = arith.constant dense<0.000000e+00> : vector<32x256xf32>
    %128 = tpu.matmul %39, %68, %cst_89 {dimension_numbers = #tpu.dot_dimension_numbers<[1], [0], [0], [1], [0, 0, 1, 1], [], []>} : vector<32x8xf32>, vector<8x256xf32>, vector<32x256xf32> -> vector<32x256xf32>
    %129 = arith.addf %127, %128 : vector<32x256xf32>
    %cst_90 = arith.constant dense<0.000000e+00> : vector<32x256xf32>
    %130 = tpu.matmul %57, %70, %cst_90 {dimension_numbers = #tpu.dot_dimension_numbers<[1], [0], [0], [1], [0, 0, 1, 1], [], []>} : vector<32x8xf32>, vector<8x256xf32>, vector<32x256xf32> -> vector<32x256xf32>
    %131 = arith.addf %129, %130 : vector<32x256xf32>
    %c255_i32 = arith.constant 255 : i32
    %132 = tpu.dynamic_rotate %68 by %c255_i32 dim 1 : vector<8x256xf32>, i32 -> vector<8x256xf32>
    %cst_91 = arith.constant 0.000000e+00 : f32
    %133 = vector.shape_cast %17 : vector<1x256xi1> to vector<1x256xi1>
    %134 = vector.broadcast %133 : vector<1x256xi1> to vector<8x256xi1>
    %135 = vector.broadcast %cst_91 : f32 to vector<8x256xf32>
    %136 = arith.select %134, %132, %135 : vector<8x256xi1>, vector<8x256xf32>
    %cst_92 = arith.constant dense<0.000000e+00> : vector<32x256xf32>
    %137 = tpu.matmul %41, %136, %cst_92 {dimension_numbers = #tpu.dot_dimension_numbers<[1], [0], [0], [1], [0, 0, 1, 1], [], []>} : vector<32x8xf32>, vector<8x256xf32>, vector<32x256xf32> -> vector<32x256xf32>
    %138 = arith.addf %131, %137 : vector<32x256xf32>
    %c255_i32_93 = arith.constant 255 : i32
    %139 = tpu.dynamic_rotate %70 by %c255_i32_93 dim 1 : vector<8x256xf32>, i32 -> vector<8x256xf32>
    %cst_94 = arith.constant 0.000000e+00 : f32
    %140 = vector.shape_cast %17 : vector<1x256xi1> to vector<1x256xi1>
    %141 = vector.broadcast %140 : vector<1x256xi1> to vector<8x256xi1>
    %142 = vector.broadcast %cst_94 : f32 to vector<8x256xf32>
    %143 = arith.select %141, %139, %142 : vector<8x256xi1>, vector<8x256xf32>
    %cst_95 = arith.constant dense<0.000000e+00> : vector<32x256xf32>
    %144 = tpu.matmul %59, %143, %cst_95 {dimension_numbers = #tpu.dot_dimension_numbers<[1], [0], [0], [1], [0, 0, 1, 1], [], []>} : vector<32x8xf32>, vector<8x256xf32>, vector<32x256xf32> -> vector<32x256xf32>
    %145 = arith.addf %138, %144 : vector<32x256xf32>
    %c241_i32 = arith.constant 241 : i32
    %146 = tpu.dynamic_rotate %68 by %c241_i32 dim 1 : vector<8x256xf32>, i32 -> vector<8x256xf32>
    %cst_96 = arith.constant 0.000000e+00 : f32
    %147 = vector.shape_cast %22 : vector<1x256xi1> to vector<1x256xi1>
    %148 = vector.broadcast %147 : vector<1x256xi1> to vector<8x256xi1>
    %149 = vector.broadcast %cst_96 : f32 to vector<8x256xf32>
    %150 = arith.select %148, %146, %149 : vector<8x256xi1>, vector<8x256xf32>
    %cst_97 = arith.constant dense<0.000000e+00> : vector<32x256xf32>
    %151 = tpu.matmul %43, %150, %cst_97 {dimension_numbers = #tpu.dot_dimension_numbers<[1], [0], [0], [1], [0, 0, 1, 1], [], []>} : vector<32x8xf32>, vector<8x256xf32>, vector<32x256xf32> -> vector<32x256xf32>
    %152 = arith.addf %145, %151 : vector<32x256xf32>
    %c241_i32_98 = arith.constant 241 : i32
    %153 = tpu.dynamic_rotate %70 by %c241_i32_98 dim 1 : vector<8x256xf32>, i32 -> vector<8x256xf32>
    %cst_99 = arith.constant 0.000000e+00 : f32
    %154 = vector.shape_cast %22 : vector<1x256xi1> to vector<1x256xi1>
    %155 = vector.broadcast %154 : vector<1x256xi1> to vector<8x256xi1>
    %156 = vector.broadcast %cst_99 : f32 to vector<8x256xf32>
    %157 = arith.select %155, %153, %156 : vector<8x256xi1>, vector<8x256xf32>
    %cst_100 = arith.constant dense<0.000000e+00> : vector<32x256xf32>
    %158 = tpu.matmul %61, %157, %cst_100 {dimension_numbers = #tpu.dot_dimension_numbers<[1], [0], [0], [1], [0, 0, 1, 1], [], []>} : vector<32x8xf32>, vector<8x256xf32>, vector<32x256xf32> -> vector<32x256xf32>
    %159 = arith.addf %152, %158 : vector<32x256xf32>
    %c240_i32 = arith.constant 240 : i32
    %160 = tpu.dynamic_rotate %68 by %c240_i32 dim 1 : vector<8x256xf32>, i32 -> vector<8x256xf32>
    %cst_101 = arith.constant 0.000000e+00 : f32
    %161 = vector.shape_cast %24 : vector<1x256xi1> to vector<1x256xi1>
    %162 = vector.broadcast %161 : vector<1x256xi1> to vector<8x256xi1>
    %163 = vector.broadcast %cst_101 : f32 to vector<8x256xf32>
    %164 = arith.select %162, %160, %163 : vector<8x256xi1>, vector<8x256xf32>
    %cst_102 = arith.constant dense<0.000000e+00> : vector<32x256xf32>
    %165 = tpu.matmul %45, %164, %cst_102 {dimension_numbers = #tpu.dot_dimension_numbers<[1], [0], [0], [1], [0, 0, 1, 1], [], []>} : vector<32x8xf32>, vector<8x256xf32>, vector<32x256xf32> -> vector<32x256xf32>
    %166 = arith.addf %159, %165 : vector<32x256xf32>
    %c240_i32_103 = arith.constant 240 : i32
    %167 = tpu.dynamic_rotate %70 by %c240_i32_103 dim 1 : vector<8x256xf32>, i32 -> vector<8x256xf32>
    %cst_104 = arith.constant 0.000000e+00 : f32
    %168 = vector.shape_cast %24 : vector<1x256xi1> to vector<1x256xi1>
    %169 = vector.broadcast %168 : vector<1x256xi1> to vector<8x256xi1>
    %170 = vector.broadcast %cst_104 : f32 to vector<8x256xf32>
    %171 = arith.select %169, %167, %170 : vector<8x256xi1>, vector<8x256xf32>
    %cst_105 = arith.constant dense<0.000000e+00> : vector<32x256xf32>
    %172 = tpu.matmul %63, %171, %cst_105 {dimension_numbers = #tpu.dot_dimension_numbers<[1], [0], [0], [1], [0, 0, 1, 1], [], []>} : vector<32x8xf32>, vector<8x256xf32>, vector<32x256xf32> -> vector<32x256xf32>
    %173 = arith.addf %166, %172 : vector<32x256xf32>
    %c239_i32 = arith.constant 239 : i32
    %174 = tpu.dynamic_rotate %68 by %c239_i32 dim 1 : vector<8x256xf32>, i32 -> vector<8x256xf32>
    %cst_106 = arith.constant 0.000000e+00 : f32
    %175 = vector.shape_cast %29 : vector<1x256xi1> to vector<1x256xi1>
    %176 = vector.broadcast %175 : vector<1x256xi1> to vector<8x256xi1>
    %177 = vector.broadcast %cst_106 : f32 to vector<8x256xf32>
    %178 = arith.select %176, %174, %177 : vector<8x256xi1>, vector<8x256xf32>
    %cst_107 = arith.constant dense<0.000000e+00> : vector<32x256xf32>
    %179 = tpu.matmul %47, %178, %cst_107 {dimension_numbers = #tpu.dot_dimension_numbers<[1], [0], [0], [1], [0, 0, 1, 1], [], []>} : vector<32x8xf32>, vector<8x256xf32>, vector<32x256xf32> -> vector<32x256xf32>
    %180 = arith.addf %173, %179 : vector<32x256xf32>
    %c239_i32_108 = arith.constant 239 : i32
    %181 = tpu.dynamic_rotate %70 by %c239_i32_108 dim 1 : vector<8x256xf32>, i32 -> vector<8x256xf32>
    %cst_109 = arith.constant 0.000000e+00 : f32
    %182 = vector.shape_cast %29 : vector<1x256xi1> to vector<1x256xi1>
    %183 = vector.broadcast %182 : vector<1x256xi1> to vector<8x256xi1>
    %184 = vector.broadcast %cst_109 : f32 to vector<8x256xf32>
    %185 = arith.select %183, %181, %184 : vector<8x256xi1>, vector<8x256xf32>
    %cst_110 = arith.constant dense<0.000000e+00> : vector<32x256xf32>
    %186 = tpu.matmul %65, %185, %cst_110 {dimension_numbers = #tpu.dot_dimension_numbers<[1], [0], [0], [1], [0, 0, 1, 1], [], []>} : vector<32x8xf32>, vector<8x256xf32>, vector<32x256xf32> -> vector<32x256xf32>
    %187 = arith.addf %180, %186 : vector<32x256xf32>
    %188 = vector.broadcast %66 : vector<32x1xf32> to vector<32x256xf32>
    %189 = arith.addf %187, %188 : vector<32x256xf32>
    %190 = vector.extract_strided_slice %189 {offsets = [0, 0], sizes = [8, 256], strides = [1, 1]} : vector<32x256xf32> to vector<8x256xf32>
    %191 = arith.negf %190 : vector<8x256xf32>
    %192 = math.exp %191 : vector<8x256xf32>
    %cst_111 = arith.constant 1.000000e+00 : f32
    %193 = vector.broadcast %cst_111 : f32 to vector<8x256xf32>
    %194 = arith.addf %193, %192 : vector<8x256xf32>
    %195 = arith.divf %193, %194 : vector<8x256xf32>
    %196 = vector.extract_strided_slice %189 {offsets = [8, 0], sizes = [8, 256], strides = [1, 1]} : vector<32x256xf32> to vector<8x256xf32>
    %197 = arith.negf %196 : vector<8x256xf32>
    %198 = math.exp %197 : vector<8x256xf32>
    %cst_112 = arith.constant 1.000000e+00 : f32
    %199 = vector.broadcast %cst_112 : f32 to vector<8x256xf32>
    %200 = arith.addf %199, %198 : vector<8x256xf32>
    %201 = arith.divf %199, %200 : vector<8x256xf32>
    %202 = vector.extract_strided_slice %189 {offsets = [16, 0], sizes = [8, 256], strides = [1, 1]} : vector<32x256xf32> to vector<8x256xf32>
    %203 = arith.negf %202 : vector<8x256xf32>
    %204 = math.exp %203 : vector<8x256xf32>
    %cst_113 = arith.constant 1.000000e+00 : f32
    %205 = vector.broadcast %cst_113 : f32 to vector<8x256xf32>
    %206 = arith.addf %205, %204 : vector<8x256xf32>
    %207 = arith.divf %205, %206 : vector<8x256xf32>
    %208 = vector.extract_strided_slice %189 {offsets = [24, 0], sizes = [8, 256], strides = [1, 1]} : vector<32x256xf32> to vector<8x256xf32>
    %209 = math.tanh %208 : vector<8x256xf32>
    %c0_114 = arith.constant 0 : index
    %c0_115 = arith.constant 0 : index
    %c0_116 = arith.constant 0 : index
    %210 = vector.load %arg3[%c0_114, %c0_115, %c0_116] : memref<2x8x256xf32, #tpu.memory_space<vmem>>, vector<1x8x256xf32>
    %211 = vector.shape_cast %210 : vector<1x8x256xf32> to vector<8x256xf32>
    %212 = arith.mulf %201, %211 : vector<8x256xf32>
    %213 = arith.mulf %195, %209 : vector<8x256xf32>
    %214 = arith.addf %212, %213 : vector<8x256xf32>
    %215 = math.tanh %214 : vector<8x256xf32>
    %216 = arith.mulf %207, %215 : vector<8x256xf32>
    %c0_117 = arith.constant 0 : index
    %c0_118 = arith.constant 0 : index
    %c0_119 = arith.constant 0 : index
    %217 = vector.load %arg9[%c0_117, %c0_118, %c0_119] : memref<2x8x256xf32, #tpu.memory_space<vmem>>, vector<1x8x256xf32>
    %218 = vector.shape_cast %217 : vector<1x8x256xf32> to vector<8x256xf32>
    %219 = vector.shape_cast %216 : vector<8x256xf32> to vector<1x8x256xf32>
    tpu.vector_store %arg9[%c0_117, %c0_118, %c0_119], %219 {strides = array<i32>} : memref<2x8x256xf32, #tpu.memory_space<vmem>>, vector<1x8x256xf32>,
    %c0_120 = arith.constant 0 : index
    %c0_121 = arith.constant 0 : index
    %c0_122 = arith.constant 0 : index
    %220 = vector.load %arg10[%c0_120, %c0_121, %c0_122] : memref<2x8x256xf32, #tpu.memory_space<vmem>>, vector<1x8x256xf32>
    %221 = vector.shape_cast %220 : vector<1x8x256xf32> to vector<8x256xf32>
    %222 = vector.shape_cast %214 : vector<8x256xf32> to vector<1x8x256xf32>
    tpu.vector_store %arg10[%c0_120, %c0_121, %c0_122], %222 {strides = array<i32>} : memref<2x8x256xf32, #tpu.memory_space<vmem>>, vector<1x8x256xf32>,
    %c1_123 = arith.constant 1 : index
    %c0_124 = arith.constant 0 : index
    %c0_125 = arith.constant 0 : index
    %223 = vector.load %arg1[%c1_123, %c0_124, %c0_125] : memref<2x8x256xf32, #tpu.memory_space<vmem>>, vector<1x8x256xf32>
    %224 = vector.shape_cast %223 : vector<1x8x256xf32> to vector<8x256xf32>
    %c1_126 = arith.constant 1 : index
    %c0_127 = arith.constant 0 : index
    %c0_128 = arith.constant 0 : index
    %225 = vector.load %arg2[%c1_126, %c0_127, %c0_128] : memref<2x8x256xf32, #tpu.memory_space<vmem>>, vector<1x8x256xf32>
    %226 = vector.shape_cast %225 : vector<1x8x256xf32> to vector<8x256xf32>
    %cst_129 = arith.constant 0.000000e+00 : f32
    %227 = vector.broadcast %cst_129 : f32 to vector<32x256xf32>
    %c17_i32_130 = arith.constant 17 : i32
    %228 = tpu.dynamic_rotate %224 by %c17_i32_130 dim 1 : vector<8x256xf32>, i32 -> vector<8x256xf32>
    %cst_131 = arith.constant 0.000000e+00 : f32
    %229 = vector.shape_cast %6 : vector<1x256xi1> to vector<1x256xi1>
    %230 = vector.broadcast %229 : vector<1x256xi1> to vector<8x256xi1>
    %231 = vector.broadcast %cst_131 : f32 to vector<8x256xf32>
    %232 = arith.select %230, %228, %231 : vector<8x256xi1>, vector<8x256xf32>
    %cst_132 = arith.constant dense<0.000000e+00> : vector<32x256xf32>
    %233 = tpu.matmul %31, %232, %cst_132 {dimension_numbers = #tpu.dot_dimension_numbers<[1], [0], [0], [1], [0, 0, 1, 1], [], []>} : vector<32x8xf32>, vector<8x256xf32>, vector<32x256xf32> -> vector<32x256xf32>
    %234 = arith.addf %227, %233 : vector<32x256xf32>
    %c17_i32_133 = arith.constant 17 : i32
    %235 = tpu.dynamic_rotate %226 by %c17_i32_133 dim 1 : vector<8x256xf32>, i32 -> vector<8x256xf32>
    %cst_134 = arith.constant 0.000000e+00 : f32
    %236 = vector.shape_cast %6 : vector<1x256xi1> to vector<1x256xi1>
    %237 = vector.broadcast %236 : vector<1x256xi1> to vector<8x256xi1>
    %238 = vector.broadcast %cst_134 : f32 to vector<8x256xf32>
    %239 = arith.select %237, %235, %238 : vector<8x256xi1>, vector<8x256xf32>
    %cst_135 = arith.constant dense<0.000000e+00> : vector<32x256xf32>
    %240 = tpu.matmul %49, %239, %cst_135 {dimension_numbers = #tpu.dot_dimension_numbers<[1], [0], [0], [1], [0, 0, 1, 1], [], []>} : vector<32x8xf32>, vector<8x256xf32>, vector<32x256xf32> -> vector<32x256xf32>
    %241 = arith.addf %234, %240 : vector<32x256xf32>
    %c16_i32_136 = arith.constant 16 : i32
    %242 = tpu.dynamic_rotate %224 by %c16_i32_136 dim 1 : vector<8x256xf32>, i32 -> vector<8x256xf32>
    %cst_137 = arith.constant 0.000000e+00 : f32
    %243 = vector.shape_cast %8 : vector<1x256xi1> to vector<1x256xi1>
    %244 = vector.broadcast %243 : vector<1x256xi1> to vector<8x256xi1>
    %245 = vector.broadcast %cst_137 : f32 to vector<8x256xf32>
    %246 = arith.select %244, %242, %245 : vector<8x256xi1>, vector<8x256xf32>
    %cst_138 = arith.constant dense<0.000000e+00> : vector<32x256xf32>
    %247 = tpu.matmul %33, %246, %cst_138 {dimension_numbers = #tpu.dot_dimension_numbers<[1], [0], [0], [1], [0, 0, 1, 1], [], []>} : vector<32x8xf32>, vector<8x256xf32>, vector<32x256xf32> -> vector<32x256xf32>
    %248 = arith.addf %241, %247 : vector<32x256xf32>
    %c16_i32_139 = arith.constant 16 : i32
    %249 = tpu.dynamic_rotate %226 by %c16_i32_139 dim 1 : vector<8x256xf32>, i32 -> vector<8x256xf32>
    %cst_140 = arith.constant 0.000000e+00 : f32
    %250 = vector.shape_cast %8 : vector<1x256xi1> to vector<1x256xi1>
    %251 = vector.broadcast %250 : vector<1x256xi1> to vector<8x256xi1>
    %252 = vector.broadcast %cst_140 : f32 to vector<8x256xf32>
    %253 = arith.select %251, %249, %252 : vector<8x256xi1>, vector<8x256xf32>
    %cst_141 = arith.constant dense<0.000000e+00> : vector<32x256xf32>
    %254 = tpu.matmul %51, %253, %cst_141 {dimension_numbers = #tpu.dot_dimension_numbers<[1], [0], [0], [1], [0, 0, 1, 1], [], []>} : vector<32x8xf32>, vector<8x256xf32>, vector<32x256xf32> -> vector<32x256xf32>
    %255 = arith.addf %248, %254 : vector<32x256xf32>
    %c15_i32_142 = arith.constant 15 : i32
    %256 = tpu.dynamic_rotate %224 by %c15_i32_142 dim 1 : vector<8x256xf32>, i32 -> vector<8x256xf32>
    %cst_143 = arith.constant 0.000000e+00 : f32
    %257 = vector.shape_cast %13 : vector<1x256xi1> to vector<1x256xi1>
    %258 = vector.broadcast %257 : vector<1x256xi1> to vector<8x256xi1>
    %259 = vector.broadcast %cst_143 : f32 to vector<8x256xf32>
    %260 = arith.select %258, %256, %259 : vector<8x256xi1>, vector<8x256xf32>
    %cst_144 = arith.constant dense<0.000000e+00> : vector<32x256xf32>
    %261 = tpu.matmul %35, %260, %cst_144 {dimension_numbers = #tpu.dot_dimension_numbers<[1], [0], [0], [1], [0, 0, 1, 1], [], []>} : vector<32x8xf32>, vector<8x256xf32>, vector<32x256xf32> -> vector<32x256xf32>
    %262 = arith.addf %255, %261 : vector<32x256xf32>
    %c15_i32_145 = arith.constant 15 : i32
    %263 = tpu.dynamic_rotate %226 by %c15_i32_145 dim 1 : vector<8x256xf32>, i32 -> vector<8x256xf32>
    %cst_146 = arith.constant 0.000000e+00 : f32
    %264 = vector.shape_cast %13 : vector<1x256xi1> to vector<1x256xi1>
    %265 = vector.broadcast %264 : vector<1x256xi1> to vector<8x256xi1>
    %266 = vector.broadcast %cst_146 : f32 to vector<8x256xf32>
    %267 = arith.select %265, %263, %266 : vector<8x256xi1>, vector<8x256xf32>
    %cst_147 = arith.constant dense<0.000000e+00> : vector<32x256xf32>
    %268 = tpu.matmul %53, %267, %cst_147 {dimension_numbers = #tpu.dot_dimension_numbers<[1], [0], [0], [1], [0, 0, 1, 1], [], []>} : vector<32x8xf32>, vector<8x256xf32>, vector<32x256xf32> -> vector<32x256xf32>
    %269 = arith.addf %262, %268 : vector<32x256xf32>
    %c1_i32_148 = arith.constant 1 : i32
    %270 = tpu.dynamic_rotate %224 by %c1_i32_148 dim 1 : vector<8x256xf32>, i32 -> vector<8x256xf32>
    %cst_149 = arith.constant 0.000000e+00 : f32
    %271 = vector.shape_cast %15 : vector<1x256xi1> to vector<1x256xi1>
    %272 = vector.broadcast %271 : vector<1x256xi1> to vector<8x256xi1>
    %273 = vector.broadcast %cst_149 : f32 to vector<8x256xf32>
    %274 = arith.select %272, %270, %273 : vector<8x256xi1>, vector<8x256xf32>
    %cst_150 = arith.constant dense<0.000000e+00> : vector<32x256xf32>
    %275 = tpu.matmul %37, %274, %cst_150 {dimension_numbers = #tpu.dot_dimension_numbers<[1], [0], [0], [1], [0, 0, 1, 1], [], []>} : vector<32x8xf32>, vector<8x256xf32>, vector<32x256xf32> -> vector<32x256xf32>
    %276 = arith.addf %269, %275 : vector<32x256xf32>
    %c1_i32_151 = arith.constant 1 : i32
    %277 = tpu.dynamic_rotate %226 by %c1_i32_151 dim 1 : vector<8x256xf32>, i32 -> vector<8x256xf32>
    %cst_152 = arith.constant 0.000000e+00 : f32
    %278 = vector.shape_cast %15 : vector<1x256xi1> to vector<1x256xi1>
    %279 = vector.broadcast %278 : vector<1x256xi1> to vector<8x256xi1>
    %280 = vector.broadcast %cst_152 : f32 to vector<8x256xf32>
    %281 = arith.select %279, %277, %280 : vector<8x256xi1>, vector<8x256xf32>
    %cst_153 = arith.constant dense<0.000000e+00> : vector<32x256xf32>
    %282 = tpu.matmul %55, %281, %cst_153 {dimension_numbers = #tpu.dot_dimension_numbers<[1], [0], [0], [1], [0, 0, 1, 1], [], []>} : vector<32x8xf32>, vector<8x256xf32>, vector<32x256xf32> -> vector<32x256xf32>
    %283 = arith.addf %276, %282 : vector<32x256xf32>
    %cst_154 = arith.constant dense<0.000000e+00> : vector<32x256xf32>
    %284 = tpu.matmul %39, %224, %cst_154 {dimension_numbers = #tpu.dot_dimension_numbers<[1], [0], [0], [1], [0, 0, 1, 1], [], []>} : vector<32x8xf32>, vector<8x256xf32>, vector<32x256xf32> -> vector<32x256xf32>
    %285 = arith.addf %283, %284 : vector<32x256xf32>
    %cst_155 = arith.constant dense<0.000000e+00> : vector<32x256xf32>
    %286 = tpu.matmul %57, %226, %cst_155 {dimension_numbers = #tpu.dot_dimension_numbers<[1], [0], [0], [1], [0, 0, 1, 1], [], []>} : vector<32x8xf32>, vector<8x256xf32>, vector<32x256xf32> -> vector<32x256xf32>
    %287 = arith.addf %285, %286 : vector<32x256xf32>
    %c255_i32_156 = arith.constant 255 : i32
    %288 = tpu.dynamic_rotate %224 by %c255_i32_156 dim 1 : vector<8x256xf32>, i32 -> vector<8x256xf32>
    %cst_157 = arith.constant 0.000000e+00 : f32
    %289 = vector.shape_cast %17 : vector<1x256xi1> to vector<1x256xi1>
    %290 = vector.broadcast %289 : vector<1x256xi1> to vector<8x256xi1>
    %291 = vector.broadcast %cst_157 : f32 to vector<8x256xf32>
    %292 = arith.select %290, %288, %291 : vector<8x256xi1>, vector<8x256xf32>
    %cst_158 = arith.constant dense<0.000000e+00> : vector<32x256xf32>
    %293 = tpu.matmul %41, %292, %cst_158 {dimension_numbers = #tpu.dot_dimension_numbers<[1], [0], [0], [1], [0, 0, 1, 1], [], []>} : vector<32x8xf32>, vector<8x256xf32>, vector<32x256xf32> -> vector<32x256xf32>
    %294 = arith.addf %287, %293 : vector<32x256xf32>
    %c255_i32_159 = arith.constant 255 : i32
    %295 = tpu.dynamic_rotate %226 by %c255_i32_159 dim 1 : vector<8x256xf32>, i32 -> vector<8x256xf32>
    %cst_160 = arith.constant 0.000000e+00 : f32
    %296 = vector.shape_cast %17 : vector<1x256xi1> to vector<1x256xi1>
    %297 = vector.broadcast %296 : vector<1x256xi1> to vector<8x256xi1>
    %298 = vector.broadcast %cst_160 : f32 to vector<8x256xf32>
    %299 = arith.select %297, %295, %298 : vector<8x256xi1>, vector<8x256xf32>
    %cst_161 = arith.constant dense<0.000000e+00> : vector<32x256xf32>
    %300 = tpu.matmul %59, %299, %cst_161 {dimension_numbers = #tpu.dot_dimension_numbers<[1], [0], [0], [1], [0, 0, 1, 1], [], []>} : vector<32x8xf32>, vector<8x256xf32>, vector<32x256xf32> -> vector<32x256xf32>
    %301 = arith.addf %294, %300 : vector<32x256xf32>
    %c241_i32_162 = arith.constant 241 : i32
    %302 = tpu.dynamic_rotate %224 by %c241_i32_162 dim 1 : vector<8x256xf32>, i32 -> vector<8x256xf32>
    %cst_163 = arith.constant 0.000000e+00 : f32
    %303 = vector.shape_cast %22 : vector<1x256xi1> to vector<1x256xi1>
    %304 = vector.broadcast %303 : vector<1x256xi1> to vector<8x256xi1>
    %305 = vector.broadcast %cst_163 : f32 to vector<8x256xf32>
    %306 = arith.select %304, %302, %305 : vector<8x256xi1>, vector<8x256xf32>
    %cst_164 = arith.constant dense<0.000000e+00> : vector<32x256xf32>
    %307 = tpu.matmul %43, %306, %cst_164 {dimension_numbers = #tpu.dot_dimension_numbers<[1], [0], [0], [1], [0, 0, 1, 1], [], []>} : vector<32x8xf32>, vector<8x256xf32>, vector<32x256xf32> -> vector<32x256xf32>
    %308 = arith.addf %301, %307 : vector<32x256xf32>
    %c241_i32_165 = arith.constant 241 : i32
    %309 = tpu.dynamic_rotate %226 by %c241_i32_165 dim 1 : vector<8x256xf32>, i32 -> vector<8x256xf32>
    %cst_166 = arith.constant 0.000000e+00 : f32
    %310 = vector.shape_cast %22 : vector<1x256xi1> to vector<1x256xi1>
    %311 = vector.broadcast %310 : vector<1x256xi1> to vector<8x256xi1>
    %312 = vector.broadcast %cst_166 : f32 to vector<8x256xf32>
    %313 = arith.select %311, %309, %312 : vector<8x256xi1>, vector<8x256xf32>
    %cst_167 = arith.constant dense<0.000000e+00> : vector<32x256xf32>
    %314 = tpu.matmul %61, %313, %cst_167 {dimension_numbers = #tpu.dot_dimension_numbers<[1], [0], [0], [1], [0, 0, 1, 1], [], []>} : vector<32x8xf32>, vector<8x256xf32>, vector<32x256xf32> -> vector<32x256xf32>
    %315 = arith.addf %308, %314 : vector<32x256xf32>
    %c240_i32_168 = arith.constant 240 : i32
    %316 = tpu.dynamic_rotate %224 by %c240_i32_168 dim 1 : vector<8x256xf32>, i32 -> vector<8x256xf32>
    %cst_169 = arith.constant 0.000000e+00 : f32
    %317 = vector.shape_cast %24 : vector<1x256xi1> to vector<1x256xi1>
    %318 = vector.broadcast %317 : vector<1x256xi1> to vector<8x256xi1>
    %319 = vector.broadcast %cst_169 : f32 to vector<8x256xf32>
    %320 = arith.select %318, %316, %319 : vector<8x256xi1>, vector<8x256xf32>
    %cst_170 = arith.constant dense<0.000000e+00> : vector<32x256xf32>
    %321 = tpu.matmul %45, %320, %cst_170 {dimension_numbers = #tpu.dot_dimension_numbers<[1], [0], [0], [1], [0, 0, 1, 1], [], []>} : vector<32x8xf32>, vector<8x256xf32>, vector<32x256xf32> -> vector<32x256xf32>
    %322 = arith.addf %315, %321 : vector<32x256xf32>
    %c240_i32_171 = arith.constant 240 : i32
    %323 = tpu.dynamic_rotate %226 by %c240_i32_171 dim 1 : vector<8x256xf32>, i32 -> vector<8x256xf32>
    %cst_172 = arith.constant 0.000000e+00 : f32
    %324 = vector.shape_cast %24 : vector<1x256xi1> to vector<1x256xi1>
    %325 = vector.broadcast %324 : vector<1x256xi1> to vector<8x256xi1>
    %326 = vector.broadcast %cst_172 : f32 to vector<8x256xf32>
    %327 = arith.select %325, %323, %326 : vector<8x256xi1>, vector<8x256xf32>
    %cst_173 = arith.constant dense<0.000000e+00> : vector<32x256xf32>
    %328 = tpu.matmul %63, %327, %cst_173 {dimension_numbers = #tpu.dot_dimension_numbers<[1], [0], [0], [1], [0, 0, 1, 1], [], []>} : vector<32x8xf32>, vector<8x256xf32>, vector<32x256xf32> -> vector<32x256xf32>
    %329 = arith.addf %322, %328 : vector<32x256xf32>
    %c239_i32_174 = arith.constant 239 : i32
    %330 = tpu.dynamic_rotate %224 by %c239_i32_174 dim 1 : vector<8x256xf32>, i32 -> vector<8x256xf32>
    %cst_175 = arith.constant 0.000000e+00 : f32
    %331 = vector.shape_cast %29 : vector<1x256xi1> to vector<1x256xi1>
    %332 = vector.broadcast %331 : vector<1x256xi1> to vector<8x256xi1>
    %333 = vector.broadcast %cst_175 : f32 to vector<8x256xf32>
    %334 = arith.select %332, %330, %333 : vector<8x256xi1>, vector<8x256xf32>
    %cst_176 = arith.constant dense<0.000000e+00> : vector<32x256xf32>
    %335 = tpu.matmul %47, %334, %cst_176 {dimension_numbers = #tpu.dot_dimension_numbers<[1], [0], [0], [1], [0, 0, 1, 1], [], []>} : vector<32x8xf32>, vector<8x256xf32>, vector<32x256xf32> -> vector<32x256xf32>
    %336 = arith.addf %329, %335 : vector<32x256xf32>
    %c239_i32_177 = arith.constant 239 : i32
    %337 = tpu.dynamic_rotate %226 by %c239_i32_177 dim 1 : vector<8x256xf32>, i32 -> vector<8x256xf32>
    %cst_178 = arith.constant 0.000000e+00 : f32
    %338 = vector.shape_cast %29 : vector<1x256xi1> to vector<1x256xi1>
    %339 = vector.broadcast %338 : vector<1x256xi1> to vector<8x256xi1>
    %340 = vector.broadcast %cst_178 : f32 to vector<8x256xf32>
    %341 = arith.select %339, %337, %340 : vector<8x256xi1>, vector<8x256xf32>
    %cst_179 = arith.constant dense<0.000000e+00> : vector<32x256xf32>
    %342 = tpu.matmul %65, %341, %cst_179 {dimension_numbers = #tpu.dot_dimension_numbers<[1], [0], [0], [1], [0, 0, 1, 1], [], []>} : vector<32x8xf32>, vector<8x256xf32>, vector<32x256xf32> -> vector<32x256xf32>
    %343 = arith.addf %336, %342 : vector<32x256xf32>
    %344 = vector.broadcast %66 : vector<32x1xf32> to vector<32x256xf32>
    %345 = arith.addf %343, %344 : vector<32x256xf32>
    %346 = vector.extract_strided_slice %345 {offsets = [0, 0], sizes = [8, 256], strides = [1, 1]} : vector<32x256xf32> to vector<8x256xf32>
    %347 = arith.negf %346 : vector<8x256xf32>
    %348 = math.exp %347 : vector<8x256xf32>
    %cst_180 = arith.constant 1.000000e+00 : f32
    %349 = vector.broadcast %cst_180 : f32 to vector<8x256xf32>
    %350 = arith.addf %349, %348 : vector<8x256xf32>
    %351 = arith.divf %349, %350 : vector<8x256xf32>
    %352 = vector.extract_strided_slice %345 {offsets = [8, 0], sizes = [8, 256], strides = [1, 1]} : vector<32x256xf32> to vector<8x256xf32>
    %353 = arith.negf %352 : vector<8x256xf32>
    %354 = math.exp %353 : vector<8x256xf32>
    %cst_181 = arith.constant 1.000000e+00 : f32
    %355 = vector.broadcast %cst_181 : f32 to vector<8x256xf32>
    %356 = arith.addf %355, %354 : vector<8x256xf32>
    %357 = arith.divf %355, %356 : vector<8x256xf32>
    %358 = vector.extract_strided_slice %345 {offsets = [16, 0], sizes = [8, 256], strides = [1, 1]} : vector<32x256xf32> to vector<8x256xf32>
    %359 = arith.negf %358 : vector<8x256xf32>
    %360 = math.exp %359 : vector<8x256xf32>
    %cst_182 = arith.constant 1.000000e+00 : f32
    %361 = vector.broadcast %cst_182 : f32 to vector<8x256xf32>
    %362 = arith.addf %361, %360 : vector<8x256xf32>
    %363 = arith.divf %361, %362 : vector<8x256xf32>
    %364 = vector.extract_strided_slice %345 {offsets = [24, 0], sizes = [8, 256], strides = [1, 1]} : vector<32x256xf32> to vector<8x256xf32>
    %365 = math.tanh %364 : vector<8x256xf32>
    %c1_183 = arith.constant 1 : index
    %c0_184 = arith.constant 0 : index
    %c0_185 = arith.constant 0 : index
    %366 = vector.load %arg3[%c1_183, %c0_184, %c0_185] : memref<2x8x256xf32, #tpu.memory_space<vmem>>, vector<1x8x256xf32>
    %367 = vector.shape_cast %366 : vector<1x8x256xf32> to vector<8x256xf32>
    %368 = arith.mulf %357, %367 : vector<8x256xf32>
    %369 = arith.mulf %351, %365 : vector<8x256xf32>
    %370 = arith.addf %368, %369 : vector<8x256xf32>
    %371 = math.tanh %370 : vector<8x256xf32>
    %372 = arith.mulf %363, %371 : vector<8x256xf32>
    %c1_186 = arith.constant 1 : index
    %c0_187 = arith.constant 0 : index
    %c0_188 = arith.constant 0 : index
    %373 = vector.load %arg9[%c1_186, %c0_187, %c0_188] : memref<2x8x256xf32, #tpu.memory_space<vmem>>, vector<1x8x256xf32>
    %374 = vector.shape_cast %373 : vector<1x8x256xf32> to vector<8x256xf32>
    %375 = vector.shape_cast %372 : vector<8x256xf32> to vector<1x8x256xf32>
    tpu.vector_store %arg9[%c1_186, %c0_187, %c0_188], %375 {strides = array<i32>} : memref<2x8x256xf32, #tpu.memory_space<vmem>>, vector<1x8x256xf32>,
    %c1_189 = arith.constant 1 : index
    %c0_190 = arith.constant 0 : index
    %c0_191 = arith.constant 0 : index
    %376 = vector.load %arg10[%c1_189, %c0_190, %c0_191] : memref<2x8x256xf32, #tpu.memory_space<vmem>>, vector<1x8x256xf32>
    %377 = vector.shape_cast %376 : vector<1x8x256xf32> to vector<8x256xf32>
    %378 = vector.shape_cast %370 : vector<8x256xf32> to vector<1x8x256xf32>
    tpu.vector_store %arg10[%c1_189, %c0_190, %c0_191], %378 {strides = array<i32>} : memref<2x8x256xf32, #tpu.memory_space<vmem>>, vector<1x8x256xf32>,
    return
  }
  func.func @transform_0(%arg0: i32) -> (i32, i32, i32) {
    %c0_i32 = arith.constant 0 : i32
    %c0_i32_0 = arith.constant 0 : i32
    %c0_i32_1 = arith.constant 0 : i32
    return %arg0, %c0_i32, %c0_i32_0 : i32, i32, i32
  }
  func.func @transform_1(%arg0: i32) -> (i32, i32, i32) {
    %c0_i32 = arith.constant 0 : i32
    %c0_i32_0 = arith.constant 0 : i32
    %c0_i32_1 = arith.constant 0 : i32
    return %arg0, %c0_i32, %c0_i32_0 : i32, i32, i32
  }
  func.func @transform_2(%arg0: i32) -> (i32, i32, i32) {
    %c0_i32 = arith.constant 0 : i32
    %c0_i32_0 = arith.constant 0 : i32
    %c0_i32_1 = arith.constant 0 : i32
    return %arg0, %c0_i32, %c0_i32_0 : i32, i32, i32
  }
  func.func @transform_3(%arg0: i32) -> (i32, i32) {
    %c0_i32 = arith.constant 0 : i32
    %c0_i32_0 = arith.constant 0 : i32
    %c0_i32_1 = arith.constant 0 : i32
    return %c0_i32, %c0_i32_0 : i32, i32
  }
  func.func @transform_4(%arg0: i32) -> (i32, i32) {
    %c0_i32 = arith.constant 0 : i32
    %c0_i32_0 = arith.constant 0 : i32
    %c0_i32_1 = arith.constant 0 : i32
    return %c0_i32, %c0_i32_0 : i32, i32
  }
  func.func @transform_5(%arg0: i32) -> (i32, i32, i32) {
    %c0_i32 = arith.constant 0 : i32
    %c0_i32_0 = arith.constant 0 : i32
    %c0_i32_1 = arith.constant 0 : i32
    %c0_i32_2 = arith.constant 0 : i32
    return %c0_i32, %c0_i32_0, %c0_i32_1 : i32, i32, i32
  }
  func.func @transform_6(%arg0: i32) -> (i32, i32, i32) {
    %c0_i32 = arith.constant 0 : i32
    %c0_i32_0 = arith.constant 0 : i32
    %c0_i32_1 = arith.constant 0 : i32
    %c0_i32_2 = arith.constant 0 : i32
    return %c0_i32, %c0_i32_0, %c0_i32_1 : i32, i32, i32
  }
  func.func @transform_7(%arg0: i32) -> (i32, i32) {
    %c0_i32 = arith.constant 0 : i32
    %c0_i32_0 = arith.constant 0 : i32
    %c0_i32_1 = arith.constant 0 : i32
    return %c0_i32, %c0_i32_0 : i32, i32
  }
  func.func @transform_8(%arg0: i32) -> (i32, i32, i32) {
    %c0_i32 = arith.constant 0 : i32
    %c0_i32_0 = arith.constant 0 : i32
    %c0_i32_1 = arith.constant 0 : i32
    return %arg0, %c0_i32, %c0_i32_0 : i32, i32, i32
  }
  func.func @transform_9(%arg0: i32) -> (i32, i32, i32) {
    %c0_i32 = arith.constant 0 : i32
    %c0_i32_0 = arith.constant 0 : i32
    %c0_i32_1 = arith.constant 0 : i32
    return %arg0, %c0_i32, %c0_i32_0 : i32, i32, i32
  }
}

</mosaic_0001>

<llo_original>
// kernel: conv_lstm_cell.1
$region0: #{conv_lstm_cell.1}
  #allocation0 [shape = 'u32[]', space=smem, size = 0x4, offset = 0x4, fixed_abs, tag = 'smem constant byte address 0x4 - core index']
  #allocation1 [shape = 'u32[144,128]{1,0:T(1,128)}', space=vmem, size = 0x12000, scoped, tag = 'internal scratch']
  %s0 = inlined_call_operand.vmem [shape: f32[2,8,256], index: 0, kind: input, shape index: {}]
  %s1 = inlined_call_operand.vmem [shape: f32[2,8,256], index: 1, kind: input, shape index: {}]
  %s2 = inlined_call_operand.vmem [shape: f32[2,8,256], index: 2, kind: input, shape index: {}]
  %s3 = inlined_call_operand.vmem [shape: s32[1,256], index: 3, kind: input, shape index: {}]
  %s4 = inlined_call_operand.vmem [shape: s32[1,256], index: 4, kind: input, shape index: {}]
  %s5 = inlined_call_operand.vmem [shape: f32[9,32,8], index: 5, kind: input, shape index: {}]
  %s6 = inlined_call_operand.vmem [shape: f32[9,32,8], index: 6, kind: input, shape index: {}]
  %s7 = inlined_call_operand.vmem [shape: f32[32,1], index: 7, kind: input, shape index: {}]
  %s8 = inlined_call_operand.vmem [shape: f32[2,8,256], index: 8, kind: output, shape index: {0}]
  %s9 = inlined_call_operand.vmem [shape: f32[2,8,256], index: 9, kind: output, shape index: {1}]
  %10 = xla_tuple %s8, %s9
  %s11 = sld [smem:[#allocation0]]
  $region50: #{conv_lstm_cell.1} parent=0
    _
  %s13 = ssub.s32 1, %s11
  %s14 = scalar_select 0, %s13, %s11
  // Predicated region
  $region2: #{conv_lstm_cell.1} parent=0 // pred_check
    _
  $region3: #{conv_lstm_cell.1} parent=0 // pred_check_branch
    %16 = sbr.rel (0) target = $region5
  $region4: #{conv_lstm_cell.1} parent=0 // pred_region
    _
  $region5: #{conv_lstm_cell.1} parent=0 // pred_fallthru
    _
  // Predicated region
  $region6: #{conv_lstm_cell.1} parent=0 // pred_check
    _
  $region7: #{conv_lstm_cell.1} parent=0 // pred_check_branch
    %18 = sbr.rel (0) target = $region9
  $region8: #{conv_lstm_cell.1} parent=0 // pred_region
    _
  $region9: #{conv_lstm_cell.1} parent=0 // pred_fallthru
    _
  // Predicated region
  $region10: #{conv_lstm_cell.1} parent=0 // pred_check
    _
  $region11: #{conv_lstm_cell.1} parent=0 // pred_check_branch
    %20 = sbr.rel (0) target = $region13
  $region12: #{conv_lstm_cell.1} parent=0 // pred_region
    _
  $region13: #{conv_lstm_cell.1} parent=0 // pred_fallthru
    _
  // Predicated region
  $region14: #{conv_lstm_cell.1} parent=0 // pred_check
    _
  $region15: #{conv_lstm_cell.1} parent=0 // pred_check_branch
    %22 = sbr.rel (0) target = $region17
  $region16: #{conv_lstm_cell.1} parent=0 // pred_region
    _
  $region17: #{conv_lstm_cell.1} parent=0 // pred_fallthru
    _
  // Predicated region
  $region18: #{conv_lstm_cell.1} parent=0 // pred_check
    _
  $region19: #{conv_lstm_cell.1} parent=0 // pred_check_branch
    %24 = sbr.rel (0) target = $region21
  $region20: #{conv_lstm_cell.1} parent=0 // pred_region
    _
  $region21: #{conv_lstm_cell.1} parent=0 // pred_fallthru
    _
  // Predicated region
  $region22: #{conv_lstm_cell.1} parent=0 // pred_check
    _
  $region23: #{conv_lstm_cell.1} parent=0 // pred_check_branch
    %26 = sbr.rel (0) target = $region25
  $region24: #{conv_lstm_cell.1} parent=0 // pred_region
    _
  $region25: #{conv_lstm_cell.1} parent=0 // pred_fallthru
    _
  // Predicated region
  $region26: #{conv_lstm_cell.1} parent=0 // pred_check
    _
  $region27: #{conv_lstm_cell.1} parent=0 // pred_check_branch
    %28 = sbr.rel (0) target = $region29
  $region28: #{conv_lstm_cell.1} parent=0 // pred_region
    _
  $region29: #{conv_lstm_cell.1} parent=0 // pred_fallthru
    _
  // Predicated region
  $region30: #{conv_lstm_cell.1} parent=0 // pred_check
    _
  $region31: #{conv_lstm_cell.1} parent=0 // pred_check_branch
    %30 = sbr.rel (0) target = $region33
  $region32: #{conv_lstm_cell.1} parent=0 // pred_region
    _
  $region33: #{conv_lstm_cell.1} parent=0 // pred_fallthru
    _
  %v31 = vld [vmem:[%s3] sm:$0x3]
  %v32 = vld [vmem:[%s4] sm:$0x3]
  %vm33 = vcmp.ge.s32.totalorder %v31, 1
  %vm34 = vcmp.ge.s32.totalorder %v32, 1
  %vm35 = vmand %vm33, %vm34
  %vm36 = vcmp.lt.s32.totalorder %v32, 15
  %vm37 = vmand %vm33, %vm36
  %vm38 = vcmp.lt.s32.totalorder %v31, 15
  %vm39 = vmand %vm38, %vm34
  %vm40 = vmand %vm38, %vm36
  %v41 = vld [vmem:[%s5] sm:$0xff]
  %v42 = vld [vmem:[%s5 + $0x8] sm:$0xff]
  %v43 = vld [vmem:[%s5 + $0x10] sm:$0xff]
  %v44 = vld [vmem:[%s5 + $0x18] sm:$0xff]
  %s45 = scalar_lea.vmem %s5, 32
  %v46 = vld [vmem:[%s45] sm:$0xff]
  %v47 = vld [vmem:[%s45 + $0x8] sm:$0xff]
  %v48 = vld [vmem:[%s45 + $0x10] sm:$0xff]
  %v49 = vld [vmem:[%s45 + $0x18] sm:$0xff]
  %s50 = scalar_lea.vmem %s5, 64
  %v51 = vld [vmem:[%s50] sm:$0xff]
  %v52 = vld [vmem:[%s50 + $0x8] sm:$0xff]
  %v53 = vld [vmem:[%s50 + $0x10] sm:$0xff]
  %v54 = vld [vmem:[%s50 + $0x18] sm:$0xff]
  %s55 = scalar_lea.vmem %s5, 96
  %v56 = vld [vmem:[%s55] sm:$0xff]
  %v57 = vld [vmem:[%s55 + $0x8] sm:$0xff]
  %v58 = vld [vmem:[%s55 + $0x10] sm:$0xff]
  %v59 = vld [vmem:[%s55 + $0x18] sm:$0xff]
  %s60 = scalar_lea.vmem %s5, 128
  %v61 = vld [vmem:[%s60] sm:$0xff]
  %v62 = vld [vmem:[%s60 + $0x8] sm:$0xff]
  %v63 = vld [vmem:[%s60 + $0x10] sm:$0xff]
  %v64 = vld [vmem:[%s60 + $0x18] sm:$0xff]
  %s65 = scalar_lea.vmem %s5, 160
  %v66 = vld [vmem:[%s65] sm:$0xff]
  %v67 = vld [vmem:[%s65 + $0x8] sm:$0xff]
  %v68 = vld [vmem:[%s65 + $0x10] sm:$0xff]
  %v69 = vld [vmem:[%s65 + $0x18] sm:$0xff]
  %s70 = scalar_lea.vmem %s5, 192
  %v71 = vld [vmem:[%s70] sm:$0xff]
  %v72 = vld [vmem:[%s70 + $0x8] sm:$0xff]
  %v73 = vld [vmem:[%s70 + $0x10] sm:$0xff]
  %v74 = vld [vmem:[%s70 + $0x18] sm:$0xff]
  %s75 = scalar_lea.vmem %s5, 224
  %v76 = vld [vmem:[%s75] sm:$0xff]
  %v77 = vld [vmem:[%s75 + $0x8] sm:$0xff]
  %v78 = vld [vmem:[%s75 + $0x10] sm:$0xff]
  %v79 = vld [vmem:[%s75 + $0x18] sm:$0xff]
  %s80 = scalar_lea.vmem %s5, 256
  %v81 = vld [vmem:[%s80] sm:$0xff]
  %v82 = vld [vmem:[%s80 + $0x8] sm:$0xff]
  %v83 = vld [vmem:[%s80 + $0x10] sm:$0xff]
  %v84 = vld [vmem:[%s80 + $0x18] sm:$0xff]
  %v85 = vld [vmem:[%s6] sm:$0xff]
  %v86 = vld [vmem:[%s6 + $0x8] sm:$0xff]
  %v87 = vld [vmem:[%s6 + $0x10] sm:$0xff]
  %v88 = vld [vmem:[%s6 + $0x18] sm:$0xff]
  %s89 = scalar_lea.vmem %s6, 32
  %v90 = vld [vmem:[%s89] sm:$0xff]
  %v91 = vld [vmem:[%s89 + $0x8] sm:$0xff]
  %v92 = vld [vmem:[%s89 + $0x10] sm:$0xff]
  %v93 = vld [vmem:[%s89 + $0x18] sm:$0xff]
  %s94 = scalar_lea.vmem %s6, 64
  %v95 = vld [vmem:[%s94] sm:$0xff]
  %v96 = vld [vmem:[%s94 + $0x8] sm:$0xff]
  %v97 = vld [vmem:[%s94 + $0x10] sm:$0xff]
  %v98 = vld [vmem:[%s94 + $0x18] sm:$0xff]
  %s99 = scalar_lea.vmem %s6, 96
  %v100 = vld [vmem:[%s99] sm:$0xff]
  %v101 = vld [vmem:[%s99 + $0x8] sm:$0xff]
  %v102 = vld [vmem:[%s99 + $0x10] sm:$0xff]
  %v103 = vld [vmem:[%s99 + $0x18] sm:$0xff]
  %s104 = scalar_lea.vmem %s6, 128
  %v105 = vld [vmem:[%s104] sm:$0xff]
  %v106 = vld [vmem:[%s104 + $0x8] sm:$0xff]
  %v107 = vld [vmem:[%s104 + $0x10] sm:$0xff]
  %v108 = vld [vmem:[%s104 + $0x18] sm:$0xff]
  %s109 = scalar_lea.vmem %s6, 160
  %v110 = vld [vmem:[%s109] sm:$0xff]
  %v111 = vld [vmem:[%s109 + $0x8] sm:$0xff]
  %v112 = vld [vmem:[%s109 + $0x10] sm:$0xff]
  %v113 = vld [vmem:[%s109 + $0x18] sm:$0xff]
  %s114 = scalar_lea.vmem %s6, 192
  %v115 = vld [vmem:[%s114] sm:$0xff]
  %v116 = vld [vmem:[%s114 + $0x8] sm:$0xff]
  %v117 = vld [vmem:[%s114 + $0x10] sm:$0xff]
  %v118 = vld [vmem:[%s114 + $0x18] sm:$0xff]
  %s119 = scalar_lea.vmem %s6, 224
  %v120 = vld [vmem:[%s119] sm:$0xff]
  %v121 = vld [vmem:[%s119 + $0x8] sm:$0xff]
  %v122 = vld [vmem:[%s119 + $0x10] sm:$0xff]
  %v123 = vld [vmem:[%s119 + $0x18] sm:$0xff]
  %s124 = scalar_lea.vmem %s6, 256
  %v125 = vld [vmem:[%s124] sm:$0xff]
  %v126 = vld [vmem:[%s124 + $0x8] sm:$0xff]
  %v127 = vld [vmem:[%s124 + $0x10] sm:$0xff]
  %v128 = vld [vmem:[%s124 + $0x18] sm:$0xff]
  %v129 = vld [vmem:[%s7] sm:$0xff]
  %v130 = vld [vmem:[%s7 + $0x8] sm:$0xff]
  %v131 = vld [vmem:[%s7 + $0x10] sm:$0xff]
  %v132 = vld [vmem:[%s7 + $0x18] sm:$0xff]
  %v133 = vld [vmem:[%s0] sm:$0xff]
  %v134 = vld [vmem:[%s0 + $0x8] sm:$0xff]
  %v135 = vld [vmem:[%s1] sm:$0xff]
  %v136 = vld [vmem:[%s1 + $0x8] sm:$0xff]
  %137 = vrot.lane.b32.xlu0 %v133, 17
  %v138 = vpop.permute.xlu0 %137
  %139 = vrot.lane.b32.xlu0 %v134, 17
  %v140 = vpop.permute.xlu0 %139
  %v141 = vlaneseq
  %v142 = vand.u32 %v141, 127
  %vm143 = vcmp.lt.s32.totalorder %v142, 17
  %v144 = vsel %vm143, %v138, %v140
  %v145 = vsel %vm143, %v140, %v138
  %v146 = vsel %vm35, 1, 0
  %v147 = vlaneseq
  %v148 = vshrl.u32 %v147, 7
  %v149 = vsub.s32 0, %v148
  %v150 = vrot.slane %v146, %v149
  %v151 = vlaneseq
  %v152 = vshrl.u32 %v151, 7
  %v153 = vsub.s32 1, %v152
  %v154 = vrot.slane %v146, %v153
  %vm155 = vcmp.eq.s32.totalorder %v150, 1
  %vm156 = vcmp.eq.s32.totalorder %v154, 1
  %v157 = vsel %vm155, %v145, 0.0
  %v158 = vsel %vm156, %v144, 0.0
  %159 = vrot.lane.b32.xlu0 %v135, 17
  %v160 = vpop.permute.xlu0 %159
  %161 = vrot.lane.b32.xlu0 %v136, 17
  %v162 = vpop.permute.xlu0 %161
  %v163 = vsel %vm143, %v160, %v162
  %v164 = vsel %vm143, %v162, %v160
  %v165 = vsel %vm155, %v164, 0.0
  %v166 = vsel %vm156, %v163, 0.0
  %vm167 = vcmask 64512
  %v169 = vsel %vm167, %v85, 0
  %v172 = vsel %vm167, %v86, 0
  %v175 = vsel %vm167, %v87, 0
  %v178 = vsel %vm167, %v88, 0
  %180 = vmatprep.subr.mxu0 %v166
  %181 = vmatpush1.msra.mxu0 %v165
  %182 = vmatprep.subr.mxu0 0.0
  %183 = vmatpush1.msra.mxu0 0.0
  %184 = vmatprep.subr.mxu0 0.0
  %185 = vmatpush1.msra.mxu0 0.0
  %186 = vmatprep.subr.mxu0 0.0
  %187 = vmatpush1.msra.mxu0 0.0
  %188 = vmatprep.subr.mxu0 0.0
  %189 = vmatpush1.msra.mxu0 0.0
  %190 = vmatprep.subr.mxu0 0.0
  %191 = vmatpush1.msra.mxu0 0.0
  %192 = vmatprep.subr.mxu0 0.0
  %193 = vmatpush1.msra.mxu0 0.0
  %194 = vmatprep.subr.mxu0 0.0
  %195 = vmatpush1.msra.mxu0 0.0
  %196 = vmatprep.subr.mxu0 0.0
  %197 = vmatpush1.msra.mxu0 0.0
  %198 = vmatprep.subr.mxu0 0.0
  %199 = vmatpush1.msra.mxu0 0.0
  %200 = vmatprep.subr.mxu0 0.0
  %201 = vmatpush1.msra.mxu0 0.0
  %202 = vmatprep.subr.mxu0 0.0
  %203 = vmatpush1.msra.mxu0 0.0
  %204 = vmatprep.subr.mxu0 0.0
  %205 = vmatpush1.msra.mxu0 0.0
  %206 = vmatprep.subr.mxu0 0.0
  %207 = vmatpush1.msra.mxu0 0.0
  %208 = vmatprep.subr.mxu0 0.0
  %209 = vmatpush1.msra.mxu0 0.0
  %210 = vmatprep.subr.mxu0 0.0
  %211 = vmatpush1.msra.mxu0 0.0
  %212 = vmatprep.subr.mxu0 0.0
  %213 = vmatpush1.msra.mxu0 0.0
  %214 = vmatprep.subr.mxu0 0.0
  %215 = vmatpush1.msra.mxu0 0.0
  %216 = vmatprep.subr.mxu0 0.0
  %217 = vmatpush1.msra.mxu0 0.0
  %218 = vmatprep.subr.mxu0 0.0
  %219 = vmatpush1.msra.mxu0 0.0
  %220 = vmatprep.subr.mxu0 0.0
  %221 = vmatpush1.msra.mxu0 0.0
  %222 = vmatprep.subr.mxu0 0.0
  %223 = vmatpush1.msra.mxu0 0.0
  %224 = vmatprep.subr.mxu0 0.0
  %225 = vmatpush1.msra.mxu0 0.0
  %226 = vmatprep.subr.mxu0 0.0
  %227 = vmatpush1.msra.mxu0 0.0
  %228 = vmatprep.subr.mxu0 0.0
  %229 = vmatpush1.msra.mxu0 0.0
  %230 = vmatprep.subr.mxu0 0.0
  %231 = vmatpush1.msra.mxu0 0.0
  %232 = vmatprep.subr.mxu0 0.0
  %233 = vmatpush1.msra.mxu0 0.0
  %234 = vmatprep.subr.mxu0 0.0
  %235 = vmatpush1.msra.mxu0 0.0
  %236 = vmatprep.subr.mxu0 0.0
  %237 = vmatpush1.msra.mxu0 0.0
  %238 = vmatprep.subr.mxu0 0.0
  %239 = vmatpush1.msra.mxu0 0.0
  %240 = vmatprep.subr.mxu0 0.0
  %241 = vmatpush1.msra.mxu0 0.0
  %242 = vmatprep.subr.mxu0 0.0
  %243 = vmatpush1.msra.mxu0 0.0
  %244 = vmatprep.mubr.f32.mxu0 0.0
  %245 = vmatmul.mubr.f32.gmra.mrb[0].mxu0 %v169
  %v246 = vpop.f32.mrb[0].mxu0
  %v247 = vadd.f32 0.0, %v246
  %v248 = vpop.f32.mrb[0].mxu0
  %v249 = vadd.f32 0.0, %v248
  %250 = vmatprep.mubr.f32.mxu0 0.0
  %251 = vmatmul.mubr.f32.gmra.mrb[0].mxu0 %v172
  %v252 = vpop.f32.mrb[0].mxu0
  %v253 = vadd.f32 0.0, %v252
  %v254 = vpop.f32.mrb[0].mxu0
  %v255 = vadd.f32 0.0, %v254
  %256 = vmatprep.mubr.f32.mxu0 0.0
  %257 = vmatmul.mubr.f32.gmra.mrb[0].mxu0 %v175
  %v258 = vpop.f32.mrb[0].mxu0
  %v259 = vadd.f32 0.0, %v258
  %v260 = vpop.f32.mrb[0].mxu0
  %v261 = vadd.f32 0.0, %v260
  %262 = vmatprep.mubr.f32.mxu0 0.0
  %263 = vmatmul.mubr.f32.gmra.mrb[0].mxu0 %v178
  %v264 = vpop.f32.mrb[0].mxu0
  %v265 = vadd.f32 0.0, %v264
  %v266 = vpop.f32.mrb[0].mxu0
  %v267 = vadd.f32 0.0, %v266
  %268 = vdwg.mxu0
  %v270 = vsel %vm167, %v41, 0
  %v273 = vsel %vm167, %v42, 0
  %v276 = vsel %vm167, %v43, 0
  %v279 = vsel %vm167, %v44, 0
  %281 = vmatprep.subr.mxu0 %v158
  %282 = vmatpush1.msra.mxu0 %v157
  %283 = vmatprep.subr.mxu0 0.0
  %284 = vmatpush1.msra.mxu0 0.0
  %285 = vmatprep.subr.mxu0 0.0
  %286 = vmatpush1.msra.mxu0 0.0
  %287 = vmatprep.subr.mxu0 0.0
  %288 = vmatpush1.msra.mxu0 0.0
  %289 = vmatprep.subr.mxu0 0.0
  %290 = vmatpush1.msra.mxu0 0.0
  %291 = vmatprep.subr.mxu0 0.0
  %292 = vmatpush1.msra.mxu0 0.0
  %293 = vmatprep.subr.mxu0 0.0
  %294 = vmatpush1.msra.mxu0 0.0
  %295 = vmatprep.subr.mxu0 0.0
  %296 = vmatpush1.msra.mxu0 0.0
  %297 = vmatprep.subr.mxu0 0.0
  %298 = vmatpush1.msra.mxu0 0.0
  %299 = vmatprep.subr.mxu0 0.0
  %300 = vmatpush1.msra.mxu0 0.0
  %301 = vmatprep.subr.mxu0 0.0
  %302 = vmatpush1.msra.mxu0 0.0
  %303 = vmatprep.subr.mxu0 0.0
  %304 = vmatpush1.msra.mxu0 0.0
  %305 = vmatprep.subr.mxu0 0.0
  %306 = vmatpush1.msra.mxu0 0.0
  %307 = vmatprep.subr.mxu0 0.0
  %308 = vmatpush1.msra.mxu0 0.0
  %309 = vmatprep.subr.mxu0 0.0
  %310 = vmatpush1.msra.mxu0 0.0
  %311 = vmatprep.subr.mxu0 0.0
  %312 = vmatpush1.msra.mxu0 0.0
  %313 = vmatprep.subr.mxu0 0.0
  %314 = vmatpush1.msra.mxu0 0.0
  %315 = vmatprep.subr.mxu0 0.0
  %316 = vmatpush1.msra.mxu0 0.0
  %317 = vmatprep.subr.mxu0 0.0
  %318 = vmatpush1.msra.mxu0 0.0
  %319 = vmatprep.subr.mxu0 0.0
  %320 = vmatpush1.msra.mxu0 0.0
  %321 = vmatprep.subr.mxu0 0.0
  %322 = vmatpush1.msra.mxu0 0.0
  %323 = vmatprep.subr.mxu0 0.0
  %324 = vmatpush1.msra.mxu0 0.0
  %325 = vmatprep.subr.mxu0 0.0
  %326 = vmatpush1.msra.mxu0 0.0
  %327 = vmatprep.subr.mxu0 0.0
  %328 = vmatpush1.msra.mxu0 0.0
  %329 = vmatprep.subr.mxu0 0.0
  %330 = vmatpush1.msra.mxu0 0.0
  %331 = vmatprep.subr.mxu0 0.0
  %332 = vmatpush1.msra.mxu0 0.0
  %333 = vmatprep.subr.mxu0 0.0
  %334 = vmatpush1.msra.mxu0 0.0
  %335 = vmatprep.subr.mxu0 0.0
  %336 = vmatpush1.msra.mxu0 0.0
  %337 = vmatprep.subr.mxu0 0.0
  %338 = vmatpush1.msra.mxu0 0.0
  %339 = vmatprep.subr.mxu0 0.0
  %340 = vmatpush1.msra.mxu0 0.0
  %341 = vmatprep.subr.mxu0 0.0
  %342 = vmatpush1.msra.mxu0 0.0
  %343 = vmatprep.subr.mxu0 0.0
  %344 = vmatpush1.msra.mxu0 0.0
  %345 = vmatprep.mubr.f32.mxu0 0.0
  %346 = vmatmul.mubr.f32.gmra.mrb[0].mxu0 %v270
  %v347 = vpop.f32.mrb[0].mxu0
  %v348 = vadd.f32 %v247, %v347
  %v349 = vpop.f32.mrb[0].mxu0
  %v350 = vadd.f32 %v249, %v349
  %351 = vmatprep.mubr.f32.mxu0 0.0
  %352 = vmatmul.mubr.f32.gmra.mrb[0].mxu0 %v273
  %v353 = vpop.f32.mrb[0].mxu0
  %v354 = vadd.f32 %v253, %v353
  %v355 = vpop.f32.mrb[0].mxu0
  %v356 = vadd.f32 %v255, %v355
  %357 = vmatprep.mubr.f32.mxu0 0.0
  %358 = vmatmul.mubr.f32.gmra.mrb[0].mxu0 %v276
  %v359 = vpop.f32.mrb[0].mxu0
  %v360 = vadd.f32 %v259, %v359
  %v361 = vpop.f32.mrb[0].mxu0
  %v362 = vadd.f32 %v261, %v361
  %363 = vmatprep.mubr.f32.mxu0 0.0
  %364 = vmatmul.mubr.f32.gmra.mrb[0].mxu0 %v279
  %v365 = vpop.f32.mrb[0].mxu0
  %v366 = vadd.f32 %v265, %v365
  %v367 = vpop.f32.mrb[0].mxu0
  %v368 = vadd.f32 %v267, %v367
  %369 = vdwg.mxu0
  %370 = vrot.lane.b32.xlu0 %v133, 16
  %v371 = vpop.permute.xlu0 %370
  %372 = vrot.lane.b32.xlu0 %v134, 16
  %v373 = vpop.permute.xlu0 %372
  %vm374 = vcmp.lt.s32.totalorder %v142, 16
  %v375 = vsel %vm374, %v371, %v373
  %v376 = vsel %vm374, %v373, %v371
  %v377 = vsel %vm33, 1, 0
  %v378 = vlaneseq
  %v379 = vshrl.u32 %v378, 7
  %v380 = vsub.s32 0, %v379
  %v381 = vrot.slane %v377, %v380
  %v382 = vlaneseq
  %v383 = vshrl.u32 %v382, 7
  %v384 = vsub.s32 1, %v383
  %v385 = vrot.slane %v377, %v384
  %vm386 = vcmp.eq.s32.totalorder %v381, 1
  %vm387 = vcmp.eq.s32.totalorder %v385, 1
  %v388 = vsel %vm386, %v376, 0.0
  %v389 = vsel %vm387, %v375, 0.0
  %v391 = vsel %vm167, %v46, 0
  %v394 = vsel %vm167, %v47, 0
  %v397 = vsel %vm167, %v48, 0
  %v400 = vsel %vm167, %v49, 0
  %402 = vmatprep.subr.mxu0 %v389
  %403 = vmatpush1.msra.mxu0 %v388
  %404 = vmatprep.subr.mxu0 0.0
  %405 = vmatpush1.msra.mxu0 0.0
  %406 = vmatprep.subr.mxu0 0.0
  %407 = vmatpush1.msra.mxu0 0.0
  %408 = vmatprep.subr.mxu0 0.0
  %409 = vmatpush1.msra.mxu0 0.0
  %410 = vmatprep.subr.mxu0 0.0
  %411 = vmatpush1.msra.mxu0 0.0
  %412 = vmatprep.subr.mxu0 0.0
  %413 = vmatpush1.msra.mxu0 0.0
  %414 = vmatprep.subr.mxu0 0.0
  %415 = vmatpush1.msra.mxu0 0.0
  %416 = vmatprep.subr.mxu0 0.0
  %417 = vmatpush1.msra.mxu0 0.0
  %418 = vmatprep.subr.mxu0 0.0
  %419 = vmatpush1.msra.mxu0 0.0
  %420 = vmatprep.subr.mxu0 0.0
  %421 = vmatpush1.msra.mxu0 0.0
  %422 = vmatprep.subr.mxu0 0.0
  %423 = vmatpush1.msra.mxu0 0.0
  %424 = vmatprep.subr.mxu0 0.0
  %425 = vmatpush1.msra.mxu0 0.0
  %426 = vmatprep.subr.mxu0 0.0
  %427 = vmatpush1.msra.mxu0 0.0
  %428 = vmatprep.subr.mxu0 0.0
  %429 = vmatpush1.msra.mxu0 0.0
  %430 = vmatprep.subr.mxu0 0.0
  %431 = vmatpush1.msra.mxu0 0.0
  %432 = vmatprep.subr.mxu0 0.0
  %433 = vmatpush1.msra.mxu0 0.0
  %434 = vmatprep.subr.mxu0 0.0
  %435 = vmatpush1.msra.mxu0 0.0
  %436 = vmatprep.subr.mxu0 0.0
  %437 = vmatpush1.msra.mxu0 0.0
  %438 = vmatprep.subr.mxu0 0.0
  %439 = vmatpush1.msra.mxu0 0.0
  %440 = vmatprep.subr.mxu0 0.0
  %441 = vmatpush1.msra.mxu0 0.0
  %442 = vmatprep.subr.mxu0 0.0
  %443 = vmatpush1.msra.mxu0 0.0
  %444 = vmatprep.subr.mxu0 0.0
  %445 = vmatpush1.msra.mxu0 0.0
  %446 = vmatprep.subr.mxu0 0.0
  %447 = vmatpush1.msra.mxu0 0.0
  %448 = vmatprep.subr.mxu0 0.0
  %449 = vmatpush1.msra.mxu0 0.0
  %450 = vmatprep.subr.mxu0 0.0
  %451 = vmatpush1.msra.mxu0 0.0
  %452 = vmatprep.subr.mxu0 0.0
  %453 = vmatpush1.msra.mxu0 0.0
  %454 = vmatprep.subr.mxu0 0.0
  %455 = vmatpush1.msra.mxu0 0.0
  %456 = vmatprep.subr.mxu0 0.0
  %457 = vmatpush1.msra.mxu0 0.0
  %458 = vmatprep.subr.mxu0 0.0
  %459 = vmatpush1.msra.mxu0 0.0
  %460 = vmatprep.subr.mxu0 0.0
  %461 = vmatpush1.msra.mxu0 0.0
  %462 = vmatprep.subr.mxu0 0.0
  %463 = vmatpush1.msra.mxu0 0.0
  %464 = vmatprep.subr.mxu0 0.0
  %465 = vmatpush1.msra.mxu0 0.0
  %466 = vmatprep.mubr.f32.mxu0 0.0
  %467 = vmatmul.mubr.f32.gmra.mrb[0].mxu0 %v391
  %v468 = vpop.f32.mrb[0].mxu0
  %v469 = vadd.f32 0.0, %v468
  %v470 = vpop.f32.mrb[0].mxu0
  %v471 = vadd.f32 0.0, %v470
  %472 = vmatprep.mubr.f32.mxu0 0.0
  %473 = vmatmul.mubr.f32.gmra.mrb[0].mxu0 %v394
  %v474 = vpop.f32.mrb[0].mxu0
  %v475 = vadd.f32 0.0, %v474
  %v476 = vpop.f32.mrb[0].mxu0
  %v477 = vadd.f32 0.0, %v476
  %478 = vmatprep.mubr.f32.mxu0 0.0
  %479 = vmatmul.mubr.f32.gmra.mrb[0].mxu0 %v397
  %v480 = vpop.f32.mrb[0].mxu0
  %v481 = vadd.f32 0.0, %v480
  %v482 = vpop.f32.mrb[0].mxu0
  %v483 = vadd.f32 0.0, %v482
  %484 = vmatprep.mubr.f32.mxu0 0.0
  %485 = vmatmul.mubr.f32.gmra.mrb[0].mxu0 %v400
  %v486 = vpop.f32.mrb[0].mxu0
  %v487 = vadd.f32 0.0, %v486
  %v488 = vpop.f32.mrb[0].mxu0
  %v489 = vadd.f32 0.0, %v488
  %490 = vdwg.mxu0
  %v491 = vadd.f32 %v348, %v469
  %v492 = vadd.f32 %v350, %v471
  %v493 = vadd.f32 %v354, %v475
  %v494 = vadd.f32 %v356, %v477
  %v495 = vadd.f32 %v360, %v481
  %v496 = vadd.f32 %v362, %v483
  %v497 = vadd.f32 %v366, %v487
  %v498 = vadd.f32 %v368, %v489
  %499 = vrot.lane.b32.xlu0 %v135, 16
  %v500 = vpop.permute.xlu0 %499
  %501 = vrot.lane.b32.xlu0 %v136, 16
  %v502 = vpop.permute.xlu0 %501
  %v503 = vsel %vm374, %v500, %v502
  %v504 = vsel %vm374, %v502, %v500
  %v505 = vsel %vm386, %v504, 0.0
  %v506 = vsel %vm387, %v503, 0.0
  %v508 = vsel %vm167, %v90, 0
  %v511 = vsel %vm167, %v91, 0
  %v514 = vsel %vm167, %v92, 0
  %v517 = vsel %vm167, %v93, 0
  %519 = vmatprep.subr.mxu0 %v506
  %520 = vmatpush1.msra.mxu0 %v505
  %521 = vmatprep.subr.mxu0 0.0
  %522 = vmatpush1.msra.mxu0 0.0
  %523 = vmatprep.subr.mxu0 0.0
  %524 = vmatpush1.msra.mxu0 0.0
  %525 = vmatprep.subr.mxu0 0.0
  %526 = vmatpush1.msra.mxu0 0.0
  %527 = vmatprep.subr.mxu0 0.0
  %528 = vmatpush1.msra.mxu0 0.0
  %529 = vmatprep.subr.mxu0 0.0
  %530 = vmatpush1.msra.mxu0 0.0
  %531 = vmatprep.subr.mxu0 0.0
  %532 = vmatpush1.msra.mxu0 0.0
  %533 = vmatprep.subr.mxu0 0.0
  %534 = vmatpush1.msra.mxu0 0.0
  %535 = vmatprep.subr.mxu0 0.0
  %536 = vmatpush1.msra.mxu0 0.0
  %537 = vmatprep.subr.mxu0 0.0
  %538 = vmatpush1.msra.mxu0 0.0
  %539 = vmatprep.subr.mxu0 0.0
  %540 = vmatpush1.msra.mxu0 0.0
  %541 = vmatprep.subr.mxu0 0.0
  %542 = vmatpush1.msra.mxu0 0.0
  %543 = vmatprep.subr.mxu0 0.0
  %544 = vmatpush1.msra.mxu0 0.0
  %545 = vmatprep.subr.mxu0 0.0
  %546 = vmatpush1.msra.mxu0 0.0
  %547 = vmatprep.subr.mxu0 0.0
  %548 = vmatpush1.msra.mxu0 0.0
  %549 = vmatprep.subr.mxu0 0.0
  %550 = vmatpush1.msra.mxu0 0.0
  %551 = vmatprep.subr.mxu0 0.0
  %552 = vmatpush1.msra.mxu0 0.0
  %553 = vmatprep.subr.mxu0 0.0
  %554 = vmatpush1.msra.mxu0 0.0
  %555 = vmatprep.subr.mxu0 0.0
  %556 = vmatpush1.msra.mxu0 0.0
  %557 = vmatprep.subr.mxu0 0.0
  %558 = vmatpush1.msra.mxu0 0.0
  %559 = vmatprep.subr.mxu0 0.0
  %560 = vmatpush1.msra.mxu0 0.0
  %561 = vmatprep.subr.mxu0 0.0
  %562 = vmatpush1.msra.mxu0 0.0
  %563 = vmatprep.subr.mxu0 0.0
  %564 = vmatpush1.msra.mxu0 0.0
  %565 = vmatprep.subr.mxu0 0.0
  %566 = vmatpush1.msra.mxu0 0.0
  %567 = vmatprep.subr.mxu0 0.0
  %568 = vmatpush1.msra.mxu0 0.0
  %569 = vmatprep.subr.mxu0 0.0
  %570 = vmatpush1.msra.mxu0 0.0
  %571 = vmatprep.subr.mxu0 0.0
  %572 = vmatpush1.msra.mxu0 0.0
  %573 = vmatprep.subr.mxu0 0.0
  %574 = vmatpush1.msra.mxu0 0.0
  %575 = vmatprep.subr.mxu0 0.0
  %576 = vmatpush1.msra.mxu0 0.0
  %577 = vmatprep.subr.mxu0 0.0
  %578 = vmatpush1.msra.mxu0 0.0
  %579 = vmatprep.subr.mxu0 0.0
  %580 = vmatpush1.msra.mxu0 0.0
  %581 = vmatprep.subr.mxu0 0.0
  %582 = vmatpush1.msra.mxu0 0.0
  %583 = vmatprep.mubr.f32.mxu0 0.0
  %584 = vmatmul.mubr.f32.gmra.mrb[0].mxu0 %v508
  %v585 = vpop.f32.mrb[0].mxu0
  %v586 = vadd.f32 0.0, %v585
  %v587 = vpop.f32.mrb[0].mxu0
  %v588 = vadd.f32 0.0, %v587
  %589 = vmatprep.mubr.f32.mxu0 0.0
  %590 = vmatmul.mubr.f32.gmra.mrb[0].mxu0 %v511
  %v591 = vpop.f32.mrb[0].mxu0
  %v592 = vadd.f32 0.0, %v591
  %v593 = vpop.f32.mrb[0].mxu0
  %v594 = vadd.f32 0.0, %v593
  %595 = vmatprep.mubr.f32.mxu0 0.0
  %596 = vmatmul.mubr.f32.gmra.mrb[0].mxu0 %v514
  %v597 = vpop.f32.mrb[0].mxu0
  %v598 = vadd.f32 0.0, %v597
  %v599 = vpop.f32.mrb[0].mxu0
  %v600 = vadd.f32 0.0, %v599
  %601 = vmatprep.mubr.f32.mxu0 0.0
  %602 = vmatmul.mubr.f32.gmra.mrb[0].mxu0 %v517
  %v603 = vpop.f32.mrb[0].mxu0
  %v604 = vadd.f32 0.0, %v603
  %v605 = vpop.f32.mrb[0].mxu0
  %v606 = vadd.f32 0.0, %v605
  %607 = vdwg.mxu0
  %v608 = vadd.f32 %v491, %v586
  %v609 = vadd.f32 %v492, %v588
  %v610 = vadd.f32 %v493, %v592
  %v611 = vadd.f32 %v494, %v594
  %v612 = vadd.f32 %v495, %v598
  %v613 = vadd.f32 %v496, %v600
  %v614 = vadd.f32 %v497, %v604
  %v615 = vadd.f32 %v498, %v606
  %616 = vrot.lane.b32.xlu0 %v133, 15
  %v617 = vpop.permute.xlu0 %616
  %618 = vrot.lane.b32.xlu0 %v134, 15
  %v619 = vpop.permute.xlu0 %618
  %vm620 = vcmp.lt.s32.totalorder %v142, 15
  %v621 = vsel %vm620, %v617, %v619
  %v622 = vsel %vm620, %v619, %v617
  %v623 = vsel %vm37, 1, 0
  %v624 = vlaneseq
  %v625 = vshrl.u32 %v624, 7
  %v626 = vsub.s32 0, %v625
  %v627 = vrot.slane %v623, %v626
  %v628 = vlaneseq
  %v629 = vshrl.u32 %v628, 7
  %v630 = vsub.s32 1, %v629
  %v631 = vrot.slane %v623, %v630
  %vm632 = vcmp.eq.s32.totalorder %v627, 1
  %vm633 = vcmp.eq.s32.totalorder %v631, 1
  %v634 = vsel %vm632, %v622, 0.0
  %v635 = vsel %vm633, %v621, 0.0
  %v637 = vsel %vm167, %v51, 0
  %v640 = vsel %vm167, %v52, 0
  %v643 = vsel %vm167, %v53, 0
  %v646 = vsel %vm167, %v54, 0
  %648 = vmatprep.subr.mxu0 %v635
  %649 = vmatpush1.msra.mxu0 %v634
  %650 = vmatprep.subr.mxu0 0.0
  %651 = vmatpush1.msra.mxu0 0.0
  %652 = vmatprep.subr.mxu0 0.0
  %653 = vmatpush1.msra.mxu0 0.0
  %654 = vmatprep.subr.mxu0 0.0
  %655 = vmatpush1.msra.mxu0 0.0
  %656 = vmatprep.subr.mxu0 0.0
  %657 = vmatpush1.msra.mxu0 0.0
  %658 = vmatprep.subr.mxu0 0.0
  %659 = vmatpush1.msra.mxu0 0.0
  %660 = vmatprep.subr.mxu0 0.0
  %661 = vmatpush1.msra.mxu0 0.0
  %662 = vmatprep.subr.mxu0 0.0
  %663 = vmatpush1.msra.mxu0 0.0
  %664 = vmatprep.subr.mxu0 0.0
  %665 = vmatpush1.msra.mxu0 0.0
  %666 = vmatprep.subr.mxu0 0.0
  %667 = vmatpush1.msra.mxu0 0.0
  %668 = vmatprep.subr.mxu0 0.0
  %669 = vmatpush1.msra.mxu0 0.0
  %670 = vmatprep.subr.mxu0 0.0
  %671 = vmatpush1.msra.mxu0 0.0
  %672 = vmatprep.subr.mxu0 0.0
  %673 = vmatpush1.msra.mxu0 0.0
  %674 = vmatprep.subr.mxu0 0.0
  %675 = vmatpush1.msra.mxu0 0.0
  %676 = vmatprep.subr.mxu0 0.0
  %677 = vmatpush1.msra.mxu0 0.0
  %678 = vmatprep.subr.mxu0 0.0
  %679 = vmatpush1.msra.mxu0 0.0
  %680 = vmatprep.subr.mxu0 0.0
  %681 = vmatpush1.msra.mxu0 0.0
  %682 = vmatprep.subr.mxu0 0.0
  %683 = vmatpush1.msra.mxu0 0.0
  %684 = vmatprep.subr.mxu0 0.0
  %685 = vmatpush1.msra.mxu0 0.0
  %686 = vmatprep.subr.mxu0 0.0
  %687 = vmatpush1.msra.mxu0 0.0
  %688 = vmatprep.subr.mxu0 0.0
  %689 = vmatpush1.msra.mxu0 0.0
  %690 = vmatprep.subr.mxu0 0.0
  %691 = vmatpush1.msra.mxu0 0.0
  %692 = vmatprep.subr.mxu0 0.0
  %693 = vmatpush1.msra.mxu0 0.0
  %694 = vmatprep.subr.mxu0 0.0
  %695 = vmatpush1.msra.mxu0 0.0
  %696 = vmatprep.subr.mxu0 0.0
  %697 = vmatpush1.msra.mxu0 0.0
  %698 = vmatprep.subr.mxu0 0.0
  %699 = vmatpush1.msra.mxu0 0.0
  %700 = vmatprep.subr.mxu0 0.0
  %701 = vmatpush1.msra.mxu0 0.0
  %702 = vmatprep.subr.mxu0 0.0
  %703 = vmatpush1.msra.mxu0 0.0
  %704 = vmatprep.subr.mxu0 0.0
  %705 = vmatpush1.msra.mxu0 0.0
  %706 = vmatprep.subr.mxu0 0.0
  %707 = vmatpush1.msra.mxu0 0.0
  %708 = vmatprep.subr.mxu0 0.0
  %709 = vmatpush1.msra.mxu0 0.0
  %710 = vmatprep.subr.mxu0 0.0
  %711 = vmatpush1.msra.mxu0 0.0
  %712 = vmatprep.mubr.f32.mxu0 0.0
  %713 = vmatmul.mubr.f32.gmra.mrb[0].mxu0 %v637
  %v714 = vpop.f32.mrb[0].mxu0
  %v715 = vadd.f32 0.0, %v714
  %v716 = vpop.f32.mrb[0].mxu0
  %v717 = vadd.f32 0.0, %v716
  %718 = vmatprep.mubr.f32.mxu0 0.0
  %719 = vmatmul.mubr.f32.gmra.mrb[0].mxu0 %v640
  %v720 = vpop.f32.mrb[0].mxu0
  %v721 = vadd.f32 0.0, %v720
  %v722 = vpop.f32.mrb[0].mxu0
  %v723 = vadd.f32 0.0, %v722
  %724 = vmatprep.mubr.f32.mxu0 0.0
  %725 = vmatmul.mubr.f32.gmra.mrb[0].mxu0 %v643
  %v726 = vpop.f32.mrb[0].mxu0
  %v727 = vadd.f32 0.0, %v726
  %v728 = vpop.f32.mrb[0].mxu0
  %v729 = vadd.f32 0.0, %v728
  %730 = vmatprep.mubr.f32.mxu0 0.0
  %731 = vmatmul.mubr.f32.gmra.mrb[0].mxu0 %v646
  %v732 = vpop.f32.mrb[0].mxu0
  %v733 = vadd.f32 0.0, %v732
  %v734 = vpop.f32.mrb[0].mxu0
  %v735 = vadd.f32 0.0, %v734
  %736 = vdwg.mxu0
  %v737 = vadd.f32 %v608, %v715
  %v738 = vadd.f32 %v609, %v717
  %v739 = vadd.f32 %v610, %v721
  %v740 = vadd.f32 %v611, %v723
  %v741 = vadd.f32 %v612, %v727
  %v742 = vadd.f32 %v613, %v729
  %v743 = vadd.f32 %v614, %v733
  %v744 = vadd.f32 %v615, %v735
  %745 = vrot.lane.b32.xlu0 %v135, 15
  %v746 = vpop.permute.xlu0 %745
  %747 = vrot.lane.b32.xlu0 %v136, 15
  %v748 = vpop.permute.xlu0 %747
  %v749 = vsel %vm620, %v746, %v748
  %v750 = vsel %vm620, %v748, %v746
  %v751 = vsel %vm632, %v750, 0.0
  %v752 = vsel %vm633, %v749, 0.0
  %v754 = vsel %vm167, %v95, 0
  %v757 = vsel %vm167, %v96, 0
  %v760 = vsel %vm167, %v97, 0
  %v763 = vsel %vm167, %v98, 0
  %765 = vmatprep.subr.mxu0 %v752
  %766 = vmatpush1.msra.mxu0 %v751
  %767 = vmatprep.subr.mxu0 0.0
  %768 = vmatpush1.msra.mxu0 0.0
  %769 = vmatprep.subr.mxu0 0.0
  %770 = vmatpush1.msra.mxu0 0.0
  %771 = vmatprep.subr.mxu0 0.0
  %772 = vmatpush1.msra.mxu0 0.0
  %773 = vmatprep.subr.mxu0 0.0
  %774 = vmatpush1.msra.mxu0 0.0
  %775 = vmatprep.subr.mxu0 0.0
  %776 = vmatpush1.msra.mxu0 0.0
  %777 = vmatprep.subr.mxu0 0.0
  %778 = vmatpush1.msra.mxu0 0.0
  %779 = vmatprep.subr.mxu0 0.0
  %780 = vmatpush1.msra.mxu0 0.0
  %781 = vmatprep.subr.mxu0 0.0
  %782 = vmatpush1.msra.mxu0 0.0
  %783 = vmatprep.subr.mxu0 0.0
  %784 = vmatpush1.msra.mxu0 0.0
  %785 = vmatprep.subr.mxu0 0.0
  %786 = vmatpush1.msra.mxu0 0.0
  %787 = vmatprep.subr.mxu0 0.0
  %788 = vmatpush1.msra.mxu0 0.0
  %789 = vmatprep.subr.mxu0 0.0
  %790 = vmatpush1.msra.mxu0 0.0
  %791 = vmatprep.subr.mxu0 0.0
  %792 = vmatpush1.msra.mxu0 0.0
  %793 = vmatprep.subr.mxu0 0.0
  %794 = vmatpush1.msra.mxu0 0.0
  %795 = vmatprep.subr.mxu0 0.0
  %796 = vmatpush1.msra.mxu0 0.0
  %797 = vmatprep.subr.mxu0 0.0
  %798 = vmatpush1.msra.mxu0 0.0
  %799 = vmatprep.subr.mxu0 0.0
  %800 = vmatpush1.msra.mxu0 0.0
  %801 = vmatprep.subr.mxu0 0.0
  %802 = vmatpush1.msra.mxu0 0.0
  %803 = vmatprep.subr.mxu0 0.0
  %804 = vmatpush1.msra.mxu0 0.0
  %805 = vmatprep.subr.mxu0 0.0
  %806 = vmatpush1.msra.mxu0 0.0
  %807 = vmatprep.subr.mxu0 0.0
  %808 = vmatpush1.msra.mxu0 0.0
  %809 = vmatprep.subr.mxu0 0.0
  %810 = vmatpush1.msra.mxu0 0.0
  %811 = vmatprep.subr.mxu0 0.0
  %812 = vmatpush1.msra.mxu0 0.0
  %813 = vmatprep.subr.mxu0 0.0
  %814 = vmatpush1.msra.mxu0 0.0
  %815 = vmatprep.subr.mxu0 0.0
  %816 = vmatpush1.msra.mxu0 0.0
  %817 = vmatprep.subr.mxu0 0.0
  %818 = vmatpush1.msra.mxu0 0.0
  %819 = vmatprep.subr.mxu0 0.0
  %820 = vmatpush1.msra.mxu0 0.0
  %821 = vmatprep.subr.mxu0 0.0
  %822 = vmatpush1.msra.mxu0 0.0
  %823 = vmatprep.subr.mxu0 0.0
  %824 = vmatpush1.msra.mxu0 0.0
  %825 = vmatprep.subr.mxu0 0.0
  %826 = vmatpush1.msra.mxu0 0.0
  %827 = vmatprep.subr.mxu0 0.0
  %828 = vmatpush1.msra.mxu0 0.0
  %829 = vmatprep.mubr.f32.mxu0 0.0
  %830 = vmatmul.mubr.f32.gmra.mrb[0].mxu0 %v754
  %v831 = vpop.f32.mrb[0].mxu0
  %v832 = vadd.f32 0.0, %v831
  %v833 = vpop.f32.mrb[0].mxu0
  %v834 = vadd.f32 0.0, %v833
  %835 = vmatprep.mubr.f32.mxu0 0.0
  %836 = vmatmul.mubr.f32.gmra.mrb[0].mxu0 %v757
  %v837 = vpop.f32.mrb[0].mxu0
  %v838 = vadd.f32 0.0, %v837
  %v839 = vpop.f32.mrb[0].mxu0
  %v840 = vadd.f32 0.0, %v839
  %841 = vmatprep.mubr.f32.mxu0 0.0
  %842 = vmatmul.mubr.f32.gmra.mrb[0].mxu0 %v760
  %v843 = vpop.f32.mrb[0].mxu0
  %v844 = vadd.f32 0.0, %v843
  %v845 = vpop.f32.mrb[0].mxu0
  %v846 = vadd.f32 0.0, %v845
  %847 = vmatprep.mubr.f32.mxu0 0.0
  %848 = vmatmul.mubr.f32.gmra.mrb[0].mxu0 %v763
  %v849 = vpop.f32.mrb[0].mxu0
  %v850 = vadd.f32 0.0, %v849
  %v851 = vpop.f32.mrb[0].mxu0
  %v852 = vadd.f32 0.0, %v851
  %853 = vdwg.mxu0
  %v854 = vadd.f32 %v737, %v832
  %v855 = vadd.f32 %v738, %v834
  %v856 = vadd.f32 %v739, %v838
  %v857 = vadd.f32 %v740, %v840
  %v858 = vadd.f32 %v741, %v844
  %v859 = vadd.f32 %v742, %v846
  %v860 = vadd.f32 %v743, %v850
  %v861 = vadd.f32 %v744, %v852
  %862 = vrot.lane.b32.xlu0 %v133, 1
  %v863 = vpop.permute.xlu0 %862
  %864 = vrot.lane.b32.xlu0 %v134, 1
  %v865 = vpop.permute.xlu0 %864
  %vm866 = vcmp.lt.s32.totalorder %v142, 1
  %v867 = vsel %vm866, %v863, %v865
  %v868 = vsel %vm866, %v865, %v863
  %v869 = vsel %vm34, 1, 0
  %v870 = vlaneseq
  %v871 = vshrl.u32 %v870, 7
  %v872 = vsub.s32 0, %v871
  %v873 = vrot.slane %v869, %v872
  %v874 = vlaneseq
  %v875 = vshrl.u32 %v874, 7
  %v876 = vsub.s32 1, %v875
  %v877 = vrot.slane %v869, %v876
  %vm878 = vcmp.eq.s32.totalorder %v873, 1
  %vm879 = vcmp.eq.s32.totalorder %v877, 1
  %v880 = vsel %vm878, %v868, 0.0
  %v881 = vsel %vm879, %v867, 0.0
  %v883 = vsel %vm167, %v56, 0
  %v886 = vsel %vm167, %v57, 0
  %v889 = vsel %vm167, %v58, 0
  %v892 = vsel %vm167, %v59, 0
  %894 = vmatprep.subr.mxu0 %v881
  %895 = vmatpush1.msra.mxu0 %v880
  %896 = vmatprep.subr.mxu0 0.0
  %897 = vmatpush1.msra.mxu0 0.0
  %898 = vmatprep.subr.mxu0 0.0
  %899 = vmatpush1.msra.mxu0 0.0
  %900 = vmatprep.subr.mxu0 0.0
  %901 = vmatpush1.msra.mxu0 0.0
  %902 = vmatprep.subr.mxu0 0.0
  %903 = vmatpush1.msra.mxu0 0.0
  %904 = vmatprep.subr.mxu0 0.0
  %905 = vmatpush1.msra.mxu0 0.0
  %906 = vmatprep.subr.mxu0 0.0
  %907 = vmatpush1.msra.mxu0 0.0
  %908 = vmatprep.subr.mxu0 0.0
  %909 = vmatpush1.msra.mxu0 0.0
  %910 = vmatprep.subr.mxu0 0.0
  %911 = vmatpush1.msra.mxu0 0.0
  %912 = vmatprep.subr.mxu0 0.0
  %913 = vmatpush1.msra.mxu0 0.0
  %914 = vmatprep.subr.mxu0 0.0
  %915 = vmatpush1.msra.mxu0 0.0
  %916 = vmatprep.subr.mxu0 0.0
  %917 = vmatpush1.msra.mxu0 0.0
  %918 = vmatprep.subr.mxu0 0.0
  %919 = vmatpush1.msra.mxu0 0.0
  %920 = vmatprep.subr.mxu0 0.0
  %921 = vmatpush1.msra.mxu0 0.0
  %922 = vmatprep.subr.mxu0 0.0
  %923 = vmatpush1.msra.mxu0 0.0
  %924 = vmatprep.subr.mxu0 0.0
  %925 = vmatpush1.msra.mxu0 0.0
  %926 = vmatprep.subr.mxu0 0.0
  %927 = vmatpush1.msra.mxu0 0.0
  %928 = vmatprep.subr.mxu0 0.0
  %929 = vmatpush1.msra.mxu0 0.0
  %930 = vmatprep.subr.mxu0 0.0
  %931 = vmatpush1.msra.mxu0 0.0
  %932 = vmatprep.subr.mxu0 0.0
  %933 = vmatpush1.msra.mxu0 0.0
  %934 = vmatprep.subr.mxu0 0.0
  %935 = vmatpush1.msra.mxu0 0.0
  %936 = vmatprep.subr.mxu0 0.0
  %937 = vmatpush1.msra.mxu0 0.0
  %938 = vmatprep.subr.mxu0 0.0
  %939 = vmatpush1.msra.mxu0 0.0
  %940 = vmatprep.subr.mxu0 0.0
  %941 = vmatpush1.msra.mxu0 0.0
  %942 = vmatprep.subr.mxu0 0.0
  %943 = vmatpush1.msra.mxu0 0.0
  %944 = vmatprep.subr.mxu0 0.0
  %945 = vmatpush1.msra.mxu0 0.0
  %946 = vmatprep.subr.mxu0 0.0
  %947 = vmatpush1.msra.mxu0 0.0
  %948 = vmatprep.subr.mxu0 0.0
  %949 = vmatpush1.msra.mxu0 0.0
  %950 = vmatprep.subr.mxu0 0.0
  %951 = vmatpush1.msra.mxu0 0.0
  %952 = vmatprep.subr.mxu0 0.0
  %953 = vmatpush1.msra.mxu0 0.0
  %954 = vmatprep.subr.mxu0 0.0
  %955 = vmatpush1.msra.mxu0 0.0
  %956 = vmatprep.subr.mxu0 0.0
  %957 = vmatpush1.msra.mxu0 0.0
  %958 = vmatprep.mubr.f32.mxu0 0.0
  %959 = vmatmul.mubr.f32.gmra.mrb[0].mxu0 %v883
  %v960 = vpop.f32.mrb[0].mxu0
  %v961 = vadd.f32 0.0, %v960
  %v962 = vpop.f32.mrb[0].mxu0
  %v963 = vadd.f32 0.0, %v962
  %964 = vmatprep.mubr.f32.mxu0 0.0
  %965 = vmatmul.mubr.f32.gmra.mrb[0].mxu0 %v886
  %v966 = vpop.f32.mrb[0].mxu0
  %v967 = vadd.f32 0.0, %v966
  %v968 = vpop.f32.mrb[0].mxu0
  %v969 = vadd.f32 0.0, %v968
  %970 = vmatprep.mubr.f32.mxu0 0.0
  %971 = vmatmul.mubr.f32.gmra.mrb[0].mxu0 %v889
  %v972 = vpop.f32.mrb[0].mxu0
  %v973 = vadd.f32 0.0, %v972
  %v974 = vpop.f32.mrb[0].mxu0
  %v975 = vadd.f32 0.0, %v974
  %976 = vmatprep.mubr.f32.mxu0 0.0
  %977 = vmatmul.mubr.f32.gmra.mrb[0].mxu0 %v892
  %v978 = vpop.f32.mrb[0].mxu0
  %v979 = vadd.f32 0.0, %v978
  %v980 = vpop.f32.mrb[0].mxu0
  %v981 = vadd.f32 0.0, %v980
  %982 = vdwg.mxu0
  %v983 = vadd.f32 %v854, %v961
  %v984 = vadd.f32 %v855, %v963
  %v985 = vadd.f32 %v856, %v967
  %v986 = vadd.f32 %v857, %v969
  %v987 = vadd.f32 %v858, %v973
  %v988 = vadd.f32 %v859, %v975
  %v989 = vadd.f32 %v860, %v979
  %v990 = vadd.f32 %v861, %v981
  %991 = vrot.lane.b32.xlu0 %v135, 1
  %v992 = vpop.permute.xlu0 %991
  %993 = vrot.lane.b32.xlu0 %v136, 1
  %v994 = vpop.permute.xlu0 %993
  %v995 = vsel %vm866, %v992, %v994
  %v996 = vsel %vm866, %v994, %v992
  %v997 = vsel %vm878, %v996, 0.0
  %v998 = vsel %vm879, %v995, 0.0
  %v1000 = vsel %vm167, %v100, 0
  %v1003 = vsel %vm167, %v101, 0
  %v1006 = vsel %vm167, %v102, 0
  %v1009 = vsel %vm167, %v103, 0
  %1011 = vmatprep.subr.mxu0 %v998
  %1012 = vmatpush1.msra.mxu0 %v997
  %1013 = vmatprep.subr.mxu0 0.0
  %1014 = vmatpush1.msra.mxu0 0.0
  %1015 = vmatprep.subr.mxu0 0.0
  %1016 = vmatpush1.msra.mxu0 0.0
  %1017 = vmatprep.subr.mxu0 0.0
  %1018 = vmatpush1.msra.mxu0 0.0
  %1019 = vmatprep.subr.mxu0 0.0
  %1020 = vmatpush1.msra.mxu0 0.0
  %1021 = vmatprep.subr.mxu0 0.0
  %1022 = vmatpush1.msra.mxu0 0.0
  %1023 = vmatprep.subr.mxu0 0.0
  %1024 = vmatpush1.msra.mxu0 0.0
  %1025 = vmatprep.subr.mxu0 0.0
  %1026 = vmatpush1.msra.mxu0 0.0
  %1027 = vmatprep.subr.mxu0 0.0
  %1028 = vmatpush1.msra.mxu0 0.0
  %1029 = vmatprep.subr.mxu0 0.0
  %1030 = vmatpush1.msra.mxu0 0.0
  %1031 = vmatprep.subr.mxu0 0.0
  %1032 = vmatpush1.msra.mxu0 0.0
  %1033 = vmatprep.subr.mxu0 0.0
  %1034 = vmatpush1.msra.mxu0 0.0
  %1035 = vmatprep.subr.mxu0 0.0
  %1036 = vmatpush1.msra.mxu0 0.0
  %1037 = vmatprep.subr.mxu0 0.0
  %1038 = vmatpush1.msra.mxu0 0.0
  %1039 = vmatprep.subr.mxu0 0.0
  %1040 = vmatpush1.msra.mxu0 0.0
  %1041 = vmatprep.subr.mxu0 0.0
  %1042 = vmatpush1.msra.mxu0 0.0
  %1043 = vmatprep.subr.mxu0 0.0
  %1044 = vmatpush1.msra.mxu0 0.0
  %1045 = vmatprep.subr.mxu0 0.0
  %1046 = vmatpush1.msra.mxu0 0.0
  %1047 = vmatprep.subr.mxu0 0.0
  %1048 = vmatpush1.msra.mxu0 0.0
  %1049 = vmatprep.subr.mxu0 0.0
  %1050 = vmatpush1.msra.mxu0 0.0
  %1051 = vmatprep.subr.mxu0 0.0
  %1052 = vmatpush1.msra.mxu0 0.0
  %1053 = vmatprep.subr.mxu0 0.0
  %1054 = vmatpush1.msra.mxu0 0.0
  %1055 = vmatprep.subr.mxu0 0.0
  %1056 = vmatpush1.msra.mxu0 0.0
  %1057 = vmatprep.subr.mxu0 0.0
  %1058 = vmatpush1.msra.mxu0 0.0
  %1059 = vmatprep.subr.mxu0 0.0
  %1060 = vmatpush1.msra.mxu0 0.0
  %1061 = vmatprep.subr.mxu0 0.0
  %1062 = vmatpush1.msra.mxu0 0.0
  %1063 = vmatprep.subr.mxu0 0.0
  %1064 = vmatpush1.msra.mxu0 0.0
  %1065 = vmatprep.subr.mxu0 0.0
  %1066 = vmatpush1.msra.mxu0 0.0
  %1067 = vmatprep.subr.mxu0 0.0
  %1068 = vmatpush1.msra.mxu0 0.0
  %1069 = vmatprep.subr.mxu0 0.0
  %1070 = vmatpush1.msra.mxu0 0.0
  %1071 = vmatprep.subr.mxu0 0.0
  %1072 = vmatpush1.msra.mxu0 0.0
  %1073 = vmatprep.subr.mxu0 0.0
  %1074 = vmatpush1.msra.mxu0 0.0
  %1075 = vmatprep.mubr.f32.mxu0 0.0
  %1076 = vmatmul.mubr.f32.gmra.mrb[0].mxu0 %v1000
  %v1077 = vpop.f32.mrb[0].mxu0
  %v1078 = vadd.f32 0.0, %v1077
  %v1079 = vpop.f32.mrb[0].mxu0
  %v1080 = vadd.f32 0.0, %v1079
  %1081 = vmatprep.mubr.f32.mxu0 0.0
  %1082 = vmatmul.mubr.f32.gmra.mrb[0].mxu0 %v1003
  %v1083 = vpop.f32.mrb[0].mxu0
  %v1084 = vadd.f32 0.0, %v1083
  %v1085 = vpop.f32.mrb[0].mxu0
  %v1086 = vadd.f32 0.0, %v1085
  %1087 = vmatprep.mubr.f32.mxu0 0.0
  %1088 = vmatmul.mubr.f32.gmra.mrb[0].mxu0 %v1006
  %v1089 = vpop.f32.mrb[0].mxu0
  %v1090 = vadd.f32 0.0, %v1089
  %v1091 = vpop.f32.mrb[0].mxu0
  %v1092 = vadd.f32 0.0, %v1091
  %1093 = vmatprep.mubr.f32.mxu0 0.0
  %1094 = vmatmul.mubr.f32.gmra.mrb[0].mxu0 %v1009
  %v1095 = vpop.f32.mrb[0].mxu0
  %v1096 = vadd.f32 0.0, %v1095
  %v1097 = vpop.f32.mrb[0].mxu0
  %v1098 = vadd.f32 0.0, %v1097
  %1099 = vdwg.mxu0
  %v1100 = vadd.f32 %v983, %v1078
  %v1101 = vadd.f32 %v984, %v1080
  %v1102 = vadd.f32 %v985, %v1084
  %v1103 = vadd.f32 %v986, %v1086
  %v1104 = vadd.f32 %v987, %v1090
  %v1105 = vadd.f32 %v988, %v1092
  %v1106 = vadd.f32 %v989, %v1096
  %v1107 = vadd.f32 %v990, %v1098
  %v1109 = vsel %vm167, %v61, 0
  %v1112 = vsel %vm167, %v62, 0
  %v1115 = vsel %vm167, %v63, 0
  %v1118 = vsel %vm167, %v64, 0
  %1120 = vmatprep.subr.mxu0 %v134
  %1121 = vmatpush1.msra.mxu0 %v133
  %1122 = vmatprep.subr.mxu0 0.0
  %1123 = vmatpush1.msra.mxu0 0.0
  %1124 = vmatprep.subr.mxu0 0.0
  %1125 = vmatpush1.msra.mxu0 0.0
  %1126 = vmatprep.subr.mxu0 0.0
  %1127 = vmatpush1.msra.mxu0 0.0
  %1128 = vmatprep.subr.mxu0 0.0
  %1129 = vmatpush1.msra.mxu0 0.0
  %1130 = vmatprep.subr.mxu0 0.0
  %1131 = vmatpush1.msra.mxu0 0.0
  %1132 = vmatprep.subr.mxu0 0.0
  %1133 = vmatpush1.msra.mxu0 0.0
  %1134 = vmatprep.subr.mxu0 0.0
  %1135 = vmatpush1.msra.mxu0 0.0
  %1136 = vmatprep.subr.mxu0 0.0
  %1137 = vmatpush1.msra.mxu0 0.0
  %1138 = vmatprep.subr.mxu0 0.0
  %1139 = vmatpush1.msra.mxu0 0.0
  %1140 = vmatprep.subr.mxu0 0.0
  %1141 = vmatpush1.msra.mxu0 0.0
  %1142 = vmatprep.subr.mxu0 0.0
  %1143 = vmatpush1.msra.mxu0 0.0
  %1144 = vmatprep.subr.mxu0 0.0
  %1145 = vmatpush1.msra.mxu0 0.0
  %1146 = vmatprep.subr.mxu0 0.0
  %1147 = vmatpush1.msra.mxu0 0.0
  %1148 = vmatprep.subr.mxu0 0.0
  %1149 = vmatpush1.msra.mxu0 0.0
  %1150 = vmatprep.subr.mxu0 0.0
  %1151 = vmatpush1.msra.mxu0 0.0
  %1152 = vmatprep.subr.mxu0 0.0
  %1153 = vmatpush1.msra.mxu0 0.0
  %1154 = vmatprep.subr.mxu0 0.0
  %1155 = vmatpush1.msra.mxu0 0.0
  %1156 = vmatprep.subr.mxu0 0.0
  %1157 = vmatpush1.msra.mxu0 0.0
  %1158 = vmatprep.subr.mxu0 0.0
  %1159 = vmatpush1.msra.mxu0 0.0
  %1160 = vmatprep.subr.mxu0 0.0
  %1161 = vmatpush1.msra.mxu0 0.0
  %1162 = vmatprep.subr.mxu0 0.0
  %1163 = vmatpush1.msra.mxu0 0.0
  %1164 = vmatprep.subr.mxu0 0.0
  %1165 = vmatpush1.msra.mxu0 0.0
  %1166 = vmatprep.subr.mxu0 0.0
  %1167 = vmatpush1.msra.mxu0 0.0
  %1168 = vmatprep.subr.mxu0 0.0
  %1169 = vmatpush1.msra.mxu0 0.0
  %1170 = vmatprep.subr.mxu0 0.0
  %1171 = vmatpush1.msra.mxu0 0.0
  %1172 = vmatprep.subr.mxu0 0.0
  %1173 = vmatpush1.msra.mxu0 0.0
  %1174 = vmatprep.subr.mxu0 0.0
  %1175 = vmatpush1.msra.mxu0 0.0
  %1176 = vmatprep.subr.mxu0 0.0
  %1177 = vmatpush1.msra.mxu0 0.0
  %1178 = vmatprep.subr.mxu0 0.0
  %1179 = vmatpush1.msra.mxu0 0.0
  %1180 = vmatprep.subr.mxu0 0.0
  %1181 = vmatpush1.msra.mxu0 0.0
  %1182 = vmatprep.subr.mxu0 0.0
  %1183 = vmatpush1.msra.mxu0 0.0
  %1184 = vmatprep.mubr.f32.mxu0 0.0
  %1185 = vmatmul.mubr.f32.gmra.mrb[0].mxu0 %v1109
  %v1186 = vpop.f32.mrb[0].mxu0
  %v1187 = vadd.f32 0.0, %v1186
  %v1188 = vpop.f32.mrb[0].mxu0
  %v1189 = vadd.f32 0.0, %v1188
  %1190 = vmatprep.mubr.f32.mxu0 0.0
  %1191 = vmatmul.mubr.f32.gmra.mrb[0].mxu0 %v1112
  %v1192 = vpop.f32.mrb[0].mxu0
  %v1193 = vadd.f32 0.0, %v1192
  %v1194 = vpop.f32.mrb[0].mxu0
  %v1195 = vadd.f32 0.0, %v1194
  %1196 = vmatprep.mubr.f32.mxu0 0.0
  %1197 = vmatmul.mubr.f32.gmra.mrb[0].mxu0 %v1115
  %v1198 = vpop.f32.mrb[0].mxu0
  %v1199 = vadd.f32 0.0, %v1198
  %v1200 = vpop.f32.mrb[0].mxu0
  %v1201 = vadd.f32 0.0, %v1200
  %1202 = vmatprep.mubr.f32.mxu0 0.0
  %1203 = vmatmul.mubr.f32.gmra.mrb[0].mxu0 %v1118
  %v1204 = vpop.f32.mrb[0].mxu0
  %v1205 = vadd.f32 0.0, %v1204
  %v1206 = vpop.f32.mrb[0].mxu0
  %v1207 = vadd.f32 0.0, %v1206
  %1208 = vdwg.mxu0
  %v1209 = vadd.f32 %v1100, %v1187
  %v1210 = vadd.f32 %v1101, %v1189
  %v1211 = vadd.f32 %v1102, %v1193
  %v1212 = vadd.f32 %v1103, %v1195
  %v1213 = vadd.f32 %v1104, %v1199
  %v1214 = vadd.f32 %v1105, %v1201
  %v1215 = vadd.f32 %v1106, %v1205
  %v1216 = vadd.f32 %v1107, %v1207
  %v1218 = vsel %vm167, %v105, 0
  %v1221 = vsel %vm167, %v106, 0
  %v1224 = vsel %vm167, %v107, 0
  %v1227 = vsel %vm167, %v108, 0
  %1229 = vmatprep.subr.mxu0 %v136
  %1230 = vmatpush1.msra.mxu0 %v135
  %1231 = vmatprep.subr.mxu0 0.0
  %1232 = vmatpush1.msra.mxu0 0.0
  %1233 = vmatprep.subr.mxu0 0.0
  %1234 = vmatpush1.msra.mxu0 0.0
  %1235 = vmatprep.subr.mxu0 0.0
  %1236 = vmatpush1.msra.mxu0 0.0
  %1237 = vmatprep.subr.mxu0 0.0
  %1238 = vmatpush1.msra.mxu0 0.0
  %1239 = vmatprep.subr.mxu0 0.0
  %1240 = vmatpush1.msra.mxu0 0.0
  %1241 = vmatprep.subr.mxu0 0.0
  %1242 = vmatpush1.msra.mxu0 0.0
  %1243 = vmatprep.subr.mxu0 0.0
  %1244 = vmatpush1.msra.mxu0 0.0
  %1245 = vmatprep.subr.mxu0 0.0
  %1246 = vmatpush1.msra.mxu0 0.0
  %1247 = vmatprep.subr.mxu0 0.0
  %1248 = vmatpush1.msra.mxu0 0.0
  %1249 = vmatprep.subr.mxu0 0.0
  %1250 = vmatpush1.msra.mxu0 0.0
  %1251 = vmatprep.subr.mxu0 0.0
  %1252 = vmatpush1.msra.mxu0 0.0
  %1253 = vmatprep.subr.mxu0 0.0
  %1254 = vmatpush1.msra.mxu0 0.0
  %1255 = vmatprep.subr.mxu0 0.0
  %1256 = vmatpush1.msra.mxu0 0.0
  %1257 = vmatprep.subr.mxu0 0.0
  %1258 = vmatpush1.msra.mxu0 0.0
  %1259 = vmatprep.subr.mxu0 0.0
  %1260 = vmatpush1.msra.mxu0 0.0
  %1261 = vmatprep.subr.mxu0 0.0
  %1262 = vmatpush1.msra.mxu0 0.0
  %1263 = vmatprep.subr.mxu0 0.0
  %1264 = vmatpush1.msra.mxu0 0.0
  %1265 = vmatprep.subr.mxu0 0.0
  %1266 = vmatpush1.msra.mxu0 0.0
  %1267 = vmatprep.subr.mxu0 0.0
  %1268 = vmatpush1.msra.mxu0 0.0
  %1269 = vmatprep.subr.mxu0 0.0
  %1270 = vmatpush1.msra.mxu0 0.0
  %1271 = vmatprep.subr.mxu0 0.0
  %1272 = vmatpush1.msra.mxu0 0.0
  %1273 = vmatprep.subr.mxu0 0.0
  %1274 = vmatpush1.msra.mxu0 0.0
  %1275 = vmatprep.subr.mxu0 0.0
  %1276 = vmatpush1.msra.mxu0 0.0
  %1277 = vmatprep.subr.mxu0 0.0
  %1278 = vmatpush1.msra.mxu0 0.0
  %1279 = vmatprep.subr.mxu0 0.0
  %1280 = vmatpush1.msra.mxu0 0.0
  %1281 = vmatprep.subr.mxu0 0.0
  %1282 = vmatpush1.msra.mxu0 0.0
  %1283 = vmatprep.subr.mxu0 0.0
  %1284 = vmatpush1.msra.mxu0 0.0
  %1285 = vmatprep.subr.mxu0 0.0
  %1286 = vmatpush1.msra.mxu0 0.0
  %1287 = vmatprep.subr.mxu0 0.0
  %1288 = vmatpush1.msra.mxu0 0.0
  %1289 = vmatprep.subr.mxu0 0.0
  %1290 = vmatpush1.msra.mxu0 0.0
  %1291 = vmatprep.subr.mxu0 0.0
  %1292 = vmatpush1.msra.mxu0 0.0
  %1293 = vmatprep.mubr.f32.mxu0 0.0
  %1294 = vmatmul.mubr.f32.gmra.mrb[0].mxu0 %v1218
  %v1295 = vpop.f32.mrb[0].mxu0
  %v1296 = vadd.f32 0.0, %v1295
  %v1297 = vpop.f32.mrb[0].mxu0
  %v1298 = vadd.f32 0.0, %v1297
  %1299 = vmatprep.mubr.f32.mxu0 0.0
  %1300 = vmatmul.mubr.f32.gmra.mrb[0].mxu0 %v1221
  %v1301 = vpop.f32.mrb[0].mxu0
  %v1302 = vadd.f32 0.0, %v1301
  %v1303 = vpop.f32.mrb[0].mxu0
  %v1304 = vadd.f32 0.0, %v1303
  %1305 = vmatprep.mubr.f32.mxu0 0.0
  %1306 = vmatmul.mubr.f32.gmra.mrb[0].mxu0 %v1224
  %v1307 = vpop.f32.mrb[0].mxu0
  %v1308 = vadd.f32 0.0, %v1307
  %v1309 = vpop.f32.mrb[0].mxu0
  %v1310 = vadd.f32 0.0, %v1309
  %1311 = vmatprep.mubr.f32.mxu0 0.0
  %1312 = vmatmul.mubr.f32.gmra.mrb[0].mxu0 %v1227
  %v1313 = vpop.f32.mrb[0].mxu0
  %v1314 = vadd.f32 0.0, %v1313
  %v1315 = vpop.f32.mrb[0].mxu0
  %v1316 = vadd.f32 0.0, %v1315
  %1317 = vdwg.mxu0
  %v1318 = vadd.f32 %v1209, %v1296
  %v1319 = vadd.f32 %v1210, %v1298
  %v1320 = vadd.f32 %v1211, %v1302
  %v1321 = vadd.f32 %v1212, %v1304
  %v1322 = vadd.f32 %v1213, %v1308
  %v1323 = vadd.f32 %v1214, %v1310
  %v1324 = vadd.f32 %v1215, %v1314
  %v1325 = vadd.f32 %v1216, %v1316
  %1326 = vrot.lane.b32.xlu0 %v133, 127
  %v1327 = vpop.permute.xlu0 %1326
  %1328 = vrot.lane.b32.xlu0 %v134, 127
  %v1329 = vpop.permute.xlu0 %1328
  %vm1330 = vcmp.lt.s32.totalorder %v142, 127
  %v1331 = vsel %vm1330, %v1327, %v1329
  %v1332 = vsel %vm1330, %v1329, %v1327
  %v1333 = vsel %vm36, 1, 0
  %v1334 = vlaneseq
  %v1335 = vshrl.u32 %v1334, 7
  %v1336 = vsub.s32 0, %v1335
  %v1337 = vrot.slane %v1333, %v1336
  %v1338 = vlaneseq
  %v1339 = vshrl.u32 %v1338, 7
  %v1340 = vsub.s32 1, %v1339
  %v1341 = vrot.slane %v1333, %v1340
  %vm1342 = vcmp.eq.s32.totalorder %v1337, 1
  %vm1343 = vcmp.eq.s32.totalorder %v1341, 1
  %v1344 = vsel %vm1342, %v1331, 0.0
  %v1345 = vsel %vm1343, %v1332, 0.0
  %v1347 = vsel %vm167, %v66, 0
  %v1350 = vsel %vm167, %v67, 0
  %v1353 = vsel %vm167, %v68, 0
  %v1356 = vsel %vm167, %v69, 0
  %1358 = vmatprep.subr.mxu0 %v1345
  %1359 = vmatpush1.msra.mxu0 %v1344
  %1360 = vmatprep.subr.mxu0 0.0
  %1361 = vmatpush1.msra.mxu0 0.0
  %1362 = vmatprep.subr.mxu0 0.0
  %1363 = vmatpush1.msra.mxu0 0.0
  %1364 = vmatprep.subr.mxu0 0.0
  %1365 = vmatpush1.msra.mxu0 0.0
  %1366 = vmatprep.subr.mxu0 0.0
  %1367 = vmatpush1.msra.mxu0 0.0
  %1368 = vmatprep.subr.mxu0 0.0
  %1369 = vmatpush1.msra.mxu0 0.0
  %1370 = vmatprep.subr.mxu0 0.0
  %1371 = vmatpush1.msra.mxu0 0.0
  %1372 = vmatprep.subr.mxu0 0.0
  %1373 = vmatpush1.msra.mxu0 0.0
  %1374 = vmatprep.subr.mxu0 0.0
  %1375 = vmatpush1.msra.mxu0 0.0
  %1376 = vmatprep.subr.mxu0 0.0
  %1377 = vmatpush1.msra.mxu0 0.0
  %1378 = vmatprep.subr.mxu0 0.0
  %1379 = vmatpush1.msra.mxu0 0.0
  %1380 = vmatprep.subr.mxu0 0.0
  %1381 = vmatpush1.msra.mxu0 0.0
  %1382 = vmatprep.subr.mxu0 0.0
  %1383 = vmatpush1.msra.mxu0 0.0
  %1384 = vmatprep.subr.mxu0 0.0
  %1385 = vmatpush1.msra.mxu0 0.0
  %1386 = vmatprep.subr.mxu0 0.0
  %1387 = vmatpush1.msra.mxu0 0.0
  %1388 = vmatprep.subr.mxu0 0.0
  %1389 = vmatpush1.msra.mxu0 0.0
  %1390 = vmatprep.subr.mxu0 0.0
  %1391 = vmatpush1.msra.mxu0 0.0
  %1392 = vmatprep.subr.mxu0 0.0
  %1393 = vmatpush1.msra.mxu0 0.0
  %1394 = vmatprep.subr.mxu0 0.0
  %1395 = vmatpush1.msra.mxu0 0.0
  %1396 = vmatprep.subr.mxu0 0.0
  %1397 = vmatpush1.msra.mxu0 0.0
  %1398 = vmatprep.subr.mxu0 0.0
  %1399 = vmatpush1.msra.mxu0 0.0
  %1400 = vmatprep.subr.mxu0 0.0
  %1401 = vmatpush1.msra.mxu0 0.0
  %1402 = vmatprep.subr.mxu0 0.0
  %1403 = vmatpush1.msra.mxu0 0.0
  %1404 = vmatprep.subr.mxu0 0.0
  %1405 = vmatpush1.msra.mxu0 0.0
  %1406 = vmatprep.subr.mxu0 0.0
  %1407 = vmatpush1.msra.mxu0 0.0
  %1408 = vmatprep.subr.mxu0 0.0
  %1409 = vmatpush1.msra.mxu0 0.0
  %1410 = vmatprep.subr.mxu0 0.0
  %1411 = vmatpush1.msra.mxu0 0.0
  %1412 = vmatprep.subr.mxu0 0.0
  %1413 = vmatpush1.msra.mxu0 0.0
  %1414 = vmatprep.subr.mxu0 0.0
  %1415 = vmatpush1.msra.mxu0 0.0
  %1416 = vmatprep.subr.mxu0 0.0
  %1417 = vmatpush1.msra.mxu0 0.0
  %1418 = vmatprep.subr.mxu0 0.0
  %1419 = vmatpush1.msra.mxu0 0.0
  %1420 = vmatprep.subr.mxu0 0.0
  %1421 = vmatpush1.msra.mxu0 0.0
  %1422 = vmatprep.mubr.f32.mxu0 0.0
  %1423 = vmatmul.mubr.f32.gmra.mrb[0].mxu0 %v1347
  %v1424 = vpop.f32.mrb[0].mxu0
  %v1425 = vadd.f32 0.0, %v1424
  %v1426 = vpop.f32.mrb[0].mxu0
  %v1427 = vadd.f32 0.0, %v1426
  %1428 = vmatprep.mubr.f32.mxu0 0.0
  %1429 = vmatmul.mubr.f32.gmra.mrb[0].mxu0 %v1350
  %v1430 = vpop.f32.mrb[0].mxu0
  %v1431 = vadd.f32 0.0, %v1430
  %v1432 = vpop.f32.mrb[0].mxu0
  %v1433 = vadd.f32 0.0, %v1432
  %1434 = vmatprep.mubr.f32.mxu0 0.0
  %1435 = vmatmul.mubr.f32.gmra.mrb[0].mxu0 %v1353
  %v1436 = vpop.f32.mrb[0].mxu0
  %v1437 = vadd.f32 0.0, %v1436
  %v1438 = vpop.f32.mrb[0].mxu0
  %v1439 = vadd.f32 0.0, %v1438
  %1440 = vmatprep.mubr.f32.mxu0 0.0
  %1441 = vmatmul.mubr.f32.gmra.mrb[0].mxu0 %v1356
  %v1442 = vpop.f32.mrb[0].mxu0
  %v1443 = vadd.f32 0.0, %v1442
  %v1444 = vpop.f32.mrb[0].mxu0
  %v1445 = vadd.f32 0.0, %v1444
  %1446 = vdwg.mxu0
  %v1447 = vadd.f32 %v1318, %v1425
  %v1448 = vadd.f32 %v1319, %v1427
  %v1449 = vadd.f32 %v1320, %v1431
  %v1450 = vadd.f32 %v1321, %v1433
  %v1451 = vadd.f32 %v1322, %v1437
  %v1452 = vadd.f32 %v1323, %v1439
  %v1453 = vadd.f32 %v1324, %v1443
  %v1454 = vadd.f32 %v1325, %v1445
  %1455 = vrot.lane.b32.xlu0 %v135, 127
  %v1456 = vpop.permute.xlu0 %1455
  %1457 = vrot.lane.b32.xlu0 %v136, 127
  %v1458 = vpop.permute.xlu0 %1457
  %v1459 = vsel %vm1330, %v1456, %v1458
  %v1460 = vsel %vm1330, %v1458, %v1456
  %v1461 = vsel %vm1342, %v1459, 0.0
  %v1462 = vsel %vm1343, %v1460, 0.0
  %v1464 = vsel %vm167, %v110, 0
  %v1467 = vsel %vm167, %v111, 0
  %v1470 = vsel %vm167, %v112, 0
  %v1473 = vsel %vm167, %v113, 0
  %1475 = vmatprep.subr.mxu0 %v1462
  %1476 = vmatpush1.msra.mxu0 %v1461
  %1477 = vmatprep.subr.mxu0 0.0
  %1478 = vmatpush1.msra.mxu0 0.0
  %1479 = vmatprep.subr.mxu0 0.0
  %1480 = vmatpush1.msra.mxu0 0.0
  %1481 = vmatprep.subr.mxu0 0.0
  %1482 = vmatpush1.msra.mxu0 0.0
  %1483 = vmatprep.subr.mxu0 0.0
  %1484 = vmatpush1.msra.mxu0 0.0
  %1485 = vmatprep.subr.mxu0 0.0
  %1486 = vmatpush1.msra.mxu0 0.0
  %1487 = vmatprep.subr.mxu0 0.0
  %1488 = vmatpush1.msra.mxu0 0.0
  %1489 = vmatprep.subr.mxu0 0.0
  %1490 = vmatpush1.msra.mxu0 0.0
  %1491 = vmatprep.subr.mxu0 0.0
  %1492 = vmatpush1.msra.mxu0 0.0
  %1493 = vmatprep.subr.mxu0 0.0
  %1494 = vmatpush1.msra.mxu0 0.0
  %1495 = vmatprep.subr.mxu0 0.0
  %1496 = vmatpush1.msra.mxu0 0.0
  %1497 = vmatprep.subr.mxu0 0.0
  %1498 = vmatpush1.msra.mxu0 0.0
  %1499 = vmatprep.subr.mxu0 0.0
  %1500 = vmatpush1.msra.mxu0 0.0
  %1501 = vmatprep.subr.mxu0 0.0
  %1502 = vmatpush1.msra.mxu0 0.0
  %1503 = vmatprep.subr.mxu0 0.0
  %1504 = vmatpush1.msra.mxu0 0.0
  %1505 = vmatprep.subr.mxu0 0.0
  %1506 = vmatpush1.msra.mxu0 0.0
  %1507 = vmatprep.subr.mxu0 0.0
  %1508 = vmatpush1.msra.mxu0 0.0
  %1509 = vmatprep.subr.mxu0 0.0
  %1510 = vmatpush1.msra.mxu0 0.0
  %1511 = vmatprep.subr.mxu0 0.0
  %1512 = vmatpush1.msra.mxu0 0.0
  %1513 = vmatprep.subr.mxu0 0.0
  %1514 = vmatpush1.msra.mxu0 0.0
  %1515 = vmatprep.subr.mxu0 0.0
  %1516 = vmatpush1.msra.mxu0 0.0
  %1517 = vmatprep.subr.mxu0 0.0
  %1518 = vmatpush1.msra.mxu0 0.0
  %1519 = vmatprep.subr.mxu0 0.0
  %1520 = vmatpush1.msra.mxu0 0.0
  %1521 = vmatprep.subr.mxu0 0.0
  %1522 = vmatpush1.msra.mxu0 0.0
  %1523 = vmatprep.subr.mxu0 0.0
  %1524 = vmatpush1.msra.mxu0 0.0
  %1525 = vmatprep.subr.mxu0 0.0
  %1526 = vmatpush1.msra.mxu0 0.0
  %1527 = vmatprep.subr.mxu0 0.0
  %1528 = vmatpush1.msra.mxu0 0.0
  %1529 = vmatprep.subr.mxu0 0.0
  %1530 = vmatpush1.msra.mxu0 0.0
  %1531 = vmatprep.subr.mxu0 0.0
  %1532 = vmatpush1.msra.mxu0 0.0
  %1533 = vmatprep.subr.mxu0 0.0
  %1534 = vmatpush1.msra.mxu0 0.0
  %1535 = vmatprep.subr.mxu0 0.0
  %1536 = vmatpush1.msra.mxu0 0.0
  %1537 = vmatprep.subr.mxu0 0.0
  %1538 = vmatpush1.msra.mxu0 0.0
  %1539 = vmatprep.mubr.f32.mxu0 0.0
  %1540 = vmatmul.mubr.f32.gmra.mrb[0].mxu0 %v1464
  %v1541 = vpop.f32.mrb[0].mxu0
  %v1542 = vadd.f32 0.0, %v1541
  %v1543 = vpop.f32.mrb[0].mxu0
  %v1544 = vadd.f32 0.0, %v1543
  %1545 = vmatprep.mubr.f32.mxu0 0.0
  %1546 = vmatmul.mubr.f32.gmra.mrb[0].mxu0 %v1467
  %v1547 = vpop.f32.mrb[0].mxu0
  %v1548 = vadd.f32 0.0, %v1547
  %v1549 = vpop.f32.mrb[0].mxu0
  %v1550 = vadd.f32 0.0, %v1549
  %1551 = vmatprep.mubr.f32.mxu0 0.0
  %1552 = vmatmul.mubr.f32.gmra.mrb[0].mxu0 %v1470
  %v1553 = vpop.f32.mrb[0].mxu0
  %v1554 = vadd.f32 0.0, %v1553
  %v1555 = vpop.f32.mrb[0].mxu0
  %v1556 = vadd.f32 0.0, %v1555
  %1557 = vmatprep.mubr.f32.mxu0 0.0
  %1558 = vmatmul.mubr.f32.gmra.mrb[0].mxu0 %v1473
  %v1559 = vpop.f32.mrb[0].mxu0
  %v1560 = vadd.f32 0.0, %v1559
  %v1561 = vpop.f32.mrb[0].mxu0
  %v1562 = vadd.f32 0.0, %v1561
  %1563 = vdwg.mxu0
  %v1564 = vadd.f32 %v1447, %v1542
  %v1565 = vadd.f32 %v1448, %v1544
  %v1566 = vadd.f32 %v1449, %v1548
  %v1567 = vadd.f32 %v1450, %v1550
  %v1568 = vadd.f32 %v1451, %v1554
  %v1569 = vadd.f32 %v1452, %v1556
  %v1570 = vadd.f32 %v1453, %v1560
  %v1571 = vadd.f32 %v1454, %v1562
  %1572 = vrot.lane.b32.xlu0 %v133, 113
  %v1573 = vpop.permute.xlu0 %1572
  %1574 = vrot.lane.b32.xlu0 %v134, 113
  %v1575 = vpop.permute.xlu0 %1574
  %vm1576 = vcmp.lt.s32.totalorder %v142, 113
  %v1577 = vsel %vm1576, %v1573, %v1575
  %v1578 = vsel %vm1576, %v1575, %v1573
  %v1579 = vsel %vm39, 1, 0
  %v1580 = vlaneseq
  %v1581 = vshrl.u32 %v1580, 7
  %v1582 = vsub.s32 0, %v1581
  %v1583 = vrot.slane %v1579, %v1582
  %v1584 = vlaneseq
  %v1585 = vshrl.u32 %v1584, 7
  %v1586 = vsub.s32 1, %v1585
  %v1587 = vrot.slane %v1579, %v1586
  %vm1588 = vcmp.eq.s32.totalorder %v1583, 1
  %vm1589 = vcmp.eq.s32.totalorder %v1587, 1
  %v1590 = vsel %vm1588, %v1577, 0.0
  %v1591 = vsel %vm1589, %v1578, 0.0
  %v1593 = vsel %vm167, %v71, 0
  %v1596 = vsel %vm167, %v72, 0
  %v1599 = vsel %vm167, %v73, 0
  %v1602 = vsel %vm167, %v74, 0
  %1604 = vmatprep.subr.mxu0 %v1591
  %1605 = vmatpush1.msra.mxu0 %v1590
  %1606 = vmatprep.subr.mxu0 0.0
  %1607 = vmatpush1.msra.mxu0 0.0
  %1608 = vmatprep.subr.mxu0 0.0
  %1609 = vmatpush1.msra.mxu0 0.0
  %1610 = vmatprep.subr.mxu0 0.0
  %1611 = vmatpush1.msra.mxu0 0.0
  %1612 = vmatprep.subr.mxu0 0.0
  %1613 = vmatpush1.msra.mxu0 0.0
  %1614 = vmatprep.subr.mxu0 0.0
  %1615 = vmatpush1.msra.mxu0 0.0
  %1616 = vmatprep.subr.mxu0 0.0
  %1617 = vmatpush1.msra.mxu0 0.0
  %1618 = vmatprep.subr.mxu0 0.0
  %1619 = vmatpush1.msra.mxu0 0.0
  %1620 = vmatprep.subr.mxu0 0.0
  %1621 = vmatpush1.msra.mxu0 0.0
  %1622 = vmatprep.subr.mxu0 0.0
  %1623 = vmatpush1.msra.mxu0 0.0
  %1624 = vmatprep.subr.mxu0 0.0
  %1625 = vmatpush1.msra.mxu0 0.0
  %1626 = vmatprep.subr.mxu0 0.0
  %1627 = vmatpush1.msra.mxu0 0.0
  %1628 = vmatprep.subr.mxu0 0.0
  %1629 = vmatpush1.msra.mxu0 0.0
  %1630 = vmatprep.subr.mxu0 0.0
  %1631 = vmatpush1.msra.mxu0 0.0
  %1632 = vmatprep.subr.mxu0 0.0
  %1633 = vmatpush1.msra.mxu0 0.0
  %1634 = vmatprep.subr.mxu0 0.0
  %1635 = vmatpush1.msra.mxu0 0.0
  %1636 = vmatprep.subr.mxu0 0.0
  %1637 = vmatpush1.msra.mxu0 0.0
  %1638 = vmatprep.subr.mxu0 0.0
  %1639 = vmatpush1.msra.mxu0 0.0
  %1640 = vmatprep.subr.mxu0 0.0
  %1641 = vmatpush1.msra.mxu0 0.0
  %1642 = vmatprep.subr.mxu0 0.0
  %1643 = vmatpush1.msra.mxu0 0.0
  %1644 = vmatprep.subr.mxu0 0.0
  %1645 = vmatpush1.msra.mxu0 0.0
  %1646 = vmatprep.subr.mxu0 0.0
  %1647 = vmatpush1.msra.mxu0 0.0
  %1648 = vmatprep.subr.mxu0 0.0
  %1649 = vmatpush1.msra.mxu0 0.0
  %1650 = vmatprep.subr.mxu0 0.0
  %1651 = vmatpush1.msra.mxu0 0.0
  %1652 = vmatprep.subr.mxu0 0.0
  %1653 = vmatpush1.msra.mxu0 0.0
  %1654 = vmatprep.subr.mxu0 0.0
  %1655 = vmatpush1.msra.mxu0 0.0
  %1656 = vmatprep.subr.mxu0 0.0
  %1657 = vmatpush1.msra.mxu0 0.0
  %1658 = vmatprep.subr.mxu0 0.0
  %1659 = vmatpush1.msra.mxu0 0.0
  %1660 = vmatprep.subr.mxu0 0.0
  %1661 = vmatpush1.msra.mxu0 0.0
  %1662 = vmatprep.subr.mxu0 0.0
  %1663 = vmatpush1.msra.mxu0 0.0
  %1664 = vmatprep.subr.mxu0 0.0
  %1665 = vmatpush1.msra.mxu0 0.0
  %1666 = vmatprep.subr.mxu0 0.0
  %1667 = vmatpush1.msra.mxu0 0.0
  %1668 = vmatprep.mubr.f32.mxu0 0.0
  %1669 = vmatmul.mubr.f32.gmra.mrb[0].mxu0 %v1593
  %v1670 = vpop.f32.mrb[0].mxu0
  %v1671 = vadd.f32 0.0, %v1670
  %v1672 = vpop.f32.mrb[0].mxu0
  %v1673 = vadd.f32 0.0, %v1672
  %1674 = vmatprep.mubr.f32.mxu0 0.0
  %1675 = vmatmul.mubr.f32.gmra.mrb[0].mxu0 %v1596
  %v1676 = vpop.f32.mrb[0].mxu0
  %v1677 = vadd.f32 0.0, %v1676
  %v1678 = vpop.f32.mrb[0].mxu0
  %v1679 = vadd.f32 0.0, %v1678
  %1680 = vmatprep.mubr.f32.mxu0 0.0
  %1681 = vmatmul.mubr.f32.gmra.mrb[0].mxu0 %v1599
  %v1682 = vpop.f32.mrb[0].mxu0
  %v1683 = vadd.f32 0.0, %v1682
  %v1684 = vpop.f32.mrb[0].mxu0
  %v1685 = vadd.f32 0.0, %v1684
  %1686 = vmatprep.mubr.f32.mxu0 0.0
  %1687 = vmatmul.mubr.f32.gmra.mrb[0].mxu0 %v1602
  %v1688 = vpop.f32.mrb[0].mxu0
  %v1689 = vadd.f32 0.0, %v1688
  %v1690 = vpop.f32.mrb[0].mxu0
  %v1691 = vadd.f32 0.0, %v1690
  %1692 = vdwg.mxu0
  %v1693 = vadd.f32 %v1564, %v1671
  %v1694 = vadd.f32 %v1565, %v1673
  %v1695 = vadd.f32 %v1566, %v1677
  %v1696 = vadd.f32 %v1567, %v1679
  %v1697 = vadd.f32 %v1568, %v1683
  %v1698 = vadd.f32 %v1569, %v1685
  %v1699 = vadd.f32 %v1570, %v1689
  %v1700 = vadd.f32 %v1571, %v1691
  %1701 = vrot.lane.b32.xlu0 %v135, 113
  %v1702 = vpop.permute.xlu0 %1701
  %1703 = vrot.lane.b32.xlu0 %v136, 113
  %v1704 = vpop.permute.xlu0 %1703
  %v1705 = vsel %vm1576, %v1702, %v1704
  %v1706 = vsel %vm1576, %v1704, %v1702
  %v1707 = vsel %vm1588, %v1705, 0.0
  %v1708 = vsel %vm1589, %v1706, 0.0
  %v1710 = vsel %vm167, %v115, 0
  %v1713 = vsel %vm167, %v116, 0
  %v1716 = vsel %vm167, %v117, 0
  %v1719 = vsel %vm167, %v118, 0
  %1721 = vmatprep.subr.mxu0 %v1708
  %1722 = vmatpush1.msra.mxu0 %v1707
  %1723 = vmatprep.subr.mxu0 0.0
  %1724 = vmatpush1.msra.mxu0 0.0
  %1725 = vmatprep.subr.mxu0 0.0
  %1726 = vmatpush1.msra.mxu0 0.0
  %1727 = vmatprep.subr.mxu0 0.0
  %1728 = vmatpush1.msra.mxu0 0.0
  %1729 = vmatprep.subr.mxu0 0.0
  %1730 = vmatpush1.msra.mxu0 0.0
  %1731 = vmatprep.subr.mxu0 0.0
  %1732 = vmatpush1.msra.mxu0 0.0
  %1733 = vmatprep.subr.mxu0 0.0
  %1734 = vmatpush1.msra.mxu0 0.0
  %1735 = vmatprep.subr.mxu0 0.0
  %1736 = vmatpush1.msra.mxu0 0.0
  %1737 = vmatprep.subr.mxu0 0.0
  %1738 = vmatpush1.msra.mxu0 0.0
  %1739 = vmatprep.subr.mxu0 0.0
  %1740 = vmatpush1.msra.mxu0 0.0
  %1741 = vmatprep.subr.mxu0 0.0
  %1742 = vmatpush1.msra.mxu0 0.0
  %1743 = vmatprep.subr.mxu0 0.0
  %1744 = vmatpush1.msra.mxu0 0.0
  %1745 = vmatprep.subr.mxu0 0.0
  %1746 = vmatpush1.msra.mxu0 0.0
  %1747 = vmatprep.subr.mxu0 0.0
  %1748 = vmatpush1.msra.mxu0 0.0
  %1749 = vmatprep.subr.mxu0 0.0
  %1750 = vmatpush1.msra.mxu0 0.0
  %1751 = vmatprep.subr.mxu0 0.0
  %1752 = vmatpush1.msra.mxu0 0.0
  %1753 = vmatprep.subr.mxu0 0.0
  %1754 = vmatpush1.msra.mxu0 0.0
  %1755 = vmatprep.subr.mxu0 0.0
  %1756 = vmatpush1.msra.mxu0 0.0
  %1757 = vmatprep.subr.mxu0 0.0
  %1758 = vmatpush1.msra.mxu0 0.0
  %1759 = vmatprep.subr.mxu0 0.0
  %1760 = vmatpush1.msra.mxu0 0.0
  %1761 = vmatprep.subr.mxu0 0.0
  %1762 = vmatpush1.msra.mxu0 0.0
  %1763 = vmatprep.subr.mxu0 0.0
  %1764 = vmatpush1.msra.mxu0 0.0
  %1765 = vmatprep.subr.mxu0 0.0
  %1766 = vmatpush1.msra.mxu0 0.0
  %1767 = vmatprep.subr.mxu0 0.0
  %1768 = vmatpush1.msra.mxu0 0.0
  %1769 = vmatprep.subr.mxu0 0.0
  %1770 = vmatpush1.msra.mxu0 0.0
  %1771 = vmatprep.subr.mxu0 0.0
  %1772 = vmatpush1.msra.mxu0 0.0
  %1773 = vmatprep.subr.mxu0 0.0
  %1774 = vmatpush1.msra.mxu0 0.0
  %1775 = vmatprep.subr.mxu0 0.0
  %1776 = vmatpush1.msra.mxu0 0.0
  %1777 = vmatprep.subr.mxu0 0.0
  %1778 = vmatpush1.msra.mxu0 0.0
  %1779 = vmatprep.subr.mxu0 0.0
  %1780 = vmatpush1.msra.mxu0 0.0
  %1781 = vmatprep.subr.mxu0 0.0
  %1782 = vmatpush1.msra.mxu0 0.0
  %1783 = vmatprep.subr.mxu0 0.0
  %1784 = vmatpush1.msra.mxu0 0.0
  %1785 = vmatprep.mubr.f32.mxu0 0.0
  %1786 = vmatmul.mubr.f32.gmra.mrb[0].mxu0 %v1710
  %v1787 = vpop.f32.mrb[0].mxu0
  %v1788 = vadd.f32 0.0, %v1787
  %v1789 = vpop.f32.mrb[0].mxu0
  %v1790 = vadd.f32 0.0, %v1789
  %1791 = vmatprep.mubr.f32.mxu0 0.0
  %1792 = vmatmul.mubr.f32.gmra.mrb[0].mxu0 %v1713
  %v1793 = vpop.f32.mrb[0].mxu0
  %v1794 = vadd.f32 0.0, %v1793
  %v1795 = vpop.f32.mrb[0].mxu0
  %v1796 = vadd.f32 0.0, %v1795
  %1797 = vmatprep.mubr.f32.mxu0 0.0
  %1798 = vmatmul.mubr.f32.gmra.mrb[0].mxu0 %v1716
  %v1799 = vpop.f32.mrb[0].mxu0
  %v1800 = vadd.f32 0.0, %v1799
  %v1801 = vpop.f32.mrb[0].mxu0
  %v1802 = vadd.f32 0.0, %v1801
  %1803 = vmatprep.mubr.f32.mxu0 0.0
  %1804 = vmatmul.mubr.f32.gmra.mrb[0].mxu0 %v1719
  %v1805 = vpop.f32.mrb[0].mxu0
  %v1806 = vadd.f32 0.0, %v1805
  %v1807 = vpop.f32.mrb[0].mxu0
  %v1808 = vadd.f32 0.0, %v1807
  %1809 = vdwg.mxu0
  %v1810 = vadd.f32 %v1693, %v1788
  %v1811 = vadd.f32 %v1694, %v1790
  %v1812 = vadd.f32 %v1695, %v1794
  %v1813 = vadd.f32 %v1696, %v1796
  %v1814 = vadd.f32 %v1697, %v1800
  %v1815 = vadd.f32 %v1698, %v1802
  %v1816 = vadd.f32 %v1699, %v1806
  %v1817 = vadd.f32 %v1700, %v1808
  %1818 = vrot.lane.b32.xlu0 %v133, 112
  %v1819 = vpop.permute.xlu0 %1818
  %1820 = vrot.lane.b32.xlu0 %v134, 112
  %v1821 = vpop.permute.xlu0 %1820
  %vm1822 = vcmp.lt.s32.totalorder %v142, 112
  %v1823 = vsel %vm1822, %v1819, %v1821
  %v1824 = vsel %vm1822, %v1821, %v1819
  %v1825 = vsel %vm38, 1, 0
  %v1826 = vlaneseq
  %v1827 = vshrl.u32 %v1826, 7
  %v1828 = vsub.s32 0, %v1827
  %v1829 = vrot.slane %v1825, %v1828
  %v1830 = vlaneseq
  %v1831 = vshrl.u32 %v1830, 7
  %v1832 = vsub.s32 1, %v1831
  %v1833 = vrot.slane %v1825, %v1832
  %vm1834 = vcmp.eq.s32.totalorder %v1829, 1
  %vm1835 = vcmp.eq.s32.totalorder %v1833, 1
  %v1836 = vsel %vm1834, %v1823, 0.0
  %v1837 = vsel %vm1835, %v1824, 0.0
  %v1839 = vsel %vm167, %v76, 0
  %v1842 = vsel %vm167, %v77, 0
  %v1845 = vsel %vm167, %v78, 0
  %v1848 = vsel %vm167, %v79, 0
  %1850 = vmatprep.subr.mxu0 %v1837
  %1851 = vmatpush1.msra.mxu0 %v1836
  %1852 = vmatprep.subr.mxu0 0.0
  %1853 = vmatpush1.msra.mxu0 0.0
  %1854 = vmatprep.subr.mxu0 0.0
  %1855 = vmatpush1.msra.mxu0 0.0
  %1856 = vmatprep.subr.mxu0 0.0
  %1857 = vmatpush1.msra.mxu0 0.0
  %1858 = vmatprep.subr.mxu0 0.0
  %1859 = vmatpush1.msra.mxu0 0.0
  %1860 = vmatprep.subr.mxu0 0.0
  %1861 = vmatpush1.msra.mxu0 0.0
  %1862 = vmatprep.subr.mxu0 0.0
  %1863 = vmatpush1.msra.mxu0 0.0
  %1864 = vmatprep.subr.mxu0 0.0
  %1865 = vmatpush1.msra.mxu0 0.0
  %1866 = vmatprep.subr.mxu0 0.0
  %1867 = vmatpush1.msra.mxu0 0.0
  %1868 = vmatprep.subr.mxu0 0.0
  %1869 = vmatpush1.msra.mxu0 0.0
  %1870 = vmatprep.subr.mxu0 0.0
  %1871 = vmatpush1.msra.mxu0 0.0
  %1872 = vmatprep.subr.mxu0 0.0
  %1873 = vmatpush1.msra.mxu0 0.0
  %1874 = vmatprep.subr.mxu0 0.0
  %1875 = vmatpush1.msra.mxu0 0.0
  %1876 = vmatprep.subr.mxu0 0.0
  %1877 = vmatpush1.msra.mxu0 0.0
  %1878 = vmatprep.subr.mxu0 0.0
  %1879 = vmatpush1.msra.mxu0 0.0
  %1880 = vmatprep.subr.mxu0 0.0
  %1881 = vmatpush1.msra.mxu0 0.0
  %1882 = vmatprep.subr.mxu0 0.0
  %1883 = vmatpush1.msra.mxu0 0.0
  %1884 = vmatprep.subr.mxu0 0.0
  %1885 = vmatpush1.msra.mxu0 0.0
  %1886 = vmatprep.subr.mxu0 0.0
  %1887 = vmatpush1.msra.mxu0 0.0
  %1888 = vmatprep.subr.mxu0 0.0
  %1889 = vmatpush1.msra.mxu0 0.0
  %1890 = vmatprep.subr.mxu0 0.0
  %1891 = vmatpush1.msra.mxu0 0.0
  %1892 = vmatprep.subr.mxu0 0.0
  %1893 = vmatpush1.msra.mxu0 0.0
  %1894 = vmatprep.subr.mxu0 0.0
  %1895 = vmatpush1.msra.mxu0 0.0
  %1896 = vmatprep.subr.mxu0 0.0
  %1897 = vmatpush1.msra.mxu0 0.0
  %1898 = vmatprep.subr.mxu0 0.0
  %1899 = vmatpush1.msra.mxu0 0.0
  %1900 = vmatprep.subr.mxu0 0.0
  %1901 = vmatpush1.msra.mxu0 0.0
  %1902 = vmatprep.subr.mxu0 0.0
  %1903 = vmatpush1.msra.mxu0 0.0
  %1904 = vmatprep.subr.mxu0 0.0
  %1905 = vmatpush1.msra.mxu0 0.0
  %1906 = vmatprep.subr.mxu0 0.0
  %1907 = vmatpush1.msra.mxu0 0.0
  %1908 = vmatprep.subr.mxu0 0.0
  %1909 = vmatpush1.msra.mxu0 0.0
  %1910 = vmatprep.subr.mxu0 0.0
  %1911 = vmatpush1.msra.mxu0 0.0
  %1912 = vmatprep.subr.mxu0 0.0
  %1913 = vmatpush1.msra.mxu0 0.0
  %1914 = vmatprep.mubr.f32.mxu0 0.0
  %1915 = vmatmul.mubr.f32.gmra.mrb[0].mxu0 %v1839
  %v1916 = vpop.f32.mrb[0].mxu0
  %v1917 = vadd.f32 0.0, %v1916
  %v1918 = vpop.f32.mrb[0].mxu0
  %v1919 = vadd.f32 0.0, %v1918
  %1920 = vmatprep.mubr.f32.mxu0 0.0
  %1921 = vmatmul.mubr.f32.gmra.mrb[0].mxu0 %v1842
  %v1922 = vpop.f32.mrb[0].mxu0
  %v1923 = vadd.f32 0.0, %v1922
  %v1924 = vpop.f32.mrb[0].mxu0
  %v1925 = vadd.f32 0.0, %v1924
  %1926 = vmatprep.mubr.f32.mxu0 0.0
  %1927 = vmatmul.mubr.f32.gmra.mrb[0].mxu0 %v1845
  %v1928 = vpop.f32.mrb[0].mxu0
  %v1929 = vadd.f32 0.0, %v1928
  %v1930 = vpop.f32.mrb[0].mxu0
  %v1931 = vadd.f32 0.0, %v1930
  %1932 = vmatprep.mubr.f32.mxu0 0.0
  %1933 = vmatmul.mubr.f32.gmra.mrb[0].mxu0 %v1848
  %v1934 = vpop.f32.mrb[0].mxu0
  %v1935 = vadd.f32 0.0, %v1934
  %v1936 = vpop.f32.mrb[0].mxu0
  %v1937 = vadd.f32 0.0, %v1936
  %1938 = vdwg.mxu0
  %v1939 = vadd.f32 %v1810, %v1917
  %v1940 = vadd.f32 %v1811, %v1919
  %v1941 = vadd.f32 %v1812, %v1923
  %v1942 = vadd.f32 %v1813, %v1925
  %v1943 = vadd.f32 %v1814, %v1929
  %v1944 = vadd.f32 %v1815, %v1931
  %v1945 = vadd.f32 %v1816, %v1935
  %v1946 = vadd.f32 %v1817, %v1937
  %1947 = vrot.lane.b32.xlu0 %v135, 112
  %v1948 = vpop.permute.xlu0 %1947
  %1949 = vrot.lane.b32.xlu0 %v136, 112
  %v1950 = vpop.permute.xlu0 %1949
  %v1951 = vsel %vm1822, %v1948, %v1950
  %v1952 = vsel %vm1822, %v1950, %v1948
  %v1953 = vsel %vm1834, %v1951, 0.0
  %v1954 = vsel %vm1835, %v1952, 0.0
  %v1956 = vsel %vm167, %v120, 0
  %v1959 = vsel %vm167, %v121, 0
  %v1962 = vsel %vm167, %v122, 0
  %v1965 = vsel %vm167, %v123, 0
  %1967 = vmatprep.subr.mxu0 %v1954
  %1968 = vmatpush1.msra.mxu0 %v1953
  %1969 = vmatprep.subr.mxu0 0.0
  %1970 = vmatpush1.msra.mxu0 0.0
  %1971 = vmatprep.subr.mxu0 0.0
  %1972 = vmatpush1.msra.mxu0 0.0
  %1973 = vmatprep.subr.mxu0 0.0
  %1974 = vmatpush1.msra.mxu0 0.0
  %1975 = vmatprep.subr.mxu0 0.0
  %1976 = vmatpush1.msra.mxu0 0.0
  %1977 = vmatprep.subr.mxu0 0.0
  %1978 = vmatpush1.msra.mxu0 0.0
  %1979 = vmatprep.subr.mxu0 0.0
  %1980 = vmatpush1.msra.mxu0 0.0
  %1981 = vmatprep.subr.mxu0 0.0
  %1982 = vmatpush1.msra.mxu0 0.0
  %1983 = vmatprep.subr.mxu0 0.0
  %1984 = vmatpush1.msra.mxu0 0.0
  %1985 = vmatprep.subr.mxu0 0.0
  %1986 = vmatpush1.msra.mxu0 0.0
  %1987 = vmatprep.subr.mxu0 0.0
  %1988 = vmatpush1.msra.mxu0 0.0
  %1989 = vmatprep.subr.mxu0 0.0
  %1990 = vmatpush1.msra.mxu0 0.0
  %1991 = vmatprep.subr.mxu0 0.0
  %1992 = vmatpush1.msra.mxu0 0.0
  %1993 = vmatprep.subr.mxu0 0.0
  %1994 = vmatpush1.msra.mxu0 0.0
  %1995 = vmatprep.subr.mxu0 0.0
  %1996 = vmatpush1.msra.mxu0 0.0
  %1997 = vmatprep.subr.mxu0 0.0
  %1998 = vmatpush1.msra.mxu0 0.0
  %1999 = vmatprep.subr.mxu0 0.0
  %2000 = vmatpush1.msra.mxu0 0.0
  %2001 = vmatprep.subr.mxu0 0.0
  %2002 = vmatpush1.msra.mxu0 0.0
  %2003 = vmatprep.subr.mxu0 0.0
  %2004 = vmatpush1.msra.mxu0 0.0
  %2005 = vmatprep.subr.mxu0 0.0
  %2006 = vmatpush1.msra.mxu0 0.0
  %2007 = vmatprep.subr.mxu0 0.0
  %2008 = vmatpush1.msra.mxu0 0.0
  %2009 = vmatprep.subr.mxu0 0.0
  %2010 = vmatpush1.msra.mxu0 0.0
  %2011 = vmatprep.subr.mxu0 0.0
  %2012 = vmatpush1.msra.mxu0 0.0
  %2013 = vmatprep.subr.mxu0 0.0
  %2014 = vmatpush1.msra.mxu0 0.0
  %2015 = vmatprep.subr.mxu0 0.0
  %2016 = vmatpush1.msra.mxu0 0.0
  %2017 = vmatprep.subr.mxu0 0.0
  %2018 = vmatpush1.msra.mxu0 0.0
  %2019 = vmatprep.subr.mxu0 0.0
  %2020 = vmatpush1.msra.mxu0 0.0
  %2021 = vmatprep.subr.mxu0 0.0
  %2022 = vmatpush1.msra.mxu0 0.0
  %2023 = vmatprep.subr.mxu0 0.0
  %2024 = vmatpush1.msra.mxu0 0.0
  %2025 = vmatprep.subr.mxu0 0.0
  %2026 = vmatpush1.msra.mxu0 0.0
  %2027 = vmatprep.subr.mxu0 0.0
  %2028 = vmatpush1.msra.mxu0 0.0
  %2029 = vmatprep.subr.mxu0 0.0
  %2030 = vmatpush1.msra.mxu0 0.0
  %2031 = vmatprep.mubr.f32.mxu0 0.0
  %2032 = vmatmul.mubr.f32.gmra.mrb[0].mxu0 %v1956
  %v2033 = vpop.f32.mrb[0].mxu0
  %v2034 = vadd.f32 0.0, %v2033
  %v2035 = vpop.f32.mrb[0].mxu0
  %v2036 = vadd.f32 0.0, %v2035
  %2037 = vmatprep.mubr.f32.mxu0 0.0
  %2038 = vmatmul.mubr.f32.gmra.mrb[0].mxu0 %v1959
  %v2039 = vpop.f32.mrb[0].mxu0
  %v2040 = vadd.f32 0.0, %v2039
  %v2041 = vpop.f32.mrb[0].mxu0
  %v2042 = vadd.f32 0.0, %v2041
  %2043 = vmatprep.mubr.f32.mxu0 0.0
  %2044 = vmatmul.mubr.f32.gmra.mrb[0].mxu0 %v1962
  %v2045 = vpop.f32.mrb[0].mxu0
  %v2046 = vadd.f32 0.0, %v2045
  %v2047 = vpop.f32.mrb[0].mxu0
  %v2048 = vadd.f32 0.0, %v2047
  %2049 = vmatprep.mubr.f32.mxu0 0.0
  %2050 = vmatmul.mubr.f32.gmra.mrb[0].mxu0 %v1965
  %v2051 = vpop.f32.mrb[0].mxu0
  %v2052 = vadd.f32 0.0, %v2051
  %v2053 = vpop.f32.mrb[0].mxu0
  %v2054 = vadd.f32 0.0, %v2053
  %2055 = vdwg.mxu0
  %v2056 = vadd.f32 %v1939, %v2034
  %v2057 = vadd.f32 %v1940, %v2036
  %v2058 = vadd.f32 %v1941, %v2040
  %v2059 = vadd.f32 %v1942, %v2042
  %v2060 = vadd.f32 %v1943, %v2046
  %v2061 = vadd.f32 %v1944, %v2048
  %v2062 = vadd.f32 %v1945, %v2052
  %v2063 = vadd.f32 %v1946, %v2054
  %2064 = vrot.lane.b32.xlu0 %v133, 111
  %v2065 = vpop.permute.xlu0 %2064
  %2066 = vrot.lane.b32.xlu0 %v134, 111
  %v2067 = vpop.permute.xlu0 %2066
  %vm2068 = vcmp.lt.s32.totalorder %v142, 111
  %v2069 = vsel %vm2068, %v2065, %v2067
  %v2070 = vsel %vm2068, %v2067, %v2065
  %v2071 = vsel %vm40, 1, 0
  %v2072 = vlaneseq
  %v2073 = vshrl.u32 %v2072, 7
  %v2074 = vsub.s32 0, %v2073
  %v2075 = vrot.slane %v2071, %v2074
  %v2076 = vlaneseq
  %v2077 = vshrl.u32 %v2076, 7
  %v2078 = vsub.s32 1, %v2077
  %v2079 = vrot.slane %v2071, %v2078
  %vm2080 = vcmp.eq.s32.totalorder %v2075, 1
  %vm2081 = vcmp.eq.s32.totalorder %v2079, 1
  %v2082 = vsel %vm2080, %v2069, 0.0
  %v2083 = vsel %vm2081, %v2070, 0.0
  %v2085 = vsel %vm167, %v81, 0
  %v2088 = vsel %vm167, %v82, 0
  %v2091 = vsel %vm167, %v83, 0
  %v2094 = vsel %vm167, %v84, 0
  %2096 = vmatprep.subr.mxu0 %v2083
  %2097 = vmatpush1.msra.mxu0 %v2082
  %2098 = vmatprep.subr.mxu0 0.0
  %2099 = vmatpush1.msra.mxu0 0.0
  %2100 = vmatprep.subr.mxu0 0.0
  %2101 = vmatpush1.msra.mxu0 0.0
  %2102 = vmatprep.subr.mxu0 0.0
  %2103 = vmatpush1.msra.mxu0 0.0
  %2104 = vmatprep.subr.mxu0 0.0
  %2105 = vmatpush1.msra.mxu0 0.0
  %2106 = vmatprep.subr.mxu0 0.0
  %2107 = vmatpush1.msra.mxu0 0.0
  %2108 = vmatprep.subr.mxu0 0.0
  %2109 = vmatpush1.msra.mxu0 0.0
  %2110 = vmatprep.subr.mxu0 0.0
  %2111 = vmatpush1.msra.mxu0 0.0
  %2112 = vmatprep.subr.mxu0 0.0
  %2113 = vmatpush1.msra.mxu0 0.0
  %2114 = vmatprep.subr.mxu0 0.0
  %2115 = vmatpush1.msra.mxu0 0.0
  %2116 = vmatprep.subr.mxu0 0.0
  %2117 = vmatpush1.msra.mxu0 0.0
  %2118 = vmatprep.subr.mxu0 0.0
  %2119 = vmatpush1.msra.mxu0 0.0
  %2120 = vmatprep.subr.mxu0 0.0
  %2121 = vmatpush1.msra.mxu0 0.0
  %2122 = vmatprep.subr.mxu0 0.0
  %2123 = vmatpush1.msra.mxu0 0.0
  %2124 = vmatprep.subr.mxu0 0.0
  %2125 = vmatpush1.msra.mxu0 0.0
  %2126 = vmatprep.subr.mxu0 0.0
  %2127 = vmatpush1.msra.mxu0 0.0
  %2128 = vmatprep.subr.mxu0 0.0
  %2129 = vmatpush1.msra.mxu0 0.0
  %2130 = vmatprep.subr.mxu0 0.0
  %2131 = vmatpush1.msra.mxu0 0.0
  %2132 = vmatprep.subr.mxu0 0.0
  %2133 = vmatpush1.msra.mxu0 0.0
  %2134 = vmatprep.subr.mxu0 0.0
  %2135 = vmatpush1.msra.mxu0 0.0
  %2136 = vmatprep.subr.mxu0 0.0
  %2137 = vmatpush1.msra.mxu0 0.0
  %2138 = vmatprep.subr.mxu0 0.0
  %2139 = vmatpush1.msra.mxu0 0.0
  %2140 = vmatprep.subr.mxu0 0.0
  %2141 = vmatpush1.msra.mxu0 0.0
  %2142 = vmatprep.subr.mxu0 0.0
  %2143 = vmatpush1.msra.mxu0 0.0
  %2144 = vmatprep.subr.mxu0 0.0
  %2145 = vmatpush1.msra.mxu0 0.0
  %2146 = vmatprep.subr.mxu0 0.0
  %2147 = vmatpush1.msra.mxu0 0.0
  %2148 = vmatprep.subr.mxu0 0.0
  %2149 = vmatpush1.msra.mxu0 0.0
  %2150 = vmatprep.subr.mxu0 0.0
  %2151 = vmatpush1.msra.mxu0 0.0
  %2152 = vmatprep.subr.mxu0 0.0
  %2153 = vmatpush1.msra.mxu0 0.0
  %2154 = vmatprep.subr.mxu0 0.0
  %2155 = vmatpush1.msra.mxu0 0.0
  %2156 = vmatprep.subr.mxu0 0.0
  %2157 = vmatpush1.msra.mxu0 0.0
  %2158 = vmatprep.subr.mxu0 0.0
  %2159 = vmatpush1.msra.mxu0 0.0
  %2160 = vmatprep.mubr.f32.mxu0 0.0
  %2161 = vmatmul.mubr.f32.gmra.mrb[0].mxu0 %v2085
  %v2162 = vpop.f32.mrb[0].mxu0
  %v2163 = vadd.f32 0.0, %v2162
  %v2164 = vpop.f32.mrb[0].mxu0
  %v2165 = vadd.f32 0.0, %v2164
  %2166 = vmatprep.mubr.f32.mxu0 0.0
  %2167 = vmatmul.mubr.f32.gmra.mrb[0].mxu0 %v2088
  %v2168 = vpop.f32.mrb[0].mxu0
  %v2169 = vadd.f32 0.0, %v2168
  %v2170 = vpop.f32.mrb[0].mxu0
  %v2171 = vadd.f32 0.0, %v2170
  %2172 = vmatprep.mubr.f32.mxu0 0.0
  %2173 = vmatmul.mubr.f32.gmra.mrb[0].mxu0 %v2091
  %v2174 = vpop.f32.mrb[0].mxu0
  %v2175 = vadd.f32 0.0, %v2174
  %v2176 = vpop.f32.mrb[0].mxu0
  %v2177 = vadd.f32 0.0, %v2176
  %2178 = vmatprep.mubr.f32.mxu0 0.0
  %2179 = vmatmul.mubr.f32.gmra.mrb[0].mxu0 %v2094
  %v2180 = vpop.f32.mrb[0].mxu0
  %v2181 = vadd.f32 0.0, %v2180
  %v2182 = vpop.f32.mrb[0].mxu0
  %v2183 = vadd.f32 0.0, %v2182
  %2184 = vdwg.mxu0
  %v2185 = vadd.f32 %v2056, %v2163
  %v2186 = vadd.f32 %v2057, %v2165
  %v2187 = vadd.f32 %v2058, %v2169
  %v2188 = vadd.f32 %v2059, %v2171
  %v2189 = vadd.f32 %v2060, %v2175
  %v2190 = vadd.f32 %v2061, %v2177
  %v2191 = vadd.f32 %v2062, %v2181
  %v2192 = vadd.f32 %v2063, %v2183
  %2193 = vrot.lane.b32.xlu0 %v135, 111
  %v2194 = vpop.permute.xlu0 %2193
  %2195 = vrot.lane.b32.xlu0 %v136, 111
  %v2196 = vpop.permute.xlu0 %2195
  %v2197 = vsel %vm2068, %v2194, %v2196
  %v2198 = vsel %vm2068, %v2196, %v2194
  %v2199 = vsel %vm2080, %v2197, 0.0
  %v2200 = vsel %vm2081, %v2198, 0.0
  %v2202 = vsel %vm167, %v125, 0
  %v2205 = vsel %vm167, %v126, 0
  %v2208 = vsel %vm167, %v127, 0
  %v2211 = vsel %vm167, %v128, 0
  %2213 = vmatprep.subr.mxu0 %v2200
  %2214 = vmatpush1.msra.mxu0 %v2199
  %2215 = vmatprep.subr.mxu0 0.0
  %2216 = vmatpush1.msra.mxu0 0.0
  %2217 = vmatprep.subr.mxu0 0.0
  %2218 = vmatpush1.msra.mxu0 0.0
  %2219 = vmatprep.subr.mxu0 0.0
  %2220 = vmatpush1.msra.mxu0 0.0
  %2221 = vmatprep.subr.mxu0 0.0
  %2222 = vmatpush1.msra.mxu0 0.0
  %2223 = vmatprep.subr.mxu0 0.0
  %2224 = vmatpush1.msra.mxu0 0.0
  %2225 = vmatprep.subr.mxu0 0.0
  %2226 = vmatpush1.msra.mxu0 0.0
  %2227 = vmatprep.subr.mxu0 0.0
  %2228 = vmatpush1.msra.mxu0 0.0
  %2229 = vmatprep.subr.mxu0 0.0
  %2230 = vmatpush1.msra.mxu0 0.0
  %2231 = vmatprep.subr.mxu0 0.0
  %2232 = vmatpush1.msra.mxu0 0.0
  %2233 = vmatprep.subr.mxu0 0.0
  %2234 = vmatpush1.msra.mxu0 0.0
  %2235 = vmatprep.subr.mxu0 0.0
  %2236 = vmatpush1.msra.mxu0 0.0
  %2237 = vmatprep.subr.mxu0 0.0
  %2238 = vmatpush1.msra.mxu0 0.0
  %2239 = vmatprep.subr.mxu0 0.0
  %2240 = vmatpush1.msra.mxu0 0.0
  %2241 = vmatprep.subr.mxu0 0.0
  %2242 = vmatpush1.msra.mxu0 0.0
  %2243 = vmatprep.subr.mxu0 0.0
  %2244 = vmatpush1.msra.mxu0 0.0
  %2245 = vmatprep.subr.mxu0 0.0
  %2246 = vmatpush1.msra.mxu0 0.0
  %2247 = vmatprep.subr.mxu0 0.0
  %2248 = vmatpush1.msra.mxu0 0.0
  %2249 = vmatprep.subr.mxu0 0.0
  %2250 = vmatpush1.msra.mxu0 0.0
  %2251 = vmatprep.subr.mxu0 0.0
  %2252 = vmatpush1.msra.mxu0 0.0
  %2253 = vmatprep.subr.mxu0 0.0
  %2254 = vmatpush1.msra.mxu0 0.0
  %2255 = vmatprep.subr.mxu0 0.0
  %2256 = vmatpush1.msra.mxu0 0.0
  %2257 = vmatprep.subr.mxu0 0.0
  %2258 = vmatpush1.msra.mxu0 0.0
  %2259 = vmatprep.subr.mxu0 0.0
  %2260 = vmatpush1.msra.mxu0 0.0
  %2261 = vmatprep.subr.mxu0 0.0
  %2262 = vmatpush1.msra.mxu0 0.0
  %2263 = vmatprep.subr.mxu0 0.0
  %2264 = vmatpush1.msra.mxu0 0.0
  %2265 = vmatprep.subr.mxu0 0.0
  %2266 = vmatpush1.msra.mxu0 0.0
  %2267 = vmatprep.subr.mxu0 0.0
  %2268 = vmatpush1.msra.mxu0 0.0
  %2269 = vmatprep.subr.mxu0 0.0
  %2270 = vmatpush1.msra.mxu0 0.0
  %2271 = vmatprep.subr.mxu0 0.0
  %2272 = vmatpush1.msra.mxu0 0.0
  %2273 = vmatprep.subr.mxu0 0.0
  %2274 = vmatpush1.msra.mxu0 0.0
  %2275 = vmatprep.subr.mxu0 0.0
  %2276 = vmatpush1.msra.mxu0 0.0
  %2277 = vmatprep.mubr.f32.mxu0 0.0
  %2278 = vmatmul.mubr.f32.gmra.mrb[0].mxu0 %v2202
  %v2279 = vpop.f32.mrb[0].mxu0
  %v2280 = vadd.f32 0.0, %v2279
  %v2281 = vpop.f32.mrb[0].mxu0
  %v2282 = vadd.f32 0.0, %v2281
  %2283 = vmatprep.mubr.f32.mxu0 0.0
  %2284 = vmatmul.mubr.f32.gmra.mrb[0].mxu0 %v2205
  %v2285 = vpop.f32.mrb[0].mxu0
  %v2286 = vadd.f32 0.0, %v2285
  %v2287 = vpop.f32.mrb[0].mxu0
  %v2288 = vadd.f32 0.0, %v2287
  %2289 = vmatprep.mubr.f32.mxu0 0.0
  %2290 = vmatmul.mubr.f32.gmra.mrb[0].mxu0 %v2208
  %v2291 = vpop.f32.mrb[0].mxu0
  %v2292 = vadd.f32 0.0, %v2291
  %v2293 = vpop.f32.mrb[0].mxu0
  %v2294 = vadd.f32 0.0, %v2293
  %2295 = vmatprep.mubr.f32.mxu0 0.0
  %2296 = vmatmul.mubr.f32.gmra.mrb[0].mxu0 %v2211
  %v2297 = vpop.f32.mrb[0].mxu0
  %v2298 = vadd.f32 0.0, %v2297
  %v2299 = vpop.f32.mrb[0].mxu0
  %v2300 = vadd.f32 0.0, %v2299
  %2301 = vdwg.mxu0
  %v2302 = vadd.f32 %v2185, %v2280
  %v2303 = vadd.f32 %v2186, %v2282
  %v2304 = vadd.f32 %v2187, %v2286
  %v2305 = vadd.f32 %v2188, %v2288
  %v2306 = vadd.f32 %v2189, %v2292
  %v2307 = vadd.f32 %v2190, %v2294
  %v2308 = vadd.f32 %v2191, %v2298
  %v2309 = vadd.f32 %v2192, %v2300
  %2311 = vset.pattern.permute.xlu0 0
  %2312 = vperm.xlu0 %2311, %v129
  %v2313 = vpop.permute.xlu0 %2312
  %2316 = vset.pattern.permute.xlu0 0
  %2317 = vperm.xlu0 %2316, %v130
  %v2318 = vpop.permute.xlu0 %2317
  %2321 = vset.pattern.permute.xlu0 0
  %2322 = vperm.xlu0 %2321, %v131
  %v2323 = vpop.permute.xlu0 %2322
  %2326 = vset.pattern.permute.xlu0 0
  %2327 = vperm.xlu0 %2326, %v132
  %v2328 = vpop.permute.xlu0 %2327
  %v2330 = vadd.f32 %v2302, %v2313
  %v2331 = vadd.f32 %v2303, %v2313
  %v2332 = vadd.f32 %v2304, %v2318
  %v2333 = vadd.f32 %v2305, %v2318
  %v2334 = vadd.f32 %v2306, %v2323
  %v2335 = vadd.f32 %v2307, %v2323
  %v2336 = vadd.f32 %v2308, %v2328
  %v2337 = vadd.f32 %v2309, %v2328
  %v2338 = vxor.u32 %v2330, 2147483648
  %v2339 = vxor.u32 %v2331, 2147483648
  %v2340 = vmul.f32 %v2338, 1.442695
  %v2341 = vpow.pop %v2340
  %v2342 = vmul.f32 %v2339, 1.442695
  %v2343 = vpow.pop %v2342
  %v2344 = vadd.f32 %v2341, 1.0
  %v2345 = vadd.f32 %v2343, 1.0
  %v2346 = vrcp.pop %v2344
  %v2347 = vmul.f32 1.0, %v2346
  %v2348 = vrcp.pop %v2345
  %v2349 = vmul.f32 1.0, %v2348
  %v2350 = vxor.u32 %v2332, 2147483648
  %v2351 = vxor.u32 %v2333, 2147483648
  %v2352 = vmul.f32 %v2350, 1.442695
  %v2353 = vpow.pop %v2352
  %v2354 = vmul.f32 %v2351, 1.442695
  %v2355 = vpow.pop %v2354
  %v2356 = vadd.f32 %v2353, 1.0
  %v2357 = vadd.f32 %v2355, 1.0
  %v2358 = vrcp.pop %v2356
  %v2359 = vmul.f32 1.0, %v2358
  %v2360 = vrcp.pop %v2357
  %v2361 = vmul.f32 1.0, %v2360
  %v2362 = vxor.u32 %v2334, 2147483648
  %v2363 = vxor.u32 %v2335, 2147483648
  %v2364 = vmul.f32 %v2362, 1.442695
  %v2365 = vpow.pop %v2364
  %v2366 = vmul.f32 %v2363, 1.442695
  %v2367 = vpow.pop %v2366
  %v2368 = vadd.f32 %v2365, 1.0
  %v2369 = vadd.f32 %v2367, 1.0
  %v2370 = vrcp.pop %v2368
  %v2371 = vmul.f32 1.0, %v2370
  %v2372 = vrcp.pop %v2369
  %v2373 = vmul.f32 1.0, %v2372
  %v2374 = vtanh.pop %v2336
  %v2375 = vtanh.pop %v2337
  %v2376 = vld [vmem:[%s2] sm:$0xff]
  %v2377 = vld [vmem:[%s2 + $0x8] sm:$0xff]
  %v2378 = vmul.f32 %v2359, %v2376
  %v2379 = vmul.f32 %v2361, %v2377
  %v2380 = vmul.f32 %v2347, %v2374
  %v2381 = vmul.f32 %v2349, %v2375
  %v2382 = vadd.f32 %v2378, %v2380
  %v2383 = vadd.f32 %v2379, %v2381
  %v2384 = vtanh.pop %v2382
  %v2385 = vtanh.pop %v2383
  %v2386 = vmul.f32 %v2371, %v2384
  %v2387 = vmul.f32 %v2373, %v2385
  %2388 = vst [vmem:[%s8] sm:$0xff] %v2386
  %2389 = vst [vmem:[%s8 + $0x8] sm:$0xff] %v2387
  %2390 = vst [vmem:[%s9] sm:$0xff] %v2382
  %2391 = vst [vmem:[%s9 + $0x8] sm:$0xff] %v2383
  %s2392 = scalar_lea.vmem %s0, 16
  %v2393 = vld [vmem:[%s2392] sm:$0xff]
  %v2394 = vld [vmem:[%s2392 + $0x8] sm:$0xff]
  %s2395 = scalar_lea.vmem %s1, 16
  %v2396 = vld [vmem:[%s2395] sm:$0xff]
  %v2397 = vld [vmem:[%s2395 + $0x8] sm:$0xff]
  %2398 = vrot.lane.b32.xlu0 %v2393, 17
  %v2399 = vpop.permute.xlu0 %2398
  %2400 = vrot.lane.b32.xlu0 %v2394, 17
  %v2401 = vpop.permute.xlu0 %2400
  %v2402 = vsel %vm143, %v2399, %v2401
  %v2403 = vsel %vm143, %v2401, %v2399
  %v2404 = vsel %vm155, %v2403, 0.0
  %v2405 = vsel %vm156, %v2402, 0.0
  %2406 = vrot.lane.b32.xlu0 %v2396, 17
  %v2407 = vpop.permute.xlu0 %2406
  %2408 = vrot.lane.b32.xlu0 %v2397, 17
  %v2409 = vpop.permute.xlu0 %2408
  %v2410 = vsel %vm143, %v2407, %v2409
  %v2411 = vsel %vm143, %v2409, %v2407
  %v2412 = vsel %vm155, %v2411, 0.0
  %v2413 = vsel %vm156, %v2410, 0.0
  %2414 = vmatprep.subr.mxu0 %v2413
  %2415 = vmatpush1.msra.mxu0 %v2412
  %2416 = vmatprep.subr.mxu0 0.0
  %2417 = vmatpush1.msra.mxu0 0.0
  %2418 = vmatprep.subr.mxu0 0.0
  %2419 = vmatpush1.msra.mxu0 0.0
  %2420 = vmatprep.subr.mxu0 0.0
  %2421 = vmatpush1.msra.mxu0 0.0
  %2422 = vmatprep.subr.mxu0 0.0
  %2423 = vmatpush1.msra.mxu0 0.0
  %2424 = vmatprep.subr.mxu0 0.0
  %2425 = vmatpush1.msra.mxu0 0.0
  %2426 = vmatprep.subr.mxu0 0.0
  %2427 = vmatpush1.msra.mxu0 0.0
  %2428 = vmatprep.subr.mxu0 0.0
  %2429 = vmatpush1.msra.mxu0 0.0
  %2430 = vmatprep.subr.mxu0 0.0
  %2431 = vmatpush1.msra.mxu0 0.0
  %2432 = vmatprep.subr.mxu0 0.0
  %2433 = vmatpush1.msra.mxu0 0.0
  %2434 = vmatprep.subr.mxu0 0.0
  %2435 = vmatpush1.msra.mxu0 0.0
  %2436 = vmatprep.subr.mxu0 0.0
  %2437 = vmatpush1.msra.mxu0 0.0
  %2438 = vmatprep.subr.mxu0 0.0
  %2439 = vmatpush1.msra.mxu0 0.0
  %2440 = vmatprep.subr.mxu0 0.0
  %2441 = vmatpush1.msra.mxu0 0.0
  %2442 = vmatprep.subr.mxu0 0.0
  %2443 = vmatpush1.msra.mxu0 0.0
  %2444 = vmatprep.subr.mxu0 0.0
  %2445 = vmatpush1.msra.mxu0 0.0
  %2446 = vmatprep.subr.mxu0 0.0
  %2447 = vmatpush1.msra.mxu0 0.0
  %2448 = vmatprep.subr.mxu0 0.0
  %2449 = vmatpush1.msra.mxu0 0.0
  %2450 = vmatprep.subr.mxu0 0.0
  %2451 = vmatpush1.msra.mxu0 0.0
  %2452 = vmatprep.subr.mxu0 0.0
  %2453 = vmatpush1.msra.mxu0 0.0
  %2454 = vmatprep.subr.mxu0 0.0
  %2455 = vmatpush1.msra.mxu0 0.0
  %2456 = vmatprep.subr.mxu0 0.0
  %2457 = vmatpush1.msra.mxu0 0.0
  %2458 = vmatprep.subr.mxu0 0.0
  %2459 = vmatpush1.msra.mxu0 0.0
  %2460 = vmatprep.subr.mxu0 0.0
  %2461 = vmatpush1.msra.mxu0 0.0
  %2462 = vmatprep.subr.mxu0 0.0
  %2463 = vmatpush1.msra.mxu0 0.0
  %2464 = vmatprep.subr.mxu0 0.0
  %2465 = vmatpush1.msra.mxu0 0.0
  %2466 = vmatprep.subr.mxu0 0.0
  %2467 = vmatpush1.msra.mxu0 0.0
  %2468 = vmatprep.subr.mxu0 0.0
  %2469 = vmatpush1.msra.mxu0 0.0
  %2470 = vmatprep.subr.mxu0 0.0
  %2471 = vmatpush1.msra.mxu0 0.0
  %2472 = vmatprep.subr.mxu0 0.0
  %2473 = vmatpush1.msra.mxu0 0.0
  %2474 = vmatprep.subr.mxu0 0.0
  %2475 = vmatpush1.msra.mxu0 0.0
  %2476 = vmatprep.subr.mxu0 0.0
  %2477 = vmatpush1.msra.mxu0 0.0
  %2478 = vmatprep.mubr.f32.mxu0 0.0
  %2479 = vmatmul.mubr.f32.gmra.mrb[0].mxu0 %v169
  %v2480 = vpop.f32.mrb[0].mxu0
  %v2481 = vadd.f32 0.0, %v2480
  %v2482 = vpop.f32.mrb[0].mxu0
  %v2483 = vadd.f32 0.0, %v2482
  %2484 = vmatprep.mubr.f32.mxu0 0.0
  %2485 = vmatmul.mubr.f32.gmra.mrb[0].mxu0 %v172
  %v2486 = vpop.f32.mrb[0].mxu0
  %v2487 = vadd.f32 0.0, %v2486
  %v2488 = vpop.f32.mrb[0].mxu0
  %v2489 = vadd.f32 0.0, %v2488
  %2490 = vmatprep.mubr.f32.mxu0 0.0
  %2491 = vmatmul.mubr.f32.gmra.mrb[0].mxu0 %v175
  %v2492 = vpop.f32.mrb[0].mxu0
  %v2493 = vadd.f32 0.0, %v2492
  %v2494 = vpop.f32.mrb[0].mxu0
  %v2495 = vadd.f32 0.0, %v2494
  %2496 = vmatprep.mubr.f32.mxu0 0.0
  %2497 = vmatmul.mubr.f32.gmra.mrb[0].mxu0 %v178
  %v2498 = vpop.f32.mrb[0].mxu0
  %v2499 = vadd.f32 0.0, %v2498
  %v2500 = vpop.f32.mrb[0].mxu0
  %v2501 = vadd.f32 0.0, %v2500
  %2502 = vdwg.mxu0
  %2503 = vmatprep.subr.mxu0 %v2405
  %2504 = vmatpush1.msra.mxu0 %v2404
  %2505 = vmatprep.subr.mxu0 0.0
  %2506 = vmatpush1.msra.mxu0 0.0
  %2507 = vmatprep.subr.mxu0 0.0
  %2508 = vmatpush1.msra.mxu0 0.0
  %2509 = vmatprep.subr.mxu0 0.0
  %2510 = vmatpush1.msra.mxu0 0.0
  %2511 = vmatprep.subr.mxu0 0.0
  %2512 = vmatpush1.msra.mxu0 0.0
  %2513 = vmatprep.subr.mxu0 0.0
  %2514 = vmatpush1.msra.mxu0 0.0
  %2515 = vmatprep.subr.mxu0 0.0
  %2516 = vmatpush1.msra.mxu0 0.0
  %2517 = vmatprep.subr.mxu0 0.0
  %2518 = vmatpush1.msra.mxu0 0.0
  %2519 = vmatprep.subr.mxu0 0.0
  %2520 = vmatpush1.msra.mxu0 0.0
  %2521 = vmatprep.subr.mxu0 0.0
  %2522 = vmatpush1.msra.mxu0 0.0
  %2523 = vmatprep.subr.mxu0 0.0
  %2524 = vmatpush1.msra.mxu0 0.0
  %2525 = vmatprep.subr.mxu0 0.0
  %2526 = vmatpush1.msra.mxu0 0.0
  %2527 = vmatprep.subr.mxu0 0.0
  %2528 = vmatpush1.msra.mxu0 0.0
  %2529 = vmatprep.subr.mxu0 0.0
  %2530 = vmatpush1.msra.mxu0 0.0
  %2531 = vmatprep.subr.mxu0 0.0
  %2532 = vmatpush1.msra.mxu0 0.0
  %2533 = vmatprep.subr.mxu0 0.0
  %2534 = vmatpush1.msra.mxu0 0.0
  %2535 = vmatprep.subr.mxu0 0.0
  %2536 = vmatpush1.msra.mxu0 0.0
  %2537 = vmatprep.subr.mxu0 0.0
  %2538 = vmatpush1.msra.mxu0 0.0
  %2539 = vmatprep.subr.mxu0 0.0
  %2540 = vmatpush1.msra.mxu0 0.0
  %2541 = vmatprep.subr.mxu0 0.0
  %2542 = vmatpush1.msra.mxu0 0.0
  %2543 = vmatprep.subr.mxu0 0.0
  %2544 = vmatpush1.msra.mxu0 0.0
  %2545 = vmatprep.subr.mxu0 0.0
  %2546 = vmatpush1.msra.mxu0 0.0
  %2547 = vmatprep.subr.mxu0 0.0
  %2548 = vmatpush1.msra.mxu0 0.0
  %2549 = vmatprep.subr.mxu0 0.0
  %2550 = vmatpush1.msra.mxu0 0.0
  %2551 = vmatprep.subr.mxu0 0.0
  %2552 = vmatpush1.msra.mxu0 0.0
  %2553 = vmatprep.subr.mxu0 0.0
  %2554 = vmatpush1.msra.mxu0 0.0
  %2555 = vmatprep.subr.mxu0 0.0
  %2556 = vmatpush1.msra.mxu0 0.0
  %2557 = vmatprep.subr.mxu0 0.0
  %2558 = vmatpush1.msra.mxu0 0.0
  %2559 = vmatprep.subr.mxu0 0.0
  %2560 = vmatpush1.msra.mxu0 0.0
  %2561 = vmatprep.subr.mxu0 0.0
  %2562 = vmatpush1.msra.mxu0 0.0
  %2563 = vmatprep.subr.mxu0 0.0
  %2564 = vmatpush1.msra.mxu0 0.0
  %2565 = vmatprep.subr.mxu0 0.0
  %2566 = vmatpush1.msra.mxu0 0.0
  %2567 = vmatprep.mubr.f32.mxu0 0.0
  %2568 = vmatmul.mubr.f32.gmra.mrb[0].mxu0 %v270
  %v2569 = vpop.f32.mrb[0].mxu0
  %v2570 = vadd.f32 %v2481, %v2569
  %v2571 = vpop.f32.mrb[0].mxu0
  %v2572 = vadd.f32 %v2483, %v2571
  %2573 = vmatprep.mubr.f32.mxu0 0.0
  %2574 = vmatmul.mubr.f32.gmra.mrb[0].mxu0 %v273
  %v2575 = vpop.f32.mrb[0].mxu0
  %v2576 = vadd.f32 %v2487, %v2575
  %v2577 = vpop.f32.mrb[0].mxu0
  %v2578 = vadd.f32 %v2489, %v2577
  %2579 = vmatprep.mubr.f32.mxu0 0.0
  %2580 = vmatmul.mubr.f32.gmra.mrb[0].mxu0 %v276
  %v2581 = vpop.f32.mrb[0].mxu0
  %v2582 = vadd.f32 %v2493, %v2581
  %v2583 = vpop.f32.mrb[0].mxu0
  %v2584 = vadd.f32 %v2495, %v2583
  %2585 = vmatprep.mubr.f32.mxu0 0.0
  %2586 = vmatmul.mubr.f32.gmra.mrb[0].mxu0 %v279
  %v2587 = vpop.f32.mrb[0].mxu0
  %v2588 = vadd.f32 %v2499, %v2587
  %v2589 = vpop.f32.mrb[0].mxu0
  %v2590 = vadd.f32 %v2501, %v2589
  %2591 = vdwg.mxu0
  %2592 = vrot.lane.b32.xlu0 %v2393, 16
  %v2593 = vpop.permute.xlu0 %2592
  %2594 = vrot.lane.b32.xlu0 %v2394, 16
  %v2595 = vpop.permute.xlu0 %2594
  %v2596 = vsel %vm374, %v2593, %v2595
  %v2597 = vsel %vm374, %v2595, %v2593
  %v2598 = vsel %vm386, %v2597, 0.0
  %v2599 = vsel %vm387, %v2596, 0.0
  %2600 = vmatprep.subr.mxu0 %v2599
  %2601 = vmatpush1.msra.mxu0 %v2598
  %2602 = vmatprep.subr.mxu0 0.0
  %2603 = vmatpush1.msra.mxu0 0.0
  %2604 = vmatprep.subr.mxu0 0.0
  %2605 = vmatpush1.msra.mxu0 0.0
  %2606 = vmatprep.subr.mxu0 0.0
  %2607 = vmatpush1.msra.mxu0 0.0
  %2608 = vmatprep.subr.mxu0 0.0
  %2609 = vmatpush1.msra.mxu0 0.0
  %2610 = vmatprep.subr.mxu0 0.0
  %2611 = vmatpush1.msra.mxu0 0.0
  %2612 = vmatprep.subr.mxu0 0.0
  %2613 = vmatpush1.msra.mxu0 0.0
  %2614 = vmatprep.subr.mxu0 0.0
  %2615 = vmatpush1.msra.mxu0 0.0
  %2616 = vmatprep.subr.mxu0 0.0
  %2617 = vmatpush1.msra.mxu0 0.0
  %2618 = vmatprep.subr.mxu0 0.0
  %2619 = vmatpush1.msra.mxu0 0.0
  %2620 = vmatprep.subr.mxu0 0.0
  %2621 = vmatpush1.msra.mxu0 0.0
  %2622 = vmatprep.subr.mxu0 0.0
  %2623 = vmatpush1.msra.mxu0 0.0
  %2624 = vmatprep.subr.mxu0 0.0
  %2625 = vmatpush1.msra.mxu0 0.0
  %2626 = vmatprep.subr.mxu0 0.0
  %2627 = vmatpush1.msra.mxu0 0.0
  %2628 = vmatprep.subr.mxu0 0.0
  %2629 = vmatpush1.msra.mxu0 0.0
  %2630 = vmatprep.subr.mxu0 0.0
  %2631 = vmatpush1.msra.mxu0 0.0
  %2632 = vmatprep.subr.mxu0 0.0
  %2633 = vmatpush1.msra.mxu0 0.0
  %2634 = vmatprep.subr.mxu0 0.0
  %2635 = vmatpush1.msra.mxu0 0.0
  %2636 = vmatprep.subr.mxu0 0.0
  %2637 = vmatpush1.msra.mxu0 0.0
  %2638 = vmatprep.subr.mxu0 0.0
  %2639 = vmatpush1.msra.mxu0 0.0
  %2640 = vmatprep.subr.mxu0 0.0
  %2641 = vmatpush1.msra.mxu0 0.0
  %2642 = vmatprep.subr.mxu0 0.0
  %2643 = vmatpush1.msra.mxu0 0.0
  %2644 = vmatprep.subr.mxu0 0.0
  %2645 = vmatpush1.msra.mxu0 0.0
  %2646 = vmatprep.subr.mxu0 0.0
  %2647 = vmatpush1.msra.mxu0 0.0
  %2648 = vmatprep.subr.mxu0 0.0
  %2649 = vmatpush1.msra.mxu0 0.0
  %2650 = vmatprep.subr.mxu0 0.0
  %2651 = vmatpush1.msra.mxu0 0.0
  %2652 = vmatprep.subr.mxu0 0.0
  %2653 = vmatpush1.msra.mxu0 0.0
  %2654 = vmatprep.subr.mxu0 0.0
  %2655 = vmatpush1.msra.mxu0 0.0
  %2656 = vmatprep.subr.mxu0 0.0
  %2657 = vmatpush1.msra.mxu0 0.0
  %2658 = vmatprep.subr.mxu0 0.0
  %2659 = vmatpush1.msra.mxu0 0.0
  %2660 = vmatprep.subr.mxu0 0.0
  %2661 = vmatpush1.msra.mxu0 0.0
  %2662 = vmatprep.subr.mxu0 0.0
  %2663 = vmatpush1.msra.mxu0 0.0
  %2664 = vmatprep.mubr.f32.mxu0 0.0
  %2665 = vmatmul.mubr.f32.gmra.mrb[0].mxu0 %v391
  %v2666 = vpop.f32.mrb[0].mxu0
  %v2667 = vadd.f32 0.0, %v2666
  %v2668 = vpop.f32.mrb[0].mxu0
  %v2669 = vadd.f32 0.0, %v2668
  %2670 = vmatprep.mubr.f32.mxu0 0.0
  %2671 = vmatmul.mubr.f32.gmra.mrb[0].mxu0 %v394
  %v2672 = vpop.f32.mrb[0].mxu0
  %v2673 = vadd.f32 0.0, %v2672
  %v2674 = vpop.f32.mrb[0].mxu0
  %v2675 = vadd.f32 0.0, %v2674
  %2676 = vmatprep.mubr.f32.mxu0 0.0
  %2677 = vmatmul.mubr.f32.gmra.mrb[0].mxu0 %v397
  %v2678 = vpop.f32.mrb[0].mxu0
  %v2679 = vadd.f32 0.0, %v2678
  %v2680 = vpop.f32.mrb[0].mxu0
  %v2681 = vadd.f32 0.0, %v2680
  %2682 = vmatprep.mubr.f32.mxu0 0.0
  %2683 = vmatmul.mubr.f32.gmra.mrb[0].mxu0 %v400
  %v2684 = vpop.f32.mrb[0].mxu0
  %v2685 = vadd.f32 0.0, %v2684
  %v2686 = vpop.f32.mrb[0].mxu0
  %v2687 = vadd.f32 0.0, %v2686
  %2688 = vdwg.mxu0
  %v2689 = vadd.f32 %v2570, %v2667
  %v2690 = vadd.f32 %v2572, %v2669
  %v2691 = vadd.f32 %v2576, %v2673
  %v2692 = vadd.f32 %v2578, %v2675
  %v2693 = vadd.f32 %v2582, %v2679
  %v2694 = vadd.f32 %v2584, %v2681
  %v2695 = vadd.f32 %v2588, %v2685
  %v2696 = vadd.f32 %v2590, %v2687
  %2697 = vrot.lane.b32.xlu0 %v2396, 16
  %v2698 = vpop.permute.xlu0 %2697
  %2699 = vrot.lane.b32.xlu0 %v2397, 16
  %v2700 = vpop.permute.xlu0 %2699
  %v2701 = vsel %vm374, %v2698, %v2700
  %v2702 = vsel %vm374, %v2700, %v2698
  %v2703 = vsel %vm386, %v2702, 0.0
  %v2704 = vsel %vm387, %v2701, 0.0
  %2705 = vmatprep.subr.mxu0 %v2704
  %2706 = vmatpush1.msra.mxu0 %v2703
  %2707 = vmatprep.subr.mxu0 0.0
  %2708 = vmatpush1.msra.mxu0 0.0
  %2709 = vmatprep.subr.mxu0 0.0
  %2710 = vmatpush1.msra.mxu0 0.0
  %2711 = vmatprep.subr.mxu0 0.0
  %2712 = vmatpush1.msra.mxu0 0.0
  %2713 = vmatprep.subr.mxu0 0.0
  %2714 = vmatpush1.msra.mxu0 0.0
  %2715 = vmatprep.subr.mxu0 0.0
  %2716 = vmatpush1.msra.mxu0 0.0
  %2717 = vmatprep.subr.mxu0 0.0
  %2718 = vmatpush1.msra.mxu0 0.0
  %2719 = vmatprep.subr.mxu0 0.0
  %2720 = vmatpush1.msra.mxu0 0.0
  %2721 = vmatprep.subr.mxu0 0.0
  %2722 = vmatpush1.msra.mxu0 0.0
  %2723 = vmatprep.subr.mxu0 0.0
  %2724 = vmatpush1.msra.mxu0 0.0
  %2725 = vmatprep.subr.mxu0 0.0
  %2726 = vmatpush1.msra.mxu0 0.0
  %2727 = vmatprep.subr.mxu0 0.0
  %2728 = vmatpush1.msra.mxu0 0.0
  %2729 = vmatprep.subr.mxu0 0.0
  %2730 = vmatpush1.msra.mxu0 0.0
  %2731 = vmatprep.subr.mxu0 0.0
  %2732 = vmatpush1.msra.mxu0 0.0
  %2733 = vmatprep.subr.mxu0 0.0
  %2734 = vmatpush1.msra.mxu0 0.0
  %2735 = vmatprep.subr.mxu0 0.0
  %2736 = vmatpush1.msra.mxu0 0.0
  %2737 = vmatprep.subr.mxu0 0.0
  %2738 = vmatpush1.msra.mxu0 0.0
  %2739 = vmatprep.subr.mxu0 0.0
  %2740 = vmatpush1.msra.mxu0 0.0
  %2741 = vmatprep.subr.mxu0 0.0
  %2742 = vmatpush1.msra.mxu0 0.0
  %2743 = vmatprep.subr.mxu0 0.0
  %2744 = vmatpush1.msra.mxu0 0.0
  %2745 = vmatprep.subr.mxu0 0.0
  %2746 = vmatpush1.msra.mxu0 0.0
  %2747 = vmatprep.subr.mxu0 0.0
  %2748 = vmatpush1.msra.mxu0 0.0
  %2749 = vmatprep.subr.mxu0 0.0
  %2750 = vmatpush1.msra.mxu0 0.0
  %2751 = vmatprep.subr.mxu0 0.0
  %2752 = vmatpush1.msra.mxu0 0.0
  %2753 = vmatprep.subr.mxu0 0.0
  %2754 = vmatpush1.msra.mxu0 0.0
  %2755 = vmatprep.subr.mxu0 0.0
  %2756 = vmatpush1.msra.mxu0 0.0
  %2757 = vmatprep.subr.mxu0 0.0
  %2758 = vmatpush1.msra.mxu0 0.0
  %2759 = vmatprep.subr.mxu0 0.0
  %2760 = vmatpush1.msra.mxu0 0.0
  %2761 = vmatprep.subr.mxu0 0.0
  %2762 = vmatpush1.msra.mxu0 0.0
  %2763 = vmatprep.subr.mxu0 0.0
  %2764 = vmatpush1.msra.mxu0 0.0
  %2765 = vmatprep.subr.mxu0 0.0
  %2766 = vmatpush1.msra.mxu0 0.0
  %2767 = vmatprep.subr.mxu0 0.0
  %2768 = vmatpush1.msra.mxu0 0.0
  %2769 = vmatprep.mubr.f32.mxu0 0.0
  %2770 = vmatmul.mubr.f32.gmra.mrb[0].mxu0 %v508
  %v2771 = vpop.f32.mrb[0].mxu0
  %v2772 = vadd.f32 0.0, %v2771
  %v2773 = vpop.f32.mrb[0].mxu0
  %v2774 = vadd.f32 0.0, %v2773
  %2775 = vmatprep.mubr.f32.mxu0 0.0
  %2776 = vmatmul.mubr.f32.gmra.mrb[0].mxu0 %v511
  %v2777 = vpop.f32.mrb[0].mxu0
  %v2778 = vadd.f32 0.0, %v2777
  %v2779 = vpop.f32.mrb[0].mxu0
  %v2780 = vadd.f32 0.0, %v2779
  %2781 = vmatprep.mubr.f32.mxu0 0.0
  %2782 = vmatmul.mubr.f32.gmra.mrb[0].mxu0 %v514
  %v2783 = vpop.f32.mrb[0].mxu0
  %v2784 = vadd.f32 0.0, %v2783
  %v2785 = vpop.f32.mrb[0].mxu0
  %v2786 = vadd.f32 0.0, %v2785
  %2787 = vmatprep.mubr.f32.mxu0 0.0
  %2788 = vmatmul.mubr.f32.gmra.mrb[0].mxu0 %v517
  %v2789 = vpop.f32.mrb[0].mxu0
  %v2790 = vadd.f32 0.0, %v2789
  %v2791 = vpop.f32.mrb[0].mxu0
  %v2792 = vadd.f32 0.0, %v2791
  %2793 = vdwg.mxu0
  %v2794 = vadd.f32 %v2689, %v2772
  %v2795 = vadd.f32 %v2690, %v2774
  %v2796 = vadd.f32 %v2691, %v2778
  %v2797 = vadd.f32 %v2692, %v2780
  %v2798 = vadd.f32 %v2693, %v2784
  %v2799 = vadd.f32 %v2694, %v2786
  %v2800 = vadd.f32 %v2695, %v2790
  %v2801 = vadd.f32 %v2696, %v2792
  %2802 = vrot.lane.b32.xlu0 %v2393, 15
  %v2803 = vpop.permute.xlu0 %2802
  %2804 = vrot.lane.b32.xlu0 %v2394, 15
  %v2805 = vpop.permute.xlu0 %2804
  %v2806 = vsel %vm620, %v2803, %v2805
  %v2807 = vsel %vm620, %v2805, %v2803
  %v2808 = vsel %vm632, %v2807, 0.0
  %v2809 = vsel %vm633, %v2806, 0.0
  %2810 = vmatprep.subr.mxu0 %v2809
  %2811 = vmatpush1.msra.mxu0 %v2808
  %2812 = vmatprep.subr.mxu0 0.0
  %2813 = vmatpush1.msra.mxu0 0.0
  %2814 = vmatprep.subr.mxu0 0.0
  %2815 = vmatpush1.msra.mxu0 0.0
  %2816 = vmatprep.subr.mxu0 0.0
  %2817 = vmatpush1.msra.mxu0 0.0
  %2818 = vmatprep.subr.mxu0 0.0
  %2819 = vmatpush1.msra.mxu0 0.0
  %2820 = vmatprep.subr.mxu0 0.0
  %2821 = vmatpush1.msra.mxu0 0.0
  %2822 = vmatprep.subr.mxu0 0.0
  %2823 = vmatpush1.msra.mxu0 0.0
  %2824 = vmatprep.subr.mxu0 0.0
  %2825 = vmatpush1.msra.mxu0 0.0
  %2826 = vmatprep.subr.mxu0 0.0
  %2827 = vmatpush1.msra.mxu0 0.0
  %2828 = vmatprep.subr.mxu0 0.0
  %2829 = vmatpush1.msra.mxu0 0.0
  %2830 = vmatprep.subr.mxu0 0.0
  %2831 = vmatpush1.msra.mxu0 0.0
  %2832 = vmatprep.subr.mxu0 0.0
  %2833 = vmatpush1.msra.mxu0 0.0
  %2834 = vmatprep.subr.mxu0 0.0
  %2835 = vmatpush1.msra.mxu0 0.0
  %2836 = vmatprep.subr.mxu0 0.0
  %2837 = vmatpush1.msra.mxu0 0.0
  %2838 = vmatprep.subr.mxu0 0.0
  %2839 = vmatpush1.msra.mxu0 0.0
  %2840 = vmatprep.subr.mxu0 0.0
  %2841 = vmatpush1.msra.mxu0 0.0
  %2842 = vmatprep.subr.mxu0 0.0
  %2843 = vmatpush1.msra.mxu0 0.0
  %2844 = vmatprep.subr.mxu0 0.0
  %2845 = vmatpush1.msra.mxu0 0.0
  %2846 = vmatprep.subr.mxu0 0.0
  %2847 = vmatpush1.msra.mxu0 0.0
  %2848 = vmatprep.subr.mxu0 0.0
  %2849 = vmatpush1.msra.mxu0 0.0
  %2850 = vmatprep.subr.mxu0 0.0
  %2851 = vmatpush1.msra.mxu0 0.0
  %2852 = vmatprep.subr.mxu0 0.0
  %2853 = vmatpush1.msra.mxu0 0.0
  %2854 = vmatprep.subr.mxu0 0.0
  %2855 = vmatpush1.msra.mxu0 0.0
  %2856 = vmatprep.subr.mxu0 0.0
  %2857 = vmatpush1.msra.mxu0 0.0
  %2858 = vmatprep.subr.mxu0 0.0
  %2859 = vmatpush1.msra.mxu0 0.0
  %2860 = vmatprep.subr.mxu0 0.0
  %2861 = vmatpush1.msra.mxu0 0.0
  %2862 = vmatprep.subr.mxu0 0.0
  %2863 = vmatpush1.msra.mxu0 0.0
  %2864 = vmatprep.subr.mxu0 0.0
  %2865 = vmatpush1.msra.mxu0 0.0
  %2866 = vmatprep.subr.mxu0 0.0
  %2867 = vmatpush1.msra.mxu0 0.0
  %2868 = vmatprep.subr.mxu0 0.0
  %2869 = vmatpush1.msra.mxu0 0.0
  %2870 = vmatprep.subr.mxu0 0.0
  %2871 = vmatpush1.msra.mxu0 0.0
  %2872 = vmatprep.subr.mxu0 0.0
  %2873 = vmatpush1.msra.mxu0 0.0
  %2874 = vmatprep.mubr.f32.mxu0 0.0
  %2875 = vmatmul.mubr.f32.gmra.mrb[0].mxu0 %v637
  %v2876 = vpop.f32.mrb[0].mxu0
  %v2877 = vadd.f32 0.0, %v2876
  %v2878 = vpop.f32.mrb[0].mxu0
  %v2879 = vadd.f32 0.0, %v2878
  %2880 = vmatprep.mubr.f32.mxu0 0.0
  %2881 = vmatmul.mubr.f32.gmra.mrb[0].mxu0 %v640
  %v2882 = vpop.f32.mrb[0].mxu0
  %v2883 = vadd.f32 0.0, %v2882
  %v2884 = vpop.f32.mrb[0].mxu0
  %v2885 = vadd.f32 0.0, %v2884
  %2886 = vmatprep.mubr.f32.mxu0 0.0
  %2887 = vmatmul.mubr.f32.gmra.mrb[0].mxu0 %v643
  %v2888 = vpop.f32.mrb[0].mxu0
  %v2889 = vadd.f32 0.0, %v2888
  %v2890 = vpop.f32.mrb[0].mxu0
  %v2891 = vadd.f32 0.0, %v2890
  %2892 = vmatprep.mubr.f32.mxu0 0.0
  %2893 = vmatmul.mubr.f32.gmra.mrb[0].mxu0 %v646
  %v2894 = vpop.f32.mrb[0].mxu0
  %v2895 = vadd.f32 0.0, %v2894
  %v2896 = vpop.f32.mrb[0].mxu0
  %v2897 = vadd.f32 0.0, %v2896
  %2898 = vdwg.mxu0
  %v2899 = vadd.f32 %v2794, %v2877
  %v2900 = vadd.f32 %v2795, %v2879
  %v2901 = vadd.f32 %v2796, %v2883
  %v2902 = vadd.f32 %v2797, %v2885
  %v2903 = vadd.f32 %v2798, %v2889
  %v2904 = vadd.f32 %v2799, %v2891
  %v2905 = vadd.f32 %v2800, %v2895
  %v2906 = vadd.f32 %v2801, %v2897
  %2907 = vrot.lane.b32.xlu0 %v2396, 15
  %v2908 = vpop.permute.xlu0 %2907
  %2909 = vrot.lane.b32.xlu0 %v2397, 15
  %v2910 = vpop.permute.xlu0 %2909
  %v2911 = vsel %vm620, %v2908, %v2910
  %v2912 = vsel %vm620, %v2910, %v2908
  %v2913 = vsel %vm632, %v2912, 0.0
  %v2914 = vsel %vm633, %v2911, 0.0
  %2915 = vmatprep.subr.mxu0 %v2914
  %2916 = vmatpush1.msra.mxu0 %v2913
  %2917 = vmatprep.subr.mxu0 0.0
  %2918 = vmatpush1.msra.mxu0 0.0
  %2919 = vmatprep.subr.mxu0 0.0
  %2920 = vmatpush1.msra.mxu0 0.0
  %2921 = vmatprep.subr.mxu0 0.0
  %2922 = vmatpush1.msra.mxu0 0.0
  %2923 = vmatprep.subr.mxu0 0.0
  %2924 = vmatpush1.msra.mxu0 0.0
  %2925 = vmatprep.subr.mxu0 0.0
  %2926 = vmatpush1.msra.mxu0 0.0
  %2927 = vmatprep.subr.mxu0 0.0
  %2928 = vmatpush1.msra.mxu0 0.0
  %2929 = vmatprep.subr.mxu0 0.0
  %2930 = vmatpush1.msra.mxu0 0.0
  %2931 = vmatprep.subr.mxu0 0.0
  %2932 = vmatpush1.msra.mxu0 0.0
  %2933 = vmatprep.subr.mxu0 0.0
  %2934 = vmatpush1.msra.mxu0 0.0
  %2935 = vmatprep.subr.mxu0 0.0
  %2936 = vmatpush1.msra.mxu0 0.0
  %2937 = vmatprep.subr.mxu0 0.0
  %2938 = vmatpush1.msra.mxu0 0.0
  %2939 = vmatprep.subr.mxu0 0.0
  %2940 = vmatpush1.msra.mxu0 0.0
  %2941 = vmatprep.subr.mxu0 0.0
  %2942 = vmatpush1.msra.mxu0 0.0
  %2943 = vmatprep.subr.mxu0 0.0
  %2944 = vmatpush1.msra.mxu0 0.0
  %2945 = vmatprep.subr.mxu0 0.0
  %2946 = vmatpush1.msra.mxu0 0.0
  %2947 = vmatprep.subr.mxu0 0.0
  %2948 = vmatpush1.msra.mxu0 0.0
  %2949 = vmatprep.subr.mxu0 0.0
  %2950 = vmatpush1.msra.mxu0 0.0
  %2951 = vmatprep.subr.mxu0 0.0
  %2952 = vmatpush1.msra.mxu0 0.0
  %2953 = vmatprep.subr.mxu0 0.0
  %2954 = vmatpush1.msra.mxu0 0.0
  %2955 = vmatprep.subr.mxu0 0.0
  %2956 = vmatpush1.msra.mxu0 0.0
  %2957 = vmatprep.subr.mxu0 0.0
  %2958 = vmatpush1.msra.mxu0 0.0
  %2959 = vmatprep.subr.mxu0 0.0
  %2960 = vmatpush1.msra.mxu0 0.0
  %2961 = vmatprep.subr.mxu0 0.0
  %2962 = vmatpush1.msra.mxu0 0.0
  %2963 = vmatprep.subr.mxu0 0.0
  %2964 = vmatpush1.msra.mxu0 0.0
  %2965 = vmatprep.subr.mxu0 0.0
  %2966 = vmatpush1.msra.mxu0 0.0
  %2967 = vmatprep.subr.mxu0 0.0
  %2968 = vmatpush1.msra.mxu0 0.0
  %2969 = vmatprep.subr.mxu0 0.0
  %2970 = vmatpush1.msra.mxu0 0.0
  %2971 = vmatprep.subr.mxu0 0.0
  %2972 = vmatpush1.msra.mxu0 0.0
  %2973 = vmatprep.subr.mxu0 0.0
  %2974 = vmatpush1.msra.mxu0 0.0
  %2975 = vmatprep.subr.mxu0 0.0
  %2976 = vmatpush1.msra.mxu0 0.0
  %2977 = vmatprep.subr.mxu0 0.0
  %2978 = vmatpush1.msra.mxu0 0.0
  %2979 = vmatprep.mubr.f32.mxu0 0.0
  %2980 = vmatmul.mubr.f32.gmra.mrb[0].mxu0 %v754
  %v2981 = vpop.f32.mrb[0].mxu0
  %v2982 = vadd.f32 0.0, %v2981
  %v2983 = vpop.f32.mrb[0].mxu0
  %v2984 = vadd.f32 0.0, %v2983
  %2985 = vmatprep.mubr.f32.mxu0 0.0
  %2986 = vmatmul.mubr.f32.gmra.mrb[0].mxu0 %v757
  %v2987 = vpop.f32.mrb[0].mxu0
  %v2988 = vadd.f32 0.0, %v2987
  %v2989 = vpop.f32.mrb[0].mxu0
  %v2990 = vadd.f32 0.0, %v2989
  %2991 = vmatprep.mubr.f32.mxu0 0.0
  %2992 = vmatmul.mubr.f32.gmra.mrb[0].mxu0 %v760
  %v2993 = vpop.f32.mrb[0].mxu0
  %v2994 = vadd.f32 0.0, %v2993
  %v2995 = vpop.f32.mrb[0].mxu0
  %v2996 = vadd.f32 0.0, %v2995
  %2997 = vmatprep.mubr.f32.mxu0 0.0
  %2998 = vmatmul.mubr.f32.gmra.mrb[0].mxu0 %v763
  %v2999 = vpop.f32.mrb[0].mxu0
  %v3000 = vadd.f32 0.0, %v2999
  %v3001 = vpop.f32.mrb[0].mxu0
  %v3002 = vadd.f32 0.0, %v3001
  %3003 = vdwg.mxu0
  %v3004 = vadd.f32 %v2899, %v2982
  %v3005 = vadd.f32 %v2900, %v2984
  %v3006 = vadd.f32 %v2901, %v2988
  %v3007 = vadd.f32 %v2902, %v2990
  %v3008 = vadd.f32 %v2903, %v2994
  %v3009 = vadd.f32 %v2904, %v2996
  %v3010 = vadd.f32 %v2905, %v3000
  %v3011 = vadd.f32 %v2906, %v3002
  %3012 = vrot.lane.b32.xlu0 %v2393, 1
  %v3013 = vpop.permute.xlu0 %3012
  %3014 = vrot.lane.b32.xlu0 %v2394, 1
  %v3015 = vpop.permute.xlu0 %3014
  %v3016 = vsel %vm866, %v3013, %v3015
  %v3017 = vsel %vm866, %v3015, %v3013
  %v3018 = vsel %vm878, %v3017, 0.0
  %v3019 = vsel %vm879, %v3016, 0.0
  %3020 = vmatprep.subr.mxu0 %v3019
  %3021 = vmatpush1.msra.mxu0 %v3018
  %3022 = vmatprep.subr.mxu0 0.0
  %3023 = vmatpush1.msra.mxu0 0.0
  %3024 = vmatprep.subr.mxu0 0.0
  %3025 = vmatpush1.msra.mxu0 0.0
  %3026 = vmatprep.subr.mxu0 0.0
  %3027 = vmatpush1.msra.mxu0 0.0
  %3028 = vmatprep.subr.mxu0 0.0
  %3029 = vmatpush1.msra.mxu0 0.0
  %3030 = vmatprep.subr.mxu0 0.0
  %3031 = vmatpush1.msra.mxu0 0.0
  %3032 = vmatprep.subr.mxu0 0.0
  %3033 = vmatpush1.msra.mxu0 0.0
  %3034 = vmatprep.subr.mxu0 0.0
  %3035 = vmatpush1.msra.mxu0 0.0
  %3036 = vmatprep.subr.mxu0 0.0
  %3037 = vmatpush1.msra.mxu0 0.0
  %3038 = vmatprep.subr.mxu0 0.0
  %3039 = vmatpush1.msra.mxu0 0.0
  %3040 = vmatprep.subr.mxu0 0.0
  %3041 = vmatpush1.msra.mxu0 0.0
  %3042 = vmatprep.subr.mxu0 0.0
  %3043 = vmatpush1.msra.mxu0 0.0
  %3044 = vmatprep.subr.mxu0 0.0
  %3045 = vmatpush1.msra.mxu0 0.0
  %3046 = vmatprep.subr.mxu0 0.0
  %3047 = vmatpush1.msra.mxu0 0.0
  %3048 = vmatprep.subr.mxu0 0.0
  %3049 = vmatpush1.msra.mxu0 0.0
  %3050 = vmatprep.subr.mxu0 0.0
  %3051 = vmatpush1.msra.mxu0 0.0
  %3052 = vmatprep.subr.mxu0 0.0
  %3053 = vmatpush1.msra.mxu0 0.0
  %3054 = vmatprep.subr.mxu0 0.0
  %3055 = vmatpush1.msra.mxu0 0.0
  %3056 = vmatprep.subr.mxu0 0.0
  %3057 = vmatpush1.msra.mxu0 0.0
  %3058 = vmatprep.subr.mxu0 0.0
  %3059 = vmatpush1.msra.mxu0 0.0
  %3060 = vmatprep.subr.mxu0 0.0
  %3061 = vmatpush1.msra.mxu0 0.0
  %3062 = vmatprep.subr.mxu0 0.0
  %3063 = vmatpush1.msra.mxu0 0.0
  %3064 = vmatprep.subr.mxu0 0.0
  %3065 = vmatpush1.msra.mxu0 0.0
  %3066 = vmatprep.subr.mxu0 0.0
  %3067 = vmatpush1.msra.mxu0 0.0
  %3068 = vmatprep.subr.mxu0 0.0
  %3069 = vmatpush1.msra.mxu0 0.0
  %3070 = vmatprep.subr.mxu0 0.0
  %3071 = vmatpush1.msra.mxu0 0.0
  %3072 = vmatprep.subr.mxu0 0.0
  %3073 = vmatpush1.msra.mxu0 0.0
  %3074 = vmatprep.subr.mxu0 0.0
  %3075 = vmatpush1.msra.mxu0 0.0
  %3076 = vmatprep.subr.mxu0 0.0
  %3077 = vmatpush1.msra.mxu0 0.0
  %3078 = vmatprep.subr.mxu0 0.0
  %3079 = vmatpush1.msra.mxu0 0.0
  %3080 = vmatprep.subr.mxu0 0.0
  %3081 = vmatpush1.msra.mxu0 0.0
  %3082 = vmatprep.subr.mxu0 0.0
  %3083 = vmatpush1.msra.mxu0 0.0
  %3084 = vmatprep.mubr.f32.mxu0 0.0
  %3085 = vmatmul.mubr.f32.gmra.mrb[0].mxu0 %v883
  %v3086 = vpop.f32.mrb[0].mxu0
  %v3087 = vadd.f32 0.0, %v3086
  %v3088 = vpop.f32.mrb[0].mxu0
  %v3089 = vadd.f32 0.0, %v3088
  %3090 = vmatprep.mubr.f32.mxu0 0.0
  %3091 = vmatmul.mubr.f32.gmra.mrb[0].mxu0 %v886
  %v3092 = vpop.f32.mrb[0].mxu0
  %v3093 = vadd.f32 0.0, %v3092
  %v3094 = vpop.f32.mrb[0].mxu0
  %v3095 = vadd.f32 0.0, %v3094
  %3096 = vmatprep.mubr.f32.mxu0 0.0
  %3097 = vmatmul.mubr.f32.gmra.mrb[0].mxu0 %v889
  %v3098 = vpop.f32.mrb[0].mxu0
  %v3099 = vadd.f32 0.0, %v3098
  %v3100 = vpop.f32.mrb[0].mxu0
  %v3101 = vadd.f32 0.0, %v3100
  %3102 = vmatprep.mubr.f32.mxu0 0.0
  %3103 = vmatmul.mubr.f32.gmra.mrb[0].mxu0 %v892
  %v3104 = vpop.f32.mrb[0].mxu0
  %v3105 = vadd.f32 0.0, %v3104
  %v3106 = vpop.f32.mrb[0].mxu0
  %v3107 = vadd.f32 0.0, %v3106
  %3108 = vdwg.mxu0
  %v3109 = vadd.f32 %v3004, %v3087
  %v3110 = vadd.f32 %v3005, %v3089
  %v3111 = vadd.f32 %v3006, %v3093
  %v3112 = vadd.f32 %v3007, %v3095
  %v3113 = vadd.f32 %v3008, %v3099
  %v3114 = vadd.f32 %v3009, %v3101
  %v3115 = vadd.f32 %v3010, %v3105
  %v3116 = vadd.f32 %v3011, %v3107
  %3117 = vrot.lane.b32.xlu0 %v2396, 1
  %v3118 = vpop.permute.xlu0 %3117
  %3119 = vrot.lane.b32.xlu0 %v2397, 1
  %v3120 = vpop.permute.xlu0 %3119
  %v3121 = vsel %vm866, %v3118, %v3120
  %v3122 = vsel %vm866, %v3120, %v3118
  %v3123 = vsel %vm878, %v3122, 0.0
  %v3124 = vsel %vm879, %v3121, 0.0
  %3125 = vmatprep.subr.mxu0 %v3124
  %3126 = vmatpush1.msra.mxu0 %v3123
  %3127 = vmatprep.subr.mxu0 0.0
  %3128 = vmatpush1.msra.mxu0 0.0
  %3129 = vmatprep.subr.mxu0 0.0
  %3130 = vmatpush1.msra.mxu0 0.0
  %3131 = vmatprep.subr.mxu0 0.0
  %3132 = vmatpush1.msra.mxu0 0.0
  %3133 = vmatprep.subr.mxu0 0.0
  %3134 = vmatpush1.msra.mxu0 0.0
  %3135 = vmatprep.subr.mxu0 0.0
  %3136 = vmatpush1.msra.mxu0 0.0
  %3137 = vmatprep.subr.mxu0 0.0
  %3138 = vmatpush1.msra.mxu0 0.0
  %3139 = vmatprep.subr.mxu0 0.0
  %3140 = vmatpush1.msra.mxu0 0.0
  %3141 = vmatprep.subr.mxu0 0.0
  %3142 = vmatpush1.msra.mxu0 0.0
  %3143 = vmatprep.subr.mxu0 0.0
  %3144 = vmatpush1.msra.mxu0 0.0
  %3145 = vmatprep.subr.mxu0 0.0
  %3146 = vmatpush1.msra.mxu0 0.0
  %3147 = vmatprep.subr.mxu0 0.0
  %3148 = vmatpush1.msra.mxu0 0.0
  %3149 = vmatprep.subr.mxu0 0.0
  %3150 = vmatpush1.msra.mxu0 0.0
  %3151 = vmatprep.subr.mxu0 0.0
  %3152 = vmatpush1.msra.mxu0 0.0
  %3153 = vmatprep.subr.mxu0 0.0
  %3154 = vmatpush1.msra.mxu0 0.0
  %3155 = vmatprep.subr.mxu0 0.0
  %3156 = vmatpush1.msra.mxu0 0.0
  %3157 = vmatprep.subr.mxu0 0.0
  %3158 = vmatpush1.msra.mxu0 0.0
  %3159 = vmatprep.subr.mxu0 0.0
  %3160 = vmatpush1.msra.mxu0 0.0
  %3161 = vmatprep.subr.mxu0 0.0
  %3162 = vmatpush1.msra.mxu0 0.0
  %3163 = vmatprep.subr.mxu0 0.0
  %3164 = vmatpush1.msra.mxu0 0.0
  %3165 = vmatprep.subr.mxu0 0.0
  %3166 = vmatpush1.msra.mxu0 0.0
  %3167 = vmatprep.subr.mxu0 0.0
  %3168 = vmatpush1.msra.mxu0 0.0
  %3169 = vmatprep.subr.mxu0 0.0
  %3170 = vmatpush1.msra.mxu0 0.0
  %3171 = vmatprep.subr.mxu0 0.0
  %3172 = vmatpush1.msra.mxu0 0.0
  %3173 = vmatprep.subr.mxu0 0.0
  %3174 = vmatpush1.msra.mxu0 0.0
  %3175 = vmatprep.subr.mxu0 0.0
  %3176 = vmatpush1.msra.mxu0 0.0
  %3177 = vmatprep.subr.mxu0 0.0
  %3178 = vmatpush1.msra.mxu0 0.0
  %3179 = vmatprep.subr.mxu0 0.0
  %3180 = vmatpush1.msra.mxu0 0.0
  %3181 = vmatprep.subr.mxu0 0.0
  %3182 = vmatpush1.msra.mxu0 0.0
  %3183 = vmatprep.subr.mxu0 0.0
  %3184 = vmatpush1.msra.mxu0 0.0
  %3185 = vmatprep.subr.mxu0 0.0
  %3186 = vmatpush1.msra.mxu0 0.0
  %3187 = vmatprep.subr.mxu0 0.0
  %3188 = vmatpush1.msra.mxu0 0.0
  %3189 = vmatprep.mubr.f32.mxu0 0.0
  %3190 = vmatmul.mubr.f32.gmra.mrb[0].mxu0 %v1000
  %v3191 = vpop.f32.mrb[0].mxu0
  %v3192 = vadd.f32 0.0, %v3191
  %v3193 = vpop.f32.mrb[0].mxu0
  %v3194 = vadd.f32 0.0, %v3193
  %3195 = vmatprep.mubr.f32.mxu0 0.0
  %3196 = vmatmul.mubr.f32.gmra.mrb[0].mxu0 %v1003
  %v3197 = vpop.f32.mrb[0].mxu0
  %v3198 = vadd.f32 0.0, %v3197
  %v3199 = vpop.f32.mrb[0].mxu0
  %v3200 = vadd.f32 0.0, %v3199
  %3201 = vmatprep.mubr.f32.mxu0 0.0
  %3202 = vmatmul.mubr.f32.gmra.mrb[0].mxu0 %v1006
  %v3203 = vpop.f32.mrb[0].mxu0
  %v3204 = vadd.f32 0.0, %v3203
  %v3205 = vpop.f32.mrb[0].mxu0
  %v3206 = vadd.f32 0.0, %v3205
  %3207 = vmatprep.mubr.f32.mxu0 0.0
  %3208 = vmatmul.mubr.f32.gmra.mrb[0].mxu0 %v1009
  %v3209 = vpop.f32.mrb[0].mxu0
  %v3210 = vadd.f32 0.0, %v3209
  %v3211 = vpop.f32.mrb[0].mxu0
  %v3212 = vadd.f32 0.0, %v3211
  %3213 = vdwg.mxu0
  %v3214 = vadd.f32 %v3109, %v3192
  %v3215 = vadd.f32 %v3110, %v3194
  %v3216 = vadd.f32 %v3111, %v3198
  %v3217 = vadd.f32 %v3112, %v3200
  %v3218 = vadd.f32 %v3113, %v3204
  %v3219 = vadd.f32 %v3114, %v3206
  %v3220 = vadd.f32 %v3115, %v3210
  %v3221 = vadd.f32 %v3116, %v3212
  %3222 = vmatprep.subr.mxu0 %v2394
  %3223 = vmatpush1.msra.mxu0 %v2393
  %3224 = vmatprep.subr.mxu0 0.0
  %3225 = vmatpush1.msra.mxu0 0.0
  %3226 = vmatprep.subr.mxu0 0.0
  %3227 = vmatpush1.msra.mxu0 0.0
  %3228 = vmatprep.subr.mxu0 0.0
  %3229 = vmatpush1.msra.mxu0 0.0
  %3230 = vmatprep.subr.mxu0 0.0
  %3231 = vmatpush1.msra.mxu0 0.0
  %3232 = vmatprep.subr.mxu0 0.0
  %3233 = vmatpush1.msra.mxu0 0.0
  %3234 = vmatprep.subr.mxu0 0.0
  %3235 = vmatpush1.msra.mxu0 0.0
  %3236 = vmatprep.subr.mxu0 0.0
  %3237 = vmatpush1.msra.mxu0 0.0
  %3238 = vmatprep.subr.mxu0 0.0
  %3239 = vmatpush1.msra.mxu0 0.0
  %3240 = vmatprep.subr.mxu0 0.0
  %3241 = vmatpush1.msra.mxu0 0.0
  %3242 = vmatprep.subr.mxu0 0.0
  %3243 = vmatpush1.msra.mxu0 0.0
  %3244 = vmatprep.subr.mxu0 0.0
  %3245 = vmatpush1.msra.mxu0 0.0
  %3246 = vmatprep.subr.mxu0 0.0
  %3247 = vmatpush1.msra.mxu0 0.0
  %3248 = vmatprep.subr.mxu0 0.0
  %3249 = vmatpush1.msra.mxu0 0.0
  %3250 = vmatprep.subr.mxu0 0.0
  %3251 = vmatpush1.msra.mxu0 0.0
  %3252 = vmatprep.subr.mxu0 0.0
  %3253 = vmatpush1.msra.mxu0 0.0
  %3254 = vmatprep.subr.mxu0 0.0
  %3255 = vmatpush1.msra.mxu0 0.0
  %3256 = vmatprep.subr.mxu0 0.0
  %3257 = vmatpush1.msra.mxu0 0.0
  %3258 = vmatprep.subr.mxu0 0.0
  %3259 = vmatpush1.msra.mxu0 0.0
  %3260 = vmatprep.subr.mxu0 0.0
  %3261 = vmatpush1.msra.mxu0 0.0
  %3262 = vmatprep.subr.mxu0 0.0
  %3263 = vmatpush1.msra.mxu0 0.0
  %3264 = vmatprep.subr.mxu0 0.0
  %3265 = vmatpush1.msra.mxu0 0.0
  %3266 = vmatprep.subr.mxu0 0.0
  %3267 = vmatpush1.msra.mxu0 0.0
  %3268 = vmatprep.subr.mxu0 0.0
  %3269 = vmatpush1.msra.mxu0 0.0
  %3270 = vmatprep.subr.mxu0 0.0
  %3271 = vmatpush1.msra.mxu0 0.0
  %3272 = vmatprep.subr.mxu0 0.0
  %3273 = vmatpush1.msra.mxu0 0.0
  %3274 = vmatprep.subr.mxu0 0.0
  %3275 = vmatpush1.msra.mxu0 0.0
  %3276 = vmatprep.subr.mxu0 0.0
  %3277 = vmatpush1.msra.mxu0 0.0
  %3278 = vmatprep.subr.mxu0 0.0
  %3279 = vmatpush1.msra.mxu0 0.0
  %3280 = vmatprep.subr.mxu0 0.0
  %3281 = vmatpush1.msra.mxu0 0.0
  %3282 = vmatprep.subr.mxu0 0.0
  %3283 = vmatpush1.msra.mxu0 0.0
  %3284 = vmatprep.subr.mxu0 0.0
  %3285 = vmatpush1.msra.mxu0 0.0
  %3286 = vmatprep.mubr.f32.mxu0 0.0
  %3287 = vmatmul.mubr.f32.gmra.mrb[0].mxu0 %v1109
  %v3288 = vpop.f32.mrb[0].mxu0
  %v3289 = vadd.f32 0.0, %v3288
  %v3290 = vpop.f32.mrb[0].mxu0
  %v3291 = vadd.f32 0.0, %v3290
  %3292 = vmatprep.mubr.f32.mxu0 0.0
  %3293 = vmatmul.mubr.f32.gmra.mrb[0].mxu0 %v1112
  %v3294 = vpop.f32.mrb[0].mxu0
  %v3295 = vadd.f32 0.0, %v3294
  %v3296 = vpop.f32.mrb[0].mxu0
  %v3297 = vadd.f32 0.0, %v3296
  %3298 = vmatprep.mubr.f32.mxu0 0.0
  %3299 = vmatmul.mubr.f32.gmra.mrb[0].mxu0 %v1115
  %v3300 = vpop.f32.mrb[0].mxu0
  %v3301 = vadd.f32 0.0, %v3300
  %v3302 = vpop.f32.mrb[0].mxu0
  %v3303 = vadd.f32 0.0, %v3302
  %3304 = vmatprep.mubr.f32.mxu0 0.0
  %3305 = vmatmul.mubr.f32.gmra.mrb[0].mxu0 %v1118
  %v3306 = vpop.f32.mrb[0].mxu0
  %v3307 = vadd.f32 0.0, %v3306
  %v3308 = vpop.f32.mrb[0].mxu0
  %v3309 = vadd.f32 0.0, %v3308
  %3310 = vdwg.mxu0
  %v3311 = vadd.f32 %v3214, %v3289
  %v3312 = vadd.f32 %v3215, %v3291
  %v3313 = vadd.f32 %v3216, %v3295
  %v3314 = vadd.f32 %v3217, %v3297
  %v3315 = vadd.f32 %v3218, %v3301
  %v3316 = vadd.f32 %v3219, %v3303
  %v3317 = vadd.f32 %v3220, %v3307
  %v3318 = vadd.f32 %v3221, %v3309
  %3319 = vmatprep.subr.mxu0 %v2397
  %3320 = vmatpush1.msra.mxu0 %v2396
  %3321 = vmatprep.subr.mxu0 0.0
  %3322 = vmatpush1.msra.mxu0 0.0
  %3323 = vmatprep.subr.mxu0 0.0
  %3324 = vmatpush1.msra.mxu0 0.0
  %3325 = vmatprep.subr.mxu0 0.0
  %3326 = vmatpush1.msra.mxu0 0.0
  %3327 = vmatprep.subr.mxu0 0.0
  %3328 = vmatpush1.msra.mxu0 0.0
  %3329 = vmatprep.subr.mxu0 0.0
  %3330 = vmatpush1.msra.mxu0 0.0
  %3331 = vmatprep.subr.mxu0 0.0
  %3332 = vmatpush1.msra.mxu0 0.0
  %3333 = vmatprep.subr.mxu0 0.0
  %3334 = vmatpush1.msra.mxu0 0.0
  %3335 = vmatprep.subr.mxu0 0.0
  %3336 = vmatpush1.msra.mxu0 0.0
  %3337 = vmatprep.subr.mxu0 0.0
  %3338 = vmatpush1.msra.mxu0 0.0
  %3339 = vmatprep.subr.mxu0 0.0
  %3340 = vmatpush1.msra.mxu0 0.0
  %3341 = vmatprep.subr.mxu0 0.0
  %3342 = vmatpush1.msra.mxu0 0.0
  %3343 = vmatprep.subr.mxu0 0.0
  %3344 = vmatpush1.msra.mxu0 0.0
  %3345 = vmatprep.subr.mxu0 0.0
  %3346 = vmatpush1.msra.mxu0 0.0
  %3347 = vmatprep.subr.mxu0 0.0
  %3348 = vmatpush1.msra.mxu0 0.0
  %3349 = vmatprep.subr.mxu0 0.0
  %3350 = vmatpush1.msra.mxu0 0.0
  %3351 = vmatprep.subr.mxu0 0.0
  %3352 = vmatpush1.msra.mxu0 0.0
  %3353 = vmatprep.subr.mxu0 0.0
  %3354 = vmatpush1.msra.mxu0 0.0
  %3355 = vmatprep.subr.mxu0 0.0
  %3356 = vmatpush1.msra.mxu0 0.0
  %3357 = vmatprep.subr.mxu0 0.0
  %3358 = vmatpush1.msra.mxu0 0.0
  %3359 = vmatprep.subr.mxu0 0.0
  %3360 = vmatpush1.msra.mxu0 0.0
  %3361 = vmatprep.subr.mxu0 0.0
  %3362 = vmatpush1.msra.mxu0 0.0
  %3363 = vmatprep.subr.mxu0 0.0
  %3364 = vmatpush1.msra.mxu0 0.0
  %3365 = vmatprep.subr.mxu0 0.0
  %3366 = vmatpush1.msra.mxu0 0.0
  %3367 = vmatprep.subr.mxu0 0.0
  %3368 = vmatpush1.msra.mxu0 0.0
  %3369 = vmatprep.subr.mxu0 0.0
  %3370 = vmatpush1.msra.mxu0 0.0
  %3371 = vmatprep.subr.mxu0 0.0
  %3372 = vmatpush1.msra.mxu0 0.0
  %3373 = vmatprep.subr.mxu0 0.0
  %3374 = vmatpush1.msra.mxu0 0.0
  %3375 = vmatprep.subr.mxu0 0.0
  %3376 = vmatpush1.msra.mxu0 0.0
  %3377 = vmatprep.subr.mxu0 0.0
  %3378 = vmatpush1.msra.mxu0 0.0
  %3379 = vmatprep.subr.mxu0 0.0
  %3380 = vmatpush1.msra.mxu0 0.0
  %3381 = vmatprep.subr.mxu0 0.0
  %3382 = vmatpush1.msra.mxu0 0.0
  %3383 = vmatprep.mubr.f32.mxu0 0.0
  %3384 = vmatmul.mubr.f32.gmra.mrb[0].mxu0 %v1218
  %v3385 = vpop.f32.mrb[0].mxu0
  %v3386 = vadd.f32 0.0, %v3385
  %v3387 = vpop.f32.mrb[0].mxu0
  %v3388 = vadd.f32 0.0, %v3387
  %3389 = vmatprep.mubr.f32.mxu0 0.0
  %3390 = vmatmul.mubr.f32.gmra.mrb[0].mxu0 %v1221
  %v3391 = vpop.f32.mrb[0].mxu0
  %v3392 = vadd.f32 0.0, %v3391
  %v3393 = vpop.f32.mrb[0].mxu0
  %v3394 = vadd.f32 0.0, %v3393
  %3395 = vmatprep.mubr.f32.mxu0 0.0
  %3396 = vmatmul.mubr.f32.gmra.mrb[0].mxu0 %v1224
  %v3397 = vpop.f32.mrb[0].mxu0
  %v3398 = vadd.f32 0.0, %v3397
  %v3399 = vpop.f32.mrb[0].mxu0
  %v3400 = vadd.f32 0.0, %v3399
  %3401 = vmatprep.mubr.f32.mxu0 0.0
  %3402 = vmatmul.mubr.f32.gmra.mrb[0].mxu0 %v1227
  %v3403 = vpop.f32.mrb[0].mxu0
  %v3404 = vadd.f32 0.0, %v3403
  %v3405 = vpop.f32.mrb[0].mxu0
  %v3406 = vadd.f32 0.0, %v3405
  %3407 = vdwg.mxu0
  %v3408 = vadd.f32 %v3311, %v3386
  %v3409 = vadd.f32 %v3312, %v3388
  %v3410 = vadd.f32 %v3313, %v3392
  %v3411 = vadd.f32 %v3314, %v3394
  %v3412 = vadd.f32 %v3315, %v3398
  %v3413 = vadd.f32 %v3316, %v3400
  %v3414 = vadd.f32 %v3317, %v3404
  %v3415 = vadd.f32 %v3318, %v3406
  %3416 = vrot.lane.b32.xlu0 %v2393, 127
  %v3417 = vpop.permute.xlu0 %3416
  %3418 = vrot.lane.b32.xlu0 %v2394, 127
  %v3419 = vpop.permute.xlu0 %3418
  %v3420 = vsel %vm1330, %v3417, %v3419
  %v3421 = vsel %vm1330, %v3419, %v3417
  %v3422 = vsel %vm1342, %v3420, 0.0
  %v3423 = vsel %vm1343, %v3421, 0.0
  %3424 = vmatprep.subr.mxu0 %v3423
  %3425 = vmatpush1.msra.mxu0 %v3422
  %3426 = vmatprep.subr.mxu0 0.0
  %3427 = vmatpush1.msra.mxu0 0.0
  %3428 = vmatprep.subr.mxu0 0.0
  %3429 = vmatpush1.msra.mxu0 0.0
  %3430 = vmatprep.subr.mxu0 0.0
  %3431 = vmatpush1.msra.mxu0 0.0
  %3432 = vmatprep.subr.mxu0 0.0
  %3433 = vmatpush1.msra.mxu0 0.0
  %3434 = vmatprep.subr.mxu0 0.0
  %3435 = vmatpush1.msra.mxu0 0.0
  %3436 = vmatprep.subr.mxu0 0.0
  %3437 = vmatpush1.msra.mxu0 0.0
  %3438 = vmatprep.subr.mxu0 0.0
  %3439 = vmatpush1.msra.mxu0 0.0
  %3440 = vmatprep.subr.mxu0 0.0
  %3441 = vmatpush1.msra.mxu0 0.0
  %3442 = vmatprep.subr.mxu0 0.0
  %3443 = vmatpush1.msra.mxu0 0.0
  %3444 = vmatprep.subr.mxu0 0.0
  %3445 = vmatpush1.msra.mxu0 0.0
  %3446 = vmatprep.subr.mxu0 0.0
  %3447 = vmatpush1.msra.mxu0 0.0
  %3448 = vmatprep.subr.mxu0 0.0
  %3449 = vmatpush1.msra.mxu0 0.0
  %3450 = vmatprep.subr.mxu0 0.0
  %3451 = vmatpush1.msra.mxu0 0.0
  %3452 = vmatprep.subr.mxu0 0.0
  %3453 = vmatpush1.msra.mxu0 0.0
  %3454 = vmatprep.subr.mxu0 0.0
  %3455 = vmatpush1.msra.mxu0 0.0
  %3456 = vmatprep.subr.mxu0 0.0
  %3457 = vmatpush1.msra.mxu0 0.0
  %3458 = vmatprep.subr.mxu0 0.0
  %3459 = vmatpush1.msra.mxu0 0.0
  %3460 = vmatprep.subr.mxu0 0.0
  %3461 = vmatpush1.msra.mxu0 0.0
  %3462 = vmatprep.subr.mxu0 0.0
  %3463 = vmatpush1.msra.mxu0 0.0
  %3464 = vmatprep.subr.mxu0 0.0
  %3465 = vmatpush1.msra.mxu0 0.0
  %3466 = vmatprep.subr.mxu0 0.0
  %3467 = vmatpush1.msra.mxu0 0.0
  %3468 = vmatprep.subr.mxu0 0.0
  %3469 = vmatpush1.msra.mxu0 0.0
  %3470 = vmatprep.subr.mxu0 0.0
  %3471 = vmatpush1.msra.mxu0 0.0
  %3472 = vmatprep.subr.mxu0 0.0
  %3473 = vmatpush1.msra.mxu0 0.0
  %3474 = vmatprep.subr.mxu0 0.0
  %3475 = vmatpush1.msra.mxu0 0.0
  %3476 = vmatprep.subr.mxu0 0.0
  %3477 = vmatpush1.msra.mxu0 0.0
  %3478 = vmatprep.subr.mxu0 0.0
  %3479 = vmatpush1.msra.mxu0 0.0
  %3480 = vmatprep.subr.mxu0 0.0
  %3481 = vmatpush1.msra.mxu0 0.0
  %3482 = vmatprep.subr.mxu0 0.0
  %3483 = vmatpush1.msra.mxu0 0.0
  %3484 = vmatprep.subr.mxu0 0.0
  %3485 = vmatpush1.msra.mxu0 0.0
  %3486 = vmatprep.subr.mxu0 0.0
  %3487 = vmatpush1.msra.mxu0 0.0
  %3488 = vmatprep.mubr.f32.mxu0 0.0
  %3489 = vmatmul.mubr.f32.gmra.mrb[0].mxu0 %v1347
  %v3490 = vpop.f32.mrb[0].mxu0
  %v3491 = vadd.f32 0.0, %v3490
  %v3492 = vpop.f32.mrb[0].mxu0
  %v3493 = vadd.f32 0.0, %v3492
  %3494 = vmatprep.mubr.f32.mxu0 0.0
  %3495 = vmatmul.mubr.f32.gmra.mrb[0].mxu0 %v1350
  %v3496 = vpop.f32.mrb[0].mxu0
  %v3497 = vadd.f32 0.0, %v3496
  %v3498 = vpop.f32.mrb[0].mxu0
  %v3499 = vadd.f32 0.0, %v3498
  %3500 = vmatprep.mubr.f32.mxu0 0.0
  %3501 = vmatmul.mubr.f32.gmra.mrb[0].mxu0 %v1353
  %v3502 = vpop.f32.mrb[0].mxu0
  %v3503 = vadd.f32 0.0, %v3502
  %v3504 = vpop.f32.mrb[0].mxu0
  %v3505 = vadd.f32 0.0, %v3504
  %3506 = vmatprep.mubr.f32.mxu0 0.0
  %3507 = vmatmul.mubr.f32.gmra.mrb[0].mxu0 %v1356
  %v3508 = vpop.f32.mrb[0].mxu0
  %v3509 = vadd.f32 0.0, %v3508
  %v3510 = vpop.f32.mrb[0].mxu0
  %v3511 = vadd.f32 0.0, %v3510
  %3512 = vdwg.mxu0
  %v3513 = vadd.f32 %v3408, %v3491
  %v3514 = vadd.f32 %v3409, %v3493
  %v3515 = vadd.f32 %v3410, %v3497
  %v3516 = vadd.f32 %v3411, %v3499
  %v3517 = vadd.f32 %v3412, %v3503
  %v3518 = vadd.f32 %v3413, %v3505
  %v3519 = vadd.f32 %v3414, %v3509
  %v3520 = vadd.f32 %v3415, %v3511
  %3521 = vrot.lane.b32.xlu0 %v2396, 127
  %v3522 = vpop.permute.xlu0 %3521
  %3523 = vrot.lane.b32.xlu0 %v2397, 127
  %v3524 = vpop.permute.xlu0 %3523
  %v3525 = vsel %vm1330, %v3522, %v3524
  %v3526 = vsel %vm1330, %v3524, %v3522
  %v3527 = vsel %vm1342, %v3525, 0.0
  %v3528 = vsel %vm1343, %v3526, 0.0
  %3529 = vmatprep.subr.mxu0 %v3528
  %3530 = vmatpush1.msra.mxu0 %v3527
  %3531 = vmatprep.subr.mxu0 0.0
  %3532 = vmatpush1.msra.mxu0 0.0
  %3533 = vmatprep.subr.mxu0 0.0
  %3534 = vmatpush1.msra.mxu0 0.0
  %3535 = vmatprep.subr.mxu0 0.0
  %3536 = vmatpush1.msra.mxu0 0.0
  %3537 = vmatprep.subr.mxu0 0.0
  %3538 = vmatpush1.msra.mxu0 0.0
  %3539 = vmatprep.subr.mxu0 0.0
  %3540 = vmatpush1.msra.mxu0 0.0
  %3541 = vmatprep.subr.mxu0 0.0
  %3542 = vmatpush1.msra.mxu0 0.0
  %3543 = vmatprep.subr.mxu0 0.0
  %3544 = vmatpush1.msra.mxu0 0.0
  %3545 = vmatprep.subr.mxu0 0.0
  %3546 = vmatpush1.msra.mxu0 0.0
  %3547 = vmatprep.subr.mxu0 0.0
  %3548 = vmatpush1.msra.mxu0 0.0
  %3549 = vmatprep.subr.mxu0 0.0
  %3550 = vmatpush1.msra.mxu0 0.0
  %3551 = vmatprep.subr.mxu0 0.0
  %3552 = vmatpush1.msra.mxu0 0.0
  %3553 = vmatprep.subr.mxu0 0.0
  %3554 = vmatpush1.msra.mxu0 0.0
  %3555 = vmatprep.subr.mxu0 0.0
  %3556 = vmatpush1.msra.mxu0 0.0
  %3557 = vmatprep.subr.mxu0 0.0
  %3558 = vmatpush1.msra.mxu0 0.0
  %3559 = vmatprep.subr.mxu0 0.0
  %3560 = vmatpush1.msra.mxu0 0.0
  %3561 = vmatprep.subr.mxu0 0.0
  %3562 = vmatpush1.msra.mxu0 0.0
  %3563 = vmatprep.subr.mxu0 0.0
  %3564 = vmatpush1.msra.mxu0 0.0
  %3565 = vmatprep.subr.mxu0 0.0
  %3566 = vmatpush1.msra.mxu0 0.0
  %3567 = vmatprep.subr.mxu0 0.0
  %3568 = vmatpush1.msra.mxu0 0.0
  %3569 = vmatprep.subr.mxu0 0.0
  %3570 = vmatpush1.msra.mxu0 0.0
  %3571 = vmatprep.subr.mxu0 0.0
  %3572 = vmatpush1.msra.mxu0 0.0
  %3573 = vmatprep.subr.mxu0 0.0
  %3574 = vmatpush1.msra.mxu0 0.0
  %3575 = vmatprep.subr.mxu0 0.0
  %3576 = vmatpush1.msra.mxu0 0.0
  %3577 = vmatprep.subr.mxu0 0.0
  %3578 = vmatpush1.msra.mxu0 0.0
  %3579 = vmatprep.subr.mxu0 0.0
  %3580 = vmatpush1.msra.mxu0 0.0
  %3581 = vmatprep.subr.mxu0 0.0
  %3582 = vmatpush1.msra.mxu0 0.0
  %3583 = vmatprep.subr.mxu0 0.0
  %3584 = vmatpush1.msra.mxu0 0.0
  %3585 = vmatprep.subr.mxu0 0.0
  %3586 = vmatpush1.msra.mxu0 0.0
  %3587 = vmatprep.subr.mxu0 0.0
  %3588 = vmatpush1.msra.mxu0 0.0
  %3589 = vmatprep.subr.mxu0 0.0
  %3590 = vmatpush1.msra.mxu0 0.0
  %3591 = vmatprep.subr.mxu0 0.0
  %3592 = vmatpush1.msra.mxu0 0.0
  %3593 = vmatprep.mubr.f32.mxu0 0.0
  %3594 = vmatmul.mubr.f32.gmra.mrb[0].mxu0 %v1464
  %v3595 = vpop.f32.mrb[0].mxu0
  %v3596 = vadd.f32 0.0, %v3595
  %v3597 = vpop.f32.mrb[0].mxu0
  %v3598 = vadd.f32 0.0, %v3597
  %3599 = vmatprep.mubr.f32.mxu0 0.0
  %3600 = vmatmul.mubr.f32.gmra.mrb[0].mxu0 %v1467
  %v3601 = vpop.f32.mrb[0].mxu0
  %v3602 = vadd.f32 0.0, %v3601
  %v3603 = vpop.f32.mrb[0].mxu0
  %v3604 = vadd.f32 0.0, %v3603
  %3605 = vmatprep.mubr.f32.mxu0 0.0
  %3606 = vmatmul.mubr.f32.gmra.mrb[0].mxu0 %v1470
  %v3607 = vpop.f32.mrb[0].mxu0
  %v3608 = vadd.f32 0.0, %v3607
  %v3609 = vpop.f32.mrb[0].mxu0
  %v3610 = vadd.f32 0.0, %v3609
  %3611 = vmatprep.mubr.f32.mxu0 0.0
  %3612 = vmatmul.mubr.f32.gmra.mrb[0].mxu0 %v1473
  %v3613 = vpop.f32.mrb[0].mxu0
  %v3614 = vadd.f32 0.0, %v3613
  %v3615 = vpop.f32.mrb[0].mxu0
  %v3616 = vadd.f32 0.0, %v3615
  %3617 = vdwg.mxu0
  %v3618 = vadd.f32 %v3513, %v3596
  %v3619 = vadd.f32 %v3514, %v3598
  %v3620 = vadd.f32 %v3515, %v3602
  %v3621 = vadd.f32 %v3516, %v3604
  %v3622 = vadd.f32 %v3517, %v3608
  %v3623 = vadd.f32 %v3518, %v3610
  %v3624 = vadd.f32 %v3519, %v3614
  %v3625 = vadd.f32 %v3520, %v3616
  %3626 = vrot.lane.b32.xlu0 %v2393, 113
  %v3627 = vpop.permute.xlu0 %3626
  %3628 = vrot.lane.b32.xlu0 %v2394, 113
  %v3629 = vpop.permute.xlu0 %3628
  %v3630 = vsel %vm1576, %v3627, %v3629
  %v3631 = vsel %vm1576, %v3629, %v3627
  %v3632 = vsel %vm1588, %v3630, 0.0
  %v3633 = vsel %vm1589, %v3631, 0.0
  %3634 = vmatprep.subr.mxu0 %v3633
  %3635 = vmatpush1.msra.mxu0 %v3632
  %3636 = vmatprep.subr.mxu0 0.0
  %3637 = vmatpush1.msra.mxu0 0.0
  %3638 = vmatprep.subr.mxu0 0.0
  %3639 = vmatpush1.msra.mxu0 0.0
  %3640 = vmatprep.subr.mxu0 0.0
  %3641 = vmatpush1.msra.mxu0 0.0
  %3642 = vmatprep.subr.mxu0 0.0
  %3643 = vmatpush1.msra.mxu0 0.0
  %3644 = vmatprep.subr.mxu0 0.0
  %3645 = vmatpush1.msra.mxu0 0.0
  %3646 = vmatprep.subr.mxu0 0.0
  %3647 = vmatpush1.msra.mxu0 0.0
  %3648 = vmatprep.subr.mxu0 0.0
  %3649 = vmatpush1.msra.mxu0 0.0
  %3650 = vmatprep.subr.mxu0 0.0
  %3651 = vmatpush1.msra.mxu0 0.0
  %3652 = vmatprep.subr.mxu0 0.0
  %3653 = vmatpush1.msra.mxu0 0.0
  %3654 = vmatprep.subr.mxu0 0.0
  %3655 = vmatpush1.msra.mxu0 0.0
  %3656 = vmatprep.subr.mxu0 0.0
  %3657 = vmatpush1.msra.mxu0 0.0
  %3658 = vmatprep.subr.mxu0 0.0
  %3659 = vmatpush1.msra.mxu0 0.0
  %3660 = vmatprep.subr.mxu0 0.0
  %3661 = vmatpush1.msra.mxu0 0.0
  %3662 = vmatprep.subr.mxu0 0.0
  %3663 = vmatpush1.msra.mxu0 0.0
  %3664 = vmatprep.subr.mxu0 0.0
  %3665 = vmatpush1.msra.mxu0 0.0
  %3666 = vmatprep.subr.mxu0 0.0
  %3667 = vmatpush1.msra.mxu0 0.0
  %3668 = vmatprep.subr.mxu0 0.0
  %3669 = vmatpush1.msra.mxu0 0.0
  %3670 = vmatprep.subr.mxu0 0.0
  %3671 = vmatpush1.msra.mxu0 0.0
  %3672 = vmatprep.subr.mxu0 0.0
  %3673 = vmatpush1.msra.mxu0 0.0
  %3674 = vmatprep.subr.mxu0 0.0
  %3675 = vmatpush1.msra.mxu0 0.0
  %3676 = vmatprep.subr.mxu0 0.0
  %3677 = vmatpush1.msra.mxu0 0.0
  %3678 = vmatprep.subr.mxu0 0.0
  %3679 = vmatpush1.msra.mxu0 0.0
  %3680 = vmatprep.subr.mxu0 0.0
  %3681 = vmatpush1.msra.mxu0 0.0
  %3682 = vmatprep.subr.mxu0 0.0
  %3683 = vmatpush1.msra.mxu0 0.0
  %3684 = vmatprep.subr.mxu0 0.0
  %3685 = vmatpush1.msra.mxu0 0.0
  %3686 = vmatprep.subr.mxu0 0.0
  %3687 = vmatpush1.msra.mxu0 0.0
  %3688 = vmatprep.subr.mxu0 0.0
  %3689 = vmatpush1.msra.mxu0 0.0
  %3690 = vmatprep.subr.mxu0 0.0
  %3691 = vmatpush1.msra.mxu0 0.0
  %3692 = vmatprep.subr.mxu0 0.0
  %3693 = vmatpush1.msra.mxu0 0.0
  %3694 = vmatprep.subr.mxu0 0.0
  %3695 = vmatpush1.msra.mxu0 0.0
  %3696 = vmatprep.subr.mxu0 0.0
  %3697 = vmatpush1.msra.mxu0 0.0
  %3698 = vmatprep.mubr.f32.mxu0 0.0
  %3699 = vmatmul.mubr.f32.gmra.mrb[0].mxu0 %v1593
  %v3700 = vpop.f32.mrb[0].mxu0
  %v3701 = vadd.f32 0.0, %v3700
  %v3702 = vpop.f32.mrb[0].mxu0
  %v3703 = vadd.f32 0.0, %v3702
  %3704 = vmatprep.mubr.f32.mxu0 0.0
  %3705 = vmatmul.mubr.f32.gmra.mrb[0].mxu0 %v1596
  %v3706 = vpop.f32.mrb[0].mxu0
  %v3707 = vadd.f32 0.0, %v3706
  %v3708 = vpop.f32.mrb[0].mxu0
  %v3709 = vadd.f32 0.0, %v3708
  %3710 = vmatprep.mubr.f32.mxu0 0.0
  %3711 = vmatmul.mubr.f32.gmra.mrb[0].mxu0 %v1599
  %v3712 = vpop.f32.mrb[0].mxu0
  %v3713 = vadd.f32 0.0, %v3712
  %v3714 = vpop.f32.mrb[0].mxu0
  %v3715 = vadd.f32 0.0, %v3714
  %3716 = vmatprep.mubr.f32.mxu0 0.0
  %3717 = vmatmul.mubr.f32.gmra.mrb[0].mxu0 %v1602
  %v3718 = vpop.f32.mrb[0].mxu0
  %v3719 = vadd.f32 0.0, %v3718
  %v3720 = vpop.f32.mrb[0].mxu0
  %v3721 = vadd.f32 0.0, %v3720
  %3722 = vdwg.mxu0
  %v3723 = vadd.f32 %v3618, %v3701
  %v3724 = vadd.f32 %v3619, %v3703
  %v3725 = vadd.f32 %v3620, %v3707
  %v3726 = vadd.f32 %v3621, %v3709
  %v3727 = vadd.f32 %v3622, %v3713
  %v3728 = vadd.f32 %v3623, %v3715
  %v3729 = vadd.f32 %v3624, %v3719
  %v3730 = vadd.f32 %v3625, %v3721
  %3731 = vrot.lane.b32.xlu0 %v2396, 113
  %v3732 = vpop.permute.xlu0 %3731
  %3733 = vrot.lane.b32.xlu0 %v2397, 113
  %v3734 = vpop.permute.xlu0 %3733
  %v3735 = vsel %vm1576, %v3732, %v3734
  %v3736 = vsel %vm1576, %v3734, %v3732
  %v3737 = vsel %vm1588, %v3735, 0.0
  %v3738 = vsel %vm1589, %v3736, 0.0
  %3739 = vmatprep.subr.mxu0 %v3738
  %3740 = vmatpush1.msra.mxu0 %v3737
  %3741 = vmatprep.subr.mxu0 0.0
  %3742 = vmatpush1.msra.mxu0 0.0
  %3743 = vmatprep.subr.mxu0 0.0
  %3744 = vmatpush1.msra.mxu0 0.0
  %3745 = vmatprep.subr.mxu0 0.0
  %3746 = vmatpush1.msra.mxu0 0.0
  %3747 = vmatprep.subr.mxu0 0.0
  %3748 = vmatpush1.msra.mxu0 0.0
  %3749 = vmatprep.subr.mxu0 0.0
  %3750 = vmatpush1.msra.mxu0 0.0
  %3751 = vmatprep.subr.mxu0 0.0
  %3752 = vmatpush1.msra.mxu0 0.0
  %3753 = vmatprep.subr.mxu0 0.0
  %3754 = vmatpush1.msra.mxu0 0.0
  %3755 = vmatprep.subr.mxu0 0.0
  %3756 = vmatpush1.msra.mxu0 0.0
  %3757 = vmatprep.subr.mxu0 0.0
  %3758 = vmatpush1.msra.mxu0 0.0
  %3759 = vmatprep.subr.mxu0 0.0
  %3760 = vmatpush1.msra.mxu0 0.0
  %3761 = vmatprep.subr.mxu0 0.0
  %3762 = vmatpush1.msra.mxu0 0.0
  %3763 = vmatprep.subr.mxu0 0.0
  %3764 = vmatpush1.msra.mxu0 0.0
  %3765 = vmatprep.subr.mxu0 0.0
  %3766 = vmatpush1.msra.mxu0 0.0
  %3767 = vmatprep.subr.mxu0 0.0
  %3768 = vmatpush1.msra.mxu0 0.0
  %3769 = vmatprep.subr.mxu0 0.0
  %3770 = vmatpush1.msra.mxu0 0.0
  %3771 = vmatprep.subr.mxu0 0.0
  %3772 = vmatpush1.msra.mxu0 0.0
  %3773 = vmatprep.subr.mxu0 0.0
  %3774 = vmatpush1.msra.mxu0 0.0
  %3775 = vmatprep.subr.mxu0 0.0
  %3776 = vmatpush1.msra.mxu0 0.0
  %3777 = vmatprep.subr.mxu0 0.0
  %3778 = vmatpush1.msra.mxu0 0.0
  %3779 = vmatprep.subr.mxu0 0.0
  %3780 = vmatpush1.msra.mxu0 0.0
  %3781 = vmatprep.subr.mxu0 0.0
  %3782 = vmatpush1.msra.mxu0 0.0
  %3783 = vmatprep.subr.mxu0 0.0
  %3784 = vmatpush1.msra.mxu0 0.0
  %3785 = vmatprep.subr.mxu0 0.0
  %3786 = vmatpush1.msra.mxu0 0.0
  %3787 = vmatprep.subr.mxu0 0.0
  %3788 = vmatpush1.msra.mxu0 0.0
  %3789 = vmatprep.subr.mxu0 0.0
  %3790 = vmatpush1.msra.mxu0 0.0
  %3791 = vmatprep.subr.mxu0 0.0
  %3792 = vmatpush1.msra.mxu0 0.0
  %3793 = vmatprep.subr.mxu0 0.0
  %3794 = vmatpush1.msra.mxu0 0.0
  %3795 = vmatprep.subr.mxu0 0.0
  %3796 = vmatpush1.msra.mxu0 0.0
  %3797 = vmatprep.subr.mxu0 0.0
  %3798 = vmatpush1.msra.mxu0 0.0
  %3799 = vmatprep.subr.mxu0 0.0
  %3800 = vmatpush1.msra.mxu0 0.0
  %3801 = vmatprep.subr.mxu0 0.0
  %3802 = vmatpush1.msra.mxu0 0.0
  %3803 = vmatprep.mubr.f32.mxu0 0.0
  %3804 = vmatmul.mubr.f32.gmra.mrb[0].mxu0 %v1710
  %v3805 = vpop.f32.mrb[0].mxu0
  %v3806 = vadd.f32 0.0, %v3805
  %v3807 = vpop.f32.mrb[0].mxu0
  %v3808 = vadd.f32 0.0, %v3807
  %3809 = vmatprep.mubr.f32.mxu0 0.0
  %3810 = vmatmul.mubr.f32.gmra.mrb[0].mxu0 %v1713
  %v3811 = vpop.f32.mrb[0].mxu0
  %v3812 = vadd.f32 0.0, %v3811
  %v3813 = vpop.f32.mrb[0].mxu0
  %v3814 = vadd.f32 0.0, %v3813
  %3815 = vmatprep.mubr.f32.mxu0 0.0
  %3816 = vmatmul.mubr.f32.gmra.mrb[0].mxu0 %v1716
  %v3817 = vpop.f32.mrb[0].mxu0
  %v3818 = vadd.f32 0.0, %v3817
  %v3819 = vpop.f32.mrb[0].mxu0
  %v3820 = vadd.f32 0.0, %v3819
  %3821 = vmatprep.mubr.f32.mxu0 0.0
  %3822 = vmatmul.mubr.f32.gmra.mrb[0].mxu0 %v1719
  %v3823 = vpop.f32.mrb[0].mxu0
  %v3824 = vadd.f32 0.0, %v3823
  %v3825 = vpop.f32.mrb[0].mxu0
  %v3826 = vadd.f32 0.0, %v3825
  %3827 = vdwg.mxu0
  %v3828 = vadd.f32 %v3723, %v3806
  %v3829 = vadd.f32 %v3724, %v3808
  %v3830 = vadd.f32 %v3725, %v3812
  %v3831 = vadd.f32 %v3726, %v3814
  %v3832 = vadd.f32 %v3727, %v3818
  %v3833 = vadd.f32 %v3728, %v3820
  %v3834 = vadd.f32 %v3729, %v3824
  %v3835 = vadd.f32 %v3730, %v3826
  %3836 = vrot.lane.b32.xlu0 %v2393, 112
  %v3837 = vpop.permute.xlu0 %3836
  %3838 = vrot.lane.b32.xlu0 %v2394, 112
  %v3839 = vpop.permute.xlu0 %3838
  %v3840 = vsel %vm1822, %v3837, %v3839
  %v3841 = vsel %vm1822, %v3839, %v3837
  %v3842 = vsel %vm1834, %v3840, 0.0
  %v3843 = vsel %vm1835, %v3841, 0.0
  %3844 = vmatprep.subr.mxu0 %v3843
  %3845 = vmatpush1.msra.mxu0 %v3842
  %3846 = vmatprep.subr.mxu0 0.0
  %3847 = vmatpush1.msra.mxu0 0.0
  %3848 = vmatprep.subr.mxu0 0.0
  %3849 = vmatpush1.msra.mxu0 0.0
  %3850 = vmatprep.subr.mxu0 0.0
  %3851 = vmatpush1.msra.mxu0 0.0
  %3852 = vmatprep.subr.mxu0 0.0
  %3853 = vmatpush1.msra.mxu0 0.0
  %3854 = vmatprep.subr.mxu0 0.0
  %3855 = vmatpush1.msra.mxu0 0.0
  %3856 = vmatprep.subr.mxu0 0.0
  %3857 = vmatpush1.msra.mxu0 0.0
  %3858 = vmatprep.subr.mxu0 0.0
  %3859 = vmatpush1.msra.mxu0 0.0
  %3860 = vmatprep.subr.mxu0 0.0
  %3861 = vmatpush1.msra.mxu0 0.0
  %3862 = vmatprep.subr.mxu0 0.0
  %3863 = vmatpush1.msra.mxu0 0.0
  %3864 = vmatprep.subr.mxu0 0.0
  %3865 = vmatpush1.msra.mxu0 0.0
  %3866 = vmatprep.subr.mxu0 0.0
  %3867 = vmatpush1.msra.mxu0 0.0
  %3868 = vmatprep.subr.mxu0 0.0
  %3869 = vmatpush1.msra.mxu0 0.0
  %3870 = vmatprep.subr.mxu0 0.0
  %3871 = vmatpush1.msra.mxu0 0.0
  %3872 = vmatprep.subr.mxu0 0.0
  %3873 = vmatpush1.msra.mxu0 0.0
  %3874 = vmatprep.subr.mxu0 0.0
  %3875 = vmatpush1.msra.mxu0 0.0
  %3876 = vmatprep.subr.mxu0 0.0
  %3877 = vmatpush1.msra.mxu0 0.0
  %3878 = vmatprep.subr.mxu0 0.0
  %3879 = vmatpush1.msra.mxu0 0.0
  %3880 = vmatprep.subr.mxu0 0.0
  %3881 = vmatpush1.msra.mxu0 0.0
  %3882 = vmatprep.subr.mxu0 0.0
  %3883 = vmatpush1.msra.mxu0 0.0
  %3884 = vmatprep.subr.mxu0 0.0
  %3885 = vmatpush1.msra.mxu0 0.0
  %3886 = vmatprep.subr.mxu0 0.0
  %3887 = vmatpush1.msra.mxu0 0.0
  %3888 = vmatprep.subr.mxu0 0.0
  %3889 = vmatpush1.msra.mxu0 0.0
  %3890 = vmatprep.subr.mxu0 0.0
  %3891 = vmatpush1.msra.mxu0 0.0
  %3892 = vmatprep.subr.mxu0 0.0
  %3893 = vmatpush1.msra.mxu0 0.0
  %3894 = vmatprep.subr.mxu0 0.0
  %3895 = vmatpush1.msra.mxu0 0.0
  %3896 = vmatprep.subr.mxu0 0.0
  %3897 = vmatpush1.msra.mxu0 0.0
  %3898 = vmatprep.subr.mxu0 0.0
  %3899 = vmatpush1.msra.mxu0 0.0
  %3900 = vmatprep.subr.mxu0 0.0
  %3901 = vmatpush1.msra.mxu0 0.0
  %3902 = vmatprep.subr.mxu0 0.0
  %3903 = vmatpush1.msra.mxu0 0.0
  %3904 = vmatprep.subr.mxu0 0.0
  %3905 = vmatpush1.msra.mxu0 0.0
  %3906 = vmatprep.subr.mxu0 0.0
  %3907 = vmatpush1.msra.mxu0 0.0
  %3908 = vmatprep.mubr.f32.mxu0 0.0
  %3909 = vmatmul.mubr.f32.gmra.mrb[0].mxu0 %v1839
  %v3910 = vpop.f32.mrb[0].mxu0
  %v3911 = vadd.f32 0.0, %v3910
  %v3912 = vpop.f32.mrb[0].mxu0
  %v3913 = vadd.f32 0.0, %v3912
  %3914 = vmatprep.mubr.f32.mxu0 0.0
  %3915 = vmatmul.mubr.f32.gmra.mrb[0].mxu0 %v1842
  %v3916 = vpop.f32.mrb[0].mxu0
  %v3917 = vadd.f32 0.0, %v3916
  %v3918 = vpop.f32.mrb[0].mxu0
  %v3919 = vadd.f32 0.0, %v3918
  %3920 = vmatprep.mubr.f32.mxu0 0.0
  %3921 = vmatmul.mubr.f32.gmra.mrb[0].mxu0 %v1845
  %v3922 = vpop.f32.mrb[0].mxu0
  %v3923 = vadd.f32 0.0, %v3922
  %v3924 = vpop.f32.mrb[0].mxu0
  %v3925 = vadd.f32 0.0, %v3924
  %3926 = vmatprep.mubr.f32.mxu0 0.0
  %3927 = vmatmul.mubr.f32.gmra.mrb[0].mxu0 %v1848
  %v3928 = vpop.f32.mrb[0].mxu0
  %v3929 = vadd.f32 0.0, %v3928
  %v3930 = vpop.f32.mrb[0].mxu0
  %v3931 = vadd.f32 0.0, %v3930
  %3932 = vdwg.mxu0
  %v3933 = vadd.f32 %v3828, %v3911
  %v3934 = vadd.f32 %v3829, %v3913
  %v3935 = vadd.f32 %v3830, %v3917
  %v3936 = vadd.f32 %v3831, %v3919
  %v3937 = vadd.f32 %v3832, %v3923
  %v3938 = vadd.f32 %v3833, %v3925
  %v3939 = vadd.f32 %v3834, %v3929
  %v3940 = vadd.f32 %v3835, %v3931
  %3941 = vrot.lane.b32.xlu0 %v2396, 112
  %v3942 = vpop.permute.xlu0 %3941
  %3943 = vrot.lane.b32.xlu0 %v2397, 112
  %v3944 = vpop.permute.xlu0 %3943
  %v3945 = vsel %vm1822, %v3942, %v3944
  %v3946 = vsel %vm1822, %v3944, %v3942
  %v3947 = vsel %vm1834, %v3945, 0.0
  %v3948 = vsel %vm1835, %v3946, 0.0
  %3949 = vmatprep.subr.mxu0 %v3948
  %3950 = vmatpush1.msra.mxu0 %v3947
  %3951 = vmatprep.subr.mxu0 0.0
  %3952 = vmatpush1.msra.mxu0 0.0
  %3953 = vmatprep.subr.mxu0 0.0
  %3954 = vmatpush1.msra.mxu0 0.0
  %3955 = vmatprep.subr.mxu0 0.0
  %3956 = vmatpush1.msra.mxu0 0.0
  %3957 = vmatprep.subr.mxu0 0.0
  %3958 = vmatpush1.msra.mxu0 0.0
  %3959 = vmatprep.subr.mxu0 0.0
  %3960 = vmatpush1.msra.mxu0 0.0
  %3961 = vmatprep.subr.mxu0 0.0
  %3962 = vmatpush1.msra.mxu0 0.0
  %3963 = vmatprep.subr.mxu0 0.0
  %3964 = vmatpush1.msra.mxu0 0.0
  %3965 = vmatprep.subr.mxu0 0.0
  %3966 = vmatpush1.msra.mxu0 0.0
  %3967 = vmatprep.subr.mxu0 0.0
  %3968 = vmatpush1.msra.mxu0 0.0
  %3969 = vmatprep.subr.mxu0 0.0
  %3970 = vmatpush1.msra.mxu0 0.0
  %3971 = vmatprep.subr.mxu0 0.0
  %3972 = vmatpush1.msra.mxu0 0.0
  %3973 = vmatprep.subr.mxu0 0.0
  %3974 = vmatpush1.msra.mxu0 0.0
  %3975 = vmatprep.subr.mxu0 0.0
  %3976 = vmatpush1.msra.mxu0 0.0
  %3977 = vmatprep.subr.mxu0 0.0
  %3978 = vmatpush1.msra.mxu0 0.0
  %3979 = vmatprep.subr.mxu0 0.0
  %3980 = vmatpush1.msra.mxu0 0.0
  %3981 = vmatprep.subr.mxu0 0.0
  %3982 = vmatpush1.msra.mxu0 0.0
  %3983 = vmatprep.subr.mxu0 0.0
  %3984 = vmatpush1.msra.mxu0 0.0
  %3985 = vmatprep.subr.mxu0 0.0
  %3986 = vmatpush1.msra.mxu0 0.0
  %3987 = vmatprep.subr.mxu0 0.0
  %3988 = vmatpush1.msra.mxu0 0.0
  %3989 = vmatprep.subr.mxu0 0.0
  %3990 = vmatpush1.msra.mxu0 0.0
  %3991 = vmatprep.subr.mxu0 0.0
  %3992 = vmatpush1.msra.mxu0 0.0
  %3993 = vmatprep.subr.mxu0 0.0
  %3994 = vmatpush1.msra.mxu0 0.0
  %3995 = vmatprep.subr.mxu0 0.0
  %3996 = vmatpush1.msra.mxu0 0.0
  %3997 = vmatprep.subr.mxu0 0.0
  %3998 = vmatpush1.msra.mxu0 0.0
  %3999 = vmatprep.subr.mxu0 0.0
  %4000 = vmatpush1.msra.mxu0 0.0
  %4001 = vmatprep.subr.mxu0 0.0
  %4002 = vmatpush1.msra.mxu0 0.0
  %4003 = vmatprep.subr.mxu0 0.0
  %4004 = vmatpush1.msra.mxu0 0.0
  %4005 = vmatprep.subr.mxu0 0.0
  %4006 = vmatpush1.msra.mxu0 0.0
  %4007 = vmatprep.subr.mxu0 0.0
  %4008 = vmatpush1.msra.mxu0 0.0
  %4009 = vmatprep.subr.mxu0 0.0
  %4010 = vmatpush1.msra.mxu0 0.0
  %4011 = vmatprep.subr.mxu0 0.0
  %4012 = vmatpush1.msra.mxu0 0.0
  %4013 = vmatprep.mubr.f32.mxu0 0.0
  %4014 = vmatmul.mubr.f32.gmra.mrb[0].mxu0 %v1956
  %v4015 = vpop.f32.mrb[0].mxu0
  %v4016 = vadd.f32 0.0, %v4015
  %v4017 = vpop.f32.mrb[0].mxu0
  %v4018 = vadd.f32 0.0, %v4017
  %4019 = vmatprep.mubr.f32.mxu0 0.0
  %4020 = vmatmul.mubr.f32.gmra.mrb[0].mxu0 %v1959
  %v4021 = vpop.f32.mrb[0].mxu0
  %v4022 = vadd.f32 0.0, %v4021
  %v4023 = vpop.f32.mrb[0].mxu0
  %v4024 = vadd.f32 0.0, %v4023
  %4025 = vmatprep.mubr.f32.mxu0 0.0
  %4026 = vmatmul.mubr.f32.gmra.mrb[0].mxu0 %v1962
  %v4027 = vpop.f32.mrb[0].mxu0
  %v4028 = vadd.f32 0.0, %v4027
  %v4029 = vpop.f32.mrb[0].mxu0
  %v4030 = vadd.f32 0.0, %v4029
  %4031 = vmatprep.mubr.f32.mxu0 0.0
  %4032 = vmatmul.mubr.f32.gmra.mrb[0].mxu0 %v1965
  %v4033 = vpop.f32.mrb[0].mxu0
  %v4034 = vadd.f32 0.0, %v4033
  %v4035 = vpop.f32.mrb[0].mxu0
  %v4036 = vadd.f32 0.0, %v4035
  %4037 = vdwg.mxu0
  %v4038 = vadd.f32 %v3933, %v4016
  %v4039 = vadd.f32 %v3934, %v4018
  %v4040 = vadd.f32 %v3935, %v4022
  %v4041 = vadd.f32 %v3936, %v4024
  %v4042 = vadd.f32 %v3937, %v4028
  %v4043 = vadd.f32 %v3938, %v4030
  %v4044 = vadd.f32 %v3939, %v4034
  %v4045 = vadd.f32 %v3940, %v4036
  %4046 = vrot.lane.b32.xlu0 %v2393, 111
  %v4047 = vpop.permute.xlu0 %4046
  %4048 = vrot.lane.b32.xlu0 %v2394, 111
  %v4049 = vpop.permute.xlu0 %4048
  %v4050 = vsel %vm2068, %v4047, %v4049
  %v4051 = vsel %vm2068, %v4049, %v4047
  %v4052 = vsel %vm2080, %v4050, 0.0
  %v4053 = vsel %vm2081, %v4051, 0.0
  %4054 = vmatprep.subr.mxu0 %v4053
  %4055 = vmatpush1.msra.mxu0 %v4052
  %4056 = vmatprep.subr.mxu0 0.0
  %4057 = vmatpush1.msra.mxu0 0.0
  %4058 = vmatprep.subr.mxu0 0.0
  %4059 = vmatpush1.msra.mxu0 0.0
  %4060 = vmatprep.subr.mxu0 0.0
  %4061 = vmatpush1.msra.mxu0 0.0
  %4062 = vmatprep.subr.mxu0 0.0
  %4063 = vmatpush1.msra.mxu0 0.0
  %4064 = vmatprep.subr.mxu0 0.0
  %4065 = vmatpush1.msra.mxu0 0.0
  %4066 = vmatprep.subr.mxu0 0.0
  %4067 = vmatpush1.msra.mxu0 0.0
  %4068 = vmatprep.subr.mxu0 0.0
  %4069 = vmatpush1.msra.mxu0 0.0
  %4070 = vmatprep.subr.mxu0 0.0
  %4071 = vmatpush1.msra.mxu0 0.0
  %4072 = vmatprep.subr.mxu0 0.0
  %4073 = vmatpush1.msra.mxu0 0.0
  %4074 = vmatprep.subr.mxu0 0.0
  %4075 = vmatpush1.msra.mxu0 0.0
  %4076 = vmatprep.subr.mxu0 0.0
  %4077 = vmatpush1.msra.mxu0 0.0
  %4078 = vmatprep.subr.mxu0 0.0
  %4079 = vmatpush1.msra.mxu0 0.0
  %4080 = vmatprep.subr.mxu0 0.0
  %4081 = vmatpush1.msra.mxu0 0.0
  %4082 = vmatprep.subr.mxu0 0.0
  %4083 = vmatpush1.msra.mxu0 0.0
  %4084 = vmatprep.subr.mxu0 0.0
  %4085 = vmatpush1.msra.mxu0 0.0
  %4086 = vmatprep.subr.mxu0 0.0
  %4087 = vmatpush1.msra.mxu0 0.0
  %4088 = vmatprep.subr.mxu0 0.0
  %4089 = vmatpush1.msra.mxu0 0.0
  %4090 = vmatprep.subr.mxu0 0.0
  %4091 = vmatpush1.msra.mxu0 0.0
  %4092 = vmatprep.subr.mxu0 0.0
  %4093 = vmatpush1.msra.mxu0 0.0
  %4094 = vmatprep.subr.mxu0 0.0
  %4095 = vmatpush1.msra.mxu0 0.0
  %4096 = vmatprep.subr.mxu0 0.0
  %4097 = vmatpush1.msra.mxu0 0.0
  %4098 = vmatprep.subr.mxu0 0.0
  %4099 = vmatpush1.msra.mxu0 0.0
  %4100 = vmatprep.subr.mxu0 0.0
  %4101 = vmatpush1.msra.mxu0 0.0
  %4102 = vmatprep.subr.mxu0 0.0
  %4103 = vmatpush1.msra.mxu0 0.0
  %4104 = vmatprep.subr.mxu0 0.0
  %4105 = vmatpush1.msra.mxu0 0.0
  %4106 = vmatprep.subr.mxu0 0.0
  %4107 = vmatpush1.msra.mxu0 0.0
  %4108 = vmatprep.subr.mxu0 0.0
  %4109 = vmatpush1.msra.mxu0 0.0
  %4110 = vmatprep.subr.mxu0 0.0
  %4111 = vmatpush1.msra.mxu0 0.0
  %4112 = vmatprep.subr.mxu0 0.0
  %4113 = vmatpush1.msra.mxu0 0.0
  %4114 = vmatprep.subr.mxu0 0.0
  %4115 = vmatpush1.msra.mxu0 0.0
  %4116 = vmatprep.subr.mxu0 0.0
  %4117 = vmatpush1.msra.mxu0 0.0
  %4118 = vmatprep.mubr.f32.mxu0 0.0
  %4119 = vmatmul.mubr.f32.gmra.mrb[0].mxu0 %v2085
  %v4120 = vpop.f32.mrb[0].mxu0
  %v4121 = vadd.f32 0.0, %v4120
  %v4122 = vpop.f32.mrb[0].mxu0
  %v4123 = vadd.f32 0.0, %v4122
  %4124 = vmatprep.mubr.f32.mxu0 0.0
  %4125 = vmatmul.mubr.f32.gmra.mrb[0].mxu0 %v2088
  %v4126 = vpop.f32.mrb[0].mxu0
  %v4127 = vadd.f32 0.0, %v4126
  %v4128 = vpop.f32.mrb[0].mxu0
  %v4129 = vadd.f32 0.0, %v4128
  %4130 = vmatprep.mubr.f32.mxu0 0.0
  %4131 = vmatmul.mubr.f32.gmra.mrb[0].mxu0 %v2091
  %v4132 = vpop.f32.mrb[0].mxu0
  %v4133 = vadd.f32 0.0, %v4132
  %v4134 = vpop.f32.mrb[0].mxu0
  %v4135 = vadd.f32 0.0, %v4134
  %4136 = vmatprep.mubr.f32.mxu0 0.0
  %4137 = vmatmul.mubr.f32.gmra.mrb[0].mxu0 %v2094
  %v4138 = vpop.f32.mrb[0].mxu0
  %v4139 = vadd.f32 0.0, %v4138
  %v4140 = vpop.f32.mrb[0].mxu0
  %v4141 = vadd.f32 0.0, %v4140
  %4142 = vdwg.mxu0
  %v4143 = vadd.f32 %v4038, %v4121
  %v4144 = vadd.f32 %v4039, %v4123
  %v4145 = vadd.f32 %v4040, %v4127
  %v4146 = vadd.f32 %v4041, %v4129
  %v4147 = vadd.f32 %v4042, %v4133
  %v4148 = vadd.f32 %v4043, %v4135
  %v4149 = vadd.f32 %v4044, %v4139
  %v4150 = vadd.f32 %v4045, %v4141
  %4151 = vrot.lane.b32.xlu0 %v2396, 111
  %v4152 = vpop.permute.xlu0 %4151
  %4153 = vrot.lane.b32.xlu0 %v2397, 111
  %v4154 = vpop.permute.xlu0 %4153
  %v4155 = vsel %vm2068, %v4152, %v4154
  %v4156 = vsel %vm2068, %v4154, %v4152
  %v4157 = vsel %vm2080, %v4155, 0.0
  %v4158 = vsel %vm2081, %v4156, 0.0
  %4159 = vmatprep.subr.mxu0 %v4158
  %4160 = vmatpush1.msra.mxu0 %v4157
  %4161 = vmatprep.subr.mxu0 0.0
  %4162 = vmatpush1.msra.mxu0 0.0
  %4163 = vmatprep.subr.mxu0 0.0
  %4164 = vmatpush1.msra.mxu0 0.0
  %4165 = vmatprep.subr.mxu0 0.0
  %4166 = vmatpush1.msra.mxu0 0.0
  %4167 = vmatprep.subr.mxu0 0.0
  %4168 = vmatpush1.msra.mxu0 0.0
  %4169 = vmatprep.subr.mxu0 0.0
  %4170 = vmatpush1.msra.mxu0 0.0
  %4171 = vmatprep.subr.mxu0 0.0
  %4172 = vmatpush1.msra.mxu0 0.0
  %4173 = vmatprep.subr.mxu0 0.0
  %4174 = vmatpush1.msra.mxu0 0.0
  %4175 = vmatprep.subr.mxu0 0.0
  %4176 = vmatpush1.msra.mxu0 0.0
  %4177 = vmatprep.subr.mxu0 0.0
  %4178 = vmatpush1.msra.mxu0 0.0
  %4179 = vmatprep.subr.mxu0 0.0
  %4180 = vmatpush1.msra.mxu0 0.0
  %4181 = vmatprep.subr.mxu0 0.0
  %4182 = vmatpush1.msra.mxu0 0.0
  %4183 = vmatprep.subr.mxu0 0.0
  %4184 = vmatpush1.msra.mxu0 0.0
  %4185 = vmatprep.subr.mxu0 0.0
  %4186 = vmatpush1.msra.mxu0 0.0
  %4187 = vmatprep.subr.mxu0 0.0
  %4188 = vmatpush1.msra.mxu0 0.0
  %4189 = vmatprep.subr.mxu0 0.0
  %4190 = vmatpush1.msra.mxu0 0.0
  %4191 = vmatprep.subr.mxu0 0.0
  %4192 = vmatpush1.msra.mxu0 0.0
  %4193 = vmatprep.subr.mxu0 0.0
  %4194 = vmatpush1.msra.mxu0 0.0
  %4195 = vmatprep.subr.mxu0 0.0
  %4196 = vmatpush1.msra.mxu0 0.0
  %4197 = vmatprep.subr.mxu0 0.0
  %4198 = vmatpush1.msra.mxu0 0.0
  %4199 = vmatprep.subr.mxu0 0.0
  %4200 = vmatpush1.msra.mxu0 0.0
  %4201 = vmatprep.subr.mxu0 0.0
  %4202 = vmatpush1.msra.mxu0 0.0
  %4203 = vmatprep.subr.mxu0 0.0
  %4204 = vmatpush1.msra.mxu0 0.0
  %4205 = vmatprep.subr.mxu0 0.0
  %4206 = vmatpush1.msra.mxu0 0.0
  %4207 = vmatprep.subr.mxu0 0.0
  %4208 = vmatpush1.msra.mxu0 0.0
  %4209 = vmatprep.subr.mxu0 0.0
  %4210 = vmatpush1.msra.mxu0 0.0
  %4211 = vmatprep.subr.mxu0 0.0
  %4212 = vmatpush1.msra.mxu0 0.0
  %4213 = vmatprep.subr.mxu0 0.0
  %4214 = vmatpush1.msra.mxu0 0.0
  %4215 = vmatprep.subr.mxu0 0.0
  %4216 = vmatpush1.msra.mxu0 0.0
  %4217 = vmatprep.subr.mxu0 0.0
  %4218 = vmatpush1.msra.mxu0 0.0
  %4219 = vmatprep.subr.mxu0 0.0
  %4220 = vmatpush1.msra.mxu0 0.0
  %4221 = vmatprep.subr.mxu0 0.0
  %4222 = vmatpush1.msra.mxu0 0.0
  %4223 = vmatprep.mubr.f32.mxu0 0.0
  %4224 = vmatmul.mubr.f32.gmra.mrb[0].mxu0 %v2202
  %v4225 = vpop.f32.mrb[0].mxu0
  %v4226 = vadd.f32 0.0, %v4225
  %v4227 = vpop.f32.mrb[0].mxu0
  %v4228 = vadd.f32 0.0, %v4227
  %4229 = vmatprep.mubr.f32.mxu0 0.0
  %4230 = vmatmul.mubr.f32.gmra.mrb[0].mxu0 %v2205
  %v4231 = vpop.f32.mrb[0].mxu0
  %v4232 = vadd.f32 0.0, %v4231
  %v4233 = vpop.f32.mrb[0].mxu0
  %v4234 = vadd.f32 0.0, %v4233
  %4235 = vmatprep.mubr.f32.mxu0 0.0
  %4236 = vmatmul.mubr.f32.gmra.mrb[0].mxu0 %v2208
  %v4237 = vpop.f32.mrb[0].mxu0
  %v4238 = vadd.f32 0.0, %v4237
  %v4239 = vpop.f32.mrb[0].mxu0
  %v4240 = vadd.f32 0.0, %v4239
  %4241 = vmatprep.mubr.f32.mxu0 0.0
  %4242 = vmatmul.mubr.f32.gmra.mrb[0].mxu0 %v2211
  %v4243 = vpop.f32.mrb[0].mxu0
  %v4244 = vadd.f32 0.0, %v4243
  %v4245 = vpop.f32.mrb[0].mxu0
  %v4246 = vadd.f32 0.0, %v4245
  %4247 = vdwg.mxu0
  %v4248 = vadd.f32 %v4143, %v4226
  %v4249 = vadd.f32 %v4144, %v4228
  %v4250 = vadd.f32 %v4145, %v4232
  %v4251 = vadd.f32 %v4146, %v4234
  %v4252 = vadd.f32 %v4147, %v4238
  %v4253 = vadd.f32 %v4148, %v4240
  %v4254 = vadd.f32 %v4149, %v4244
  %v4255 = vadd.f32 %v4150, %v4246
  %v4256 = vadd.f32 %v4248, %v2313
  %v4257 = vadd.f32 %v4249, %v2313
  %v4258 = vadd.f32 %v4250, %v2318
  %v4259 = vadd.f32 %v4251, %v2318
  %v4260 = vadd.f32 %v4252, %v2323
  %v4261 = vadd.f32 %v4253, %v2323
  %v4262 = vadd.f32 %v4254, %v2328
  %v4263 = vadd.f32 %v4255, %v2328
  %v4264 = vxor.u32 %v4256, 2147483648
  %v4265 = vxor.u32 %v4257, 2147483648
  %v4266 = vmul.f32 %v4264, 1.442695
  %v4267 = vpow.pop %v4266
  %v4268 = vmul.f32 %v4265, 1.442695
  %v4269 = vpow.pop %v4268
  %v4270 = vadd.f32 %v4267, 1.0
  %v4271 = vadd.f32 %v4269, 1.0
  %v4272 = vrcp.pop %v4270
  %v4273 = vmul.f32 1.0, %v4272
  %v4274 = vrcp.pop %v4271
  %v4275 = vmul.f32 1.0, %v4274
  %v4276 = vxor.u32 %v4258, 2147483648
  %v4277 = vxor.u32 %v4259, 2147483648
  %v4278 = vmul.f32 %v4276, 1.442695
  %v4279 = vpow.pop %v4278
  %v4280 = vmul.f32 %v4277, 1.442695
  %v4281 = vpow.pop %v4280
  %v4282 = vadd.f32 %v4279, 1.0
  %v4283 = vadd.f32 %v4281, 1.0
  %v4284 = vrcp.pop %v4282
  %v4285 = vmul.f32 1.0, %v4284
  %v4286 = vrcp.pop %v4283
  %v4287 = vmul.f32 1.0, %v4286
  %v4288 = vxor.u32 %v4260, 2147483648
  %v4289 = vxor.u32 %v4261, 2147483648
  %v4290 = vmul.f32 %v4288, 1.442695
  %v4291 = vpow.pop %v4290
  %v4292 = vmul.f32 %v4289, 1.442695
  %v4293 = vpow.pop %v4292
  %v4294 = vadd.f32 %v4291, 1.0
  %v4295 = vadd.f32 %v4293, 1.0
  %v4296 = vrcp.pop %v4294
  %v4297 = vmul.f32 1.0, %v4296
  %v4298 = vrcp.pop %v4295
  %v4299 = vmul.f32 1.0, %v4298
  %v4300 = vtanh.pop %v4262
  %v4301 = vtanh.pop %v4263
  %s4302 = scalar_lea.vmem %s2, 16
  %v4303 = vld [vmem:[%s4302] sm:$0xff]
  %v4304 = vld [vmem:[%s4302 + $0x8] sm:$0xff]
  %v4305 = vmul.f32 %v4285, %v4303
  %v4306 = vmul.f32 %v4287, %v4304
  %v4307 = vmul.f32 %v4273, %v4300
  %v4308 = vmul.f32 %v4275, %v4301
  %v4309 = vadd.f32 %v4305, %v4307
  %v4310 = vadd.f32 %v4306, %v4308
  %v4311 = vtanh.pop %v4309
  %v4312 = vtanh.pop %v4310
  %v4313 = vmul.f32 %v4297, %v4311
  %v4314 = vmul.f32 %v4299, %v4312
  %s4315 = scalar_lea.vmem %s8, 16
  %4316 = vst [vmem:[%s4315] sm:$0xff] %v4313
  %4317 = vst [vmem:[%s4315 + $0x8] sm:$0xff] %v4314
  %s4318 = scalar_lea.vmem %s9, 16
  %4319 = vst [vmem:[%s4318] sm:$0xff] %v4309
  %4320 = vst [vmem:[%s4318 + $0x8] sm:$0xff] %v4310
  // Predicated region
  $region34: #{conv_lstm_cell.1} parent=0 // pred_check
    _
  $region35: #{conv_lstm_cell.1} parent=0 // pred_check_branch
    %4322 = sbr.rel (0) target = $region37
  $region36: #{conv_lstm_cell.1} parent=0 // pred_region
    _
  $region37: #{conv_lstm_cell.1} parent=0 // pred_fallthru
    _
  // Predicated region
  $region38: #{conv_lstm_cell.1} parent=0 // pred_check
    _
  $region39: #{conv_lstm_cell.1} parent=0 // pred_check_branch
    %4324 = sbr.rel (0) target = $region41
  $region40: #{conv_lstm_cell.1} parent=0 // pred_region
    _
  $region41: #{conv_lstm_cell.1} parent=0 // pred_fallthru
    _
  // Predicated region
  $region42: #{conv_lstm_cell.1} parent=0 // pred_check
    _
  $region43: #{conv_lstm_cell.1} parent=0 // pred_check_branch
    %4326 = sbr.rel (0) target = $region45
  $region44: #{conv_lstm_cell.1} parent=0 // pred_region
    _
  $region45: #{conv_lstm_cell.1} parent=0 // pred_fallthru
    _
  // Predicated region
  $region46: #{conv_lstm_cell.1} parent=0 // pred_check
    _
  $region47: #{conv_lstm_cell.1} parent=0 // pred_check_branch
    %4328 = sbr.rel (0) target = $region49
  $region48: #{conv_lstm_cell.1} parent=0 // pred_region
    _
  $region49: #{conv_lstm_cell.1} parent=0 // pred_fallthru
    _

</llo_original>
